<compile_context>
chip_gen: v6e
topology: v6e:2x2x1
jax: 0.10.0
libtpu: 0.0.40
codegen_flags: <defaults>
</compile_context>

<pallas_src>
import math
import jax
import jax.numpy as jnp
from jax.experimental import pallas as pl
from jax.experimental.pallas import tpu as pltpu


# ----------------------------------------------------------------------------
# Small helpers
# ----------------------------------------------------------------------------

def _layernorm(z, gamma, beta):
    mu = jnp.mean(z, axis=-1, keepdims=True)
    var = jnp.mean((z - mu) * (z - mu), axis=-1, keepdims=True)
    zn = (z - mu) * jax.lax.rsqrt(var + 1e-5)
    return zn * gamma + beta


# ----------------------------------------------------------------------------
# Fused decoder-layer kernel
# ----------------------------------------------------------------------------

def make_decoder_layer_kernel(H, Dh, with_pe, kv_separate, with_dense, embed_scale):
    """One kernel = one decoder block (optionally + PE prologue / dense epilogue).

    Grid is (B,); each grid step processes one batch element's (S, D) slab with
    all weights resident in VMEM (constant index_maps).
    """
    D = H * Dh
    attn_scale = 1.0 / math.sqrt(Dh)

    def mha(q_f32, k_bf, v_bf):
        # q: (Sq, D) f32, k/v: (Sk, D) bf16 (cast once per slab).
        # Per-head scores + softmax, contexts concatenated -> (Sq, D) f32.
        q_bf = (q_f32 * attn_scale).astype(jnp.bfloat16)
        ctx = []
        for h in range(H):
            lo = h * Dh
            qh = q_bf[:, lo:lo + Dh]
            kh = k_bf[:, lo:lo + Dh]
            vh = v_bf[:, lo:lo + Dh]
            s = jax.lax.dot_general(qh, kh, (((1,), (1,)), ((), ())),
                                    preferred_element_type=jnp.float32)
            m = jnp.max(s, axis=-1, keepdims=True)
            p = jnp.exp(s - m)
            p = p * pl.reciprocal(jnp.sum(p, axis=-1, keepdims=True), approx=True)
            ctx.append(jnp.dot(p.astype(jnp.bfloat16), vh,
                               preferred_element_type=jnp.float32))
        return jnp.concatenate(ctx, axis=-1)

    def kernel(*refs):
        it = iter(refs)
        x_ref = next(it)
        pe_ref = next(it) if with_pe else None
        kv_ref = next(it) if kv_separate else None
        enc_ref = next(it)
        w_qkv = next(it); b_qkv = next(it)
        wo1 = next(it); bo1 = next(it)
        g1 = next(it); be1 = next(it)
        wq2 = next(it); bq2 = next(it)
        wkv2 = next(it); bkv2 = next(it)
        wo2 = next(it); bo2 = next(it)
        g2 = next(it); be2 = next(it)
        w1 = next(it); b1 = next(it)
        w2 = next(it); b2 = next(it)
        g3 = next(it); be3 = next(it)
        dw = db = None
        if with_dense:
            dw = next(it); db = next(it)
        y_ref = next(it)
        xpe_ref = next(it) if with_pe else None
        logits_ref = next(it) if with_dense else None

        x = x_ref[0]                                        # (S, D) f32
        if with_pe:
            # Folded prologue: x = emb * sqrt(d) + PE (also the KV-cache entry).
            x = x * embed_scale + pe_ref[0]
            xpe_ref[0] = x.astype(xpe_ref.dtype)
        x_bf = x.astype(jnp.bfloat16)

        # ---------------- self-attention ----------------
        if kv_separate:
            # Decode path: queries from x, keys/values from cache||x.
            q1 = jnp.dot(x_bf, w_qkv[:, :D],
                         preferred_element_type=jnp.float32) + b_qkv[:, :D]
            kv_in = kv_ref[0].astype(jnp.bfloat16)
            kv1 = jnp.dot(kv_in, w_qkv[:, D:],
                          preferred_element_type=jnp.float32) + b_qkv[:, D:]
            k1, v1 = kv1[:, :D], kv1[:, D:]
        else:
            # Prefill path: key_values == inputs, one fused (S,D)@(D,3D) matmul.
            qkv = jnp.dot(x_bf, w_qkv[...],
                          preferred_element_type=jnp.float32) + b_qkv[...]
            q1, k1, v1 = qkv[:, :D], qkv[:, D:2 * D], qkv[:, 2 * D:]

        ctx1 = mha(q1, k1.astype(jnp.bfloat16), v1.astype(jnp.bfloat16))
        a1 = jnp.dot(ctx1.astype(jnp.bfloat16), wo1[...],
                     preferred_element_type=jnp.float32) + bo1[...]
        y1 = _layernorm(x + a1, g1[...], be1[...])          # eval: dropout = id

        # ---------------- cross-attention over encoder outputs ----------------
        # TODO(synk): masked softmax for non-None enc_valid_len not implemented.
        y1_bf = y1.astype(jnp.bfloat16)
        q2 = jnp.dot(y1_bf, wq2[...], preferred_element_type=jnp.float32) + bq2[...]
        enc_bf = enc_ref[0].astype(jnp.bfloat16)
        kv2 = jnp.dot(enc_bf, wkv2[...], preferred_element_type=jnp.float32) + bkv2[...]
        ctx2 = mha(q2, kv2[:, :D].astype(jnp.bfloat16), kv2[:, D:].astype(jnp.bfloat16))
        a2 = jnp.dot(ctx2.astype(jnp.bfloat16), wo2[...],
                     preferred_element_type=jnp.float32) + bo2[...]
        y2 = _layernorm(y1 + a2, g2[...], be2[...])

        # ---------------- position-wise FFN ----------------
        y2_bf = y2.astype(jnp.bfloat16)
        h1 = jnp.dot(y2_bf, w1[...], preferred_element_type=jnp.float32) + b1[...]
        h1 = jnp.maximum(h1, 0.0)
        f = jnp.dot(h1.astype(jnp.bfloat16), w2[...],
                    preferred_element_type=jnp.float32) + b2[...]
        y3 = _layernorm(y2 + f, g3[...], be3[...])
        y_ref[0] = y3.astype(y_ref.dtype)

        if with_dense:
            # Folded epilogue: final vocab projection.
            logits_ref[0] = (jnp.dot(y3.astype(jnp.bfloat16), dw[...],
                                     preferred_element_type=jnp.float32)
                             + db[...]).astype(logits_ref.dtype)

    return kernel


def fused_decoder_layer(x, enc, p, num_heads, *, pe=None, kv=None, dense=None):
    """One pallas_call for a whole decoder block (grid over batch, 'parallel')."""
    B, S, D = x.shape
    Sk = enc.shape[1]
    with_pe = pe is not None
    kv_separate = kv is not None
    with_dense = dense is not None
    embed_scale = math.sqrt(D)

    def act_spec(shape, batched=True):
        nd = len(shape)
        if batched:
            return pl.BlockSpec(shape, lambda b: (b,) + (0,) * (nd - 1))
        return pl.BlockSpec(shape, lambda b: (0,) * nd)

    def wspec(arr):
        nd = arr.ndim
        return pl.BlockSpec(arr.shape, lambda b: (0,) * nd)

    in_specs = [act_spec((1, S, D))]
    inputs = [x]
    if with_pe:
        in_specs.append(act_spec((1, S, D), batched=False))   # PE shared across batch
        inputs.append(pe)
    if kv_separate:
        Skv = kv.shape[1]
        in_specs.append(act_spec((1, Skv, D)))
        inputs.append(kv)
    in_specs.append(act_spec((1, Sk, D)))
    inputs.append(enc)

    weights = [
        p["attn1"]["w_qkv"], p["attn1"]["b_qkv"],
        p["attn1"]["wo"], p["attn1"]["bo"],
        p["ln1_g"], p["ln1_b"],
        p["attn2"]["w_q"], p["attn2"]["b_q"],
        p["attn2"]["w_kv"], p["attn2"]["b_kv"],
        p["attn2"]["wo"], p["attn2"]["bo"],
        p["ln2_g"], p["ln2_b"],
        p["ffn_w1"], p["ffn_b1"],
        p["ffn_w2"], p["ffn_b2"],
        p["ln3_g"], p["ln3_b"],
    ]
    if with_dense:
        weights += [dense[0], dense[1]]
    for w in weights:
        in_specs.append(wspec(w))     # constant index_map -> resident across grid
        inputs.append(w)

    out_shapes = [jax.ShapeDtypeStruct((B, S, D), jnp.float32)]
    out_specs = [act_spec((1, S, D))]
    if with_pe:
        out_shapes.append(jax.ShapeDtypeStruct((B, S, D), jnp.float32))
        out_specs.append(act_spec((1, S, D)))
    if with_dense:
        V = dense[0].shape[1]
        out_shapes.append(jax.ShapeDtypeStruct((B, S, V), jnp.float32))
        out_specs.append(act_spec((1, S, V)))

    results = pl.pallas_call(
        make_decoder_layer_kernel(num_heads, D // num_heads, with_pe,
                                  kv_separate, with_dense, embed_scale),
        out_shape=tuple(out_shapes),
        grid=(B,),
        in_specs=in_specs,
        out_specs=tuple(out_specs),
        compiler_params=pltpu.CompilerParams(
            dimension_semantics=("parallel",),      # B>=2 steps -> both v7x TCs busy
            vmem_limit_bytes=32 * 1024 * 1024),     # sized against v7x scoped VMEM
    )(*inputs)

    if not isinstance(results, (tuple, list)):
        results = (results,)
    out = {"y": results[0]}
    idx = 1
    if with_pe:
        out["x_pe"] = results[idx]; idx += 1
    if with_dense:
        out["logits"] = results[idx]; idx += 1
    return out


# ----------------------------------------------------------------------------
# Standalone scale + positional-encoding kernel (decode-path fallback only)
# ----------------------------------------------------------------------------

def make_scale_pe_kernel(scale):
    def kernel(x_ref, pe_ref, o_ref):
        o_ref[...] = (x_ref[...] * scale + pe_ref[...]).astype(o_ref.dtype)
    return kernel


def scale_add_pe(emb, pe, scale):
    B, S, D = emb.shape
    return pl.pallas_call(
        make_scale_pe_kernel(scale),
        out_shape=jax.ShapeDtypeStruct((B, S, D), jnp.float32),
        grid=(B,),
        in_specs=[
            pl.BlockSpec((1, S, D), lambda b: (b, 0, 0)),
            pl.BlockSpec((1, S, D), lambda b: (0, 0, 0)),
        ],
        out_specs=pl.BlockSpec((1, S, D), lambda b: (b, 0, 0)),
        compiler_params=pltpu.CompilerParams(dimension_semantics=("parallel",)),
    )(emb, pe)


# ----------------------------------------------------------------------------
# Decoder forward
# ----------------------------------------------------------------------------

def positional_encoding_table(max_len, d):
    pos = jnp.arange(max_len, dtype=jnp.float32)[:, None]
    div = jnp.power(10000.0, jnp.arange(0, d, 2, dtype=jnp.float32) / d)
    angles = pos / div
    pe = jnp.zeros((max_len, d), dtype=jnp.float32)
    pe = pe.at[:, 0::2].set(jnp.sin(angles))
    pe = pe.at[:, 1::2].set(jnp.cos(angles))
    return pe[None]  # (1, max_len, d)


def transformer_decoder_forward(token_ids, state, params, cfg):
    enc_outputs, enc_valid_len, caches = state
    b, s = token_ids.shape
    d = cfg["num_hiddens"]
    nl = cfg["num_layers"]
    nh = cfg["num_heads"]

    # Embedding lookup is XLA gather glue; everything else runs in the fused kernels.
    emb = jnp.take(params["embedding"], token_ids, axis=0)     # (B, S, D) f32
    pe = params["pe"][:, :s, :]

    # TODO(synk): cross-call prefetch of layer i+1 weights (P10) for decode loops.
    x = None
    logits = None
    for i in range(nl):
        blk = params["blocks"][i]
        last = (i == nl - 1)
        dense = (params["dense_w"], params["dense_b"]) if last else None

        if i == 0:
            if caches[0] is None:
                # Prefill: PE prologue fused into the layer-0 kernel; the
                # post-PE activation (the KV-cache entry) is a secondary output.
                outs = fused_decoder_layer(emb, enc_outputs, blk, nh,
                                           pe=pe, kv=None, dense=dense)
                caches[0] = outs["x_pe"]
            else:
                # Decode: need post-PE x before forming cache||x.
                # TODO(synk): replace concat-grown cache with a preallocated
                # (B, max_len, D) buffer updated via input_output_aliases.
                x_pe = scale_add_pe(emb, pe, math.sqrt(d))
                kv = jnp.concatenate([caches[0], x_pe], axis=1)
                caches[0] = kv
                outs = fused_decoder_layer(x_pe, enc_outputs, blk, nh,
                                           pe=None, kv=kv, dense=dense)
        else:
            if caches[i] is None:
                caches[i] = x
                outs = fused_decoder_layer(x, enc_outputs, blk, nh,
                                           pe=None, kv=None, dense=dense)
            else:
                kv = jnp.concatenate([caches[i], x], axis=1)
                caches[i] = kv
                outs = fused_decoder_layer(x, enc_outputs, blk, nh,
                                           pe=None, kv=kv, dense=dense)
        x = outs["y"]
        if "logits" in outs:
            logits = outs["logits"]

    return logits, [enc_outputs, enc_valid_len, caches]


# ----------------------------------------------------------------------------
# Deterministic parameter init (matmul weights stored bf16; biases / LN in f32)
# ----------------------------------------------------------------------------

def init_params(key, cfg):
    d = cfg["num_hiddens"]
    f = cfg["ffn_num_hiddens"]
    v = cfg["vocab_size"]

    cnt = [0]

    def nxt(shape, scale=0.05, dtype=jnp.float32):
        cnt[0] += 1
        w = scale * jax.random.normal(jax.random.fold_in(key, cnt[0]),
                                      shape, dtype=jnp.float32)
        return w.astype(dtype)

    def attn_params():
        return {
            # self-attention weights stored pre-concatenated for fused QKV.
            "w_qkv": nxt((d, 3 * d), dtype=jnp.bfloat16),
            "b_qkv": nxt((1, 3 * d)),
            "wo": nxt((d, d), dtype=jnp.bfloat16), "bo": nxt((1, d)),
        }

    def cross_attn_params():
        return {
            "w_q": nxt((d, d), dtype=jnp.bfloat16), "b_q": nxt((1, d)),
            "w_kv": nxt((d, 2 * d), dtype=jnp.bfloat16), "b_kv": nxt((1, 2 * d)),
            "wo": nxt((d, d), dtype=jnp.bfloat16), "bo": nxt((1, d)),
        }

    blocks = []
    for _ in range(cfg["num_layers"]):
        blocks.append({
            "attn1": attn_params(),
            "attn2": cross_attn_params(),
            "ln1_g": jnp.ones((1, d), jnp.float32), "ln1_b": jnp.zeros((1, d), jnp.float32),
            "ln2_g": jnp.ones((1, d), jnp.float32), "ln2_b": jnp.zeros((1, d), jnp.float32),
            "ln3_g": jnp.ones((1, d), jnp.float32), "ln3_b": jnp.zeros((1, d), jnp.float32),
            "ffn_w1": nxt((d, f), dtype=jnp.bfloat16), "ffn_b1": nxt((1, f)),
            "ffn_w2": nxt((f, d), dtype=jnp.bfloat16), "ffn_b2": nxt((1, d)),
        })

    return {
        "embedding": nxt((v, d), scale=1.0),
        "pe": positional_encoding_table(cfg["max_len"], d),
        "blocks": blocks,
        "dense_w": nxt((d, v), dtype=jnp.bfloat16),
        "dense_b": nxt((1, v)),
    }


# ----------------------------------------------------------------------------
# Main
# ----------------------------------------------------------------------------

if __name__ == "__main__":
    cfg = {
        "vocab_size": 128,       # lane-dense (multiple of 128)
        "num_hiddens": 256,      # == embedding output dim, lane-dense
        "ffn_num_hiddens": 512,
        "num_heads": 2,          # head_dim = 128 -> 128-aligned head slices
        "num_layers": 2,
        "max_len": 64,
    }
    B, S, S_ENC = 2, 8, 8

    root = jax.random.PRNGKey(0)
    k_tok, k_enc, k_par = jax.random.split(root, 3)

    token_ids = jax.random.randint(k_tok, (B, S), 0, cfg["vocab_size"])
    enc_outputs = 0.1 * jax.random.normal(k_enc, (B, S_ENC, cfg["num_hiddens"]),
                                          dtype=jnp.float32)
    params = init_params(k_par, cfg)

    # init_state(enc_outputs, env_valid_len=None)
    state = [enc_outputs, None, [None] * cfg["num_layers"]]

    logits, state = transformer_decoder_forward(token_ids, state, params, cfg)
    jax.block_until_ready(logits)

    assert logits.shape == (B, S, cfg["vocab_size"])
    assert all(c is not None for c in state[2])
    print("KERNEL_OK")
</pallas_src>

<mosaic_0001>
module attributes {stable_mosaic.version = 11 : i64} {
  func.func @kernel(%arg0: i32, %arg1: memref<1x8x256xf32, #tpu.memory_space<vmem>>, %arg2: memref<1x8x256xf32, #tpu.memory_space<vmem>>, %arg3: memref<1x8x256xf32, #tpu.memory_space<vmem>>, %arg4: memref<256x768xbf16, #tpu.memory_space<vmem>>, %arg5: memref<1x768xf32, #tpu.memory_space<vmem>>, %arg6: memref<256x256xbf16, #tpu.memory_space<vmem>>, %arg7: memref<1x256xf32, #tpu.memory_space<vmem>>, %arg8: memref<1x256xf32, #tpu.memory_space<vmem>>, %arg9: memref<1x256xf32, #tpu.memory_space<vmem>>, %arg10: memref<256x256xbf16, #tpu.memory_space<vmem>>, %arg11: memref<1x256xf32, #tpu.memory_space<vmem>>, %arg12: memref<256x512xbf16, #tpu.memory_space<vmem>>, %arg13: memref<1x512xf32, #tpu.memory_space<vmem>>, %arg14: memref<256x256xbf16, #tpu.memory_space<vmem>>, %arg15: memref<1x256xf32, #tpu.memory_space<vmem>>, %arg16: memref<1x256xf32, #tpu.memory_space<vmem>>, %arg17: memref<1x256xf32, #tpu.memory_space<vmem>>, %arg18: memref<256x512xbf16, #tpu.memory_space<vmem>>, %arg19: memref<1x512xf32, #tpu.memory_space<vmem>>, %arg20: memref<512x256xbf16, #tpu.memory_space<vmem>>, %arg21: memref<1x256xf32, #tpu.memory_space<vmem>>, %arg22: memref<1x256xf32, #tpu.memory_space<vmem>>, %arg23: memref<1x256xf32, #tpu.memory_space<vmem>>, %arg24: memref<1x8x256xf32, #tpu.memory_space<vmem>>, %arg25: memref<1x8x256xf32, #tpu.memory_space<vmem>>) attributes {dimension_semantics = [#tpu.dimension_semantics<parallel>], iteration_bounds = array<i64: 2>, scalar_prefetch = 0 : i64, scratch_operands = 0 : i64, tpu.core_type = #tpu.core_type<tc>, window_params = [{transform_indices = @transform_0, window_bounds = array<i64: 1, 8, 256>}, {pipeline_mode = #tpu.pipeline_mode<synchronous>, transform_indices = @transform_1, window_bounds = array<i64: 1, 8, 256>}, {transform_indices = @transform_2, window_bounds = array<i64: 1, 8, 256>}, {pipeline_mode = #tpu.pipeline_mode<synchronous>, transform_indices = @transform_3, window_bounds = array<i64: 256, 768>}, {pipeline_mode = #tpu.pipeline_mode<synchronous>, transform_indices = @transform_4, window_bounds = array<i64: 1, 768>}, {pipeline_mode = #tpu.pipeline_mode<synchronous>, transform_indices = @transform_5, window_bounds = array<i64: 256, 256>}, {pipeline_mode = #tpu.pipeline_mode<synchronous>, transform_indices = @transform_6, window_bounds = array<i64: 1, 256>}, {pipeline_mode = #tpu.pipeline_mode<synchronous>, transform_indices = @transform_7, window_bounds = array<i64: 1, 256>}, {pipeline_mode = #tpu.pipeline_mode<synchronous>, transform_indices = @transform_8, window_bounds = array<i64: 1, 256>}, {pipeline_mode = #tpu.pipeline_mode<synchronous>, transform_indices = @transform_9, window_bounds = array<i64: 256, 256>}, {pipeline_mode = #tpu.pipeline_mode<synchronous>, transform_indices = @transform_10, window_bounds = array<i64: 1, 256>}, {pipeline_mode = #tpu.pipeline_mode<synchronous>, transform_indices = @transform_11, window_bounds = array<i64: 256, 512>}, {pipeline_mode = #tpu.pipeline_mode<synchronous>, transform_indices = @transform_12, window_bounds = array<i64: 1, 512>}, {pipeline_mode = #tpu.pipeline_mode<synchronous>, transform_indices = @transform_13, window_bounds = array<i64: 256, 256>}, {pipeline_mode = #tpu.pipeline_mode<synchronous>, transform_indices = @transform_14, window_bounds = array<i64: 1, 256>}, {pipeline_mode = #tpu.pipeline_mode<synchronous>, transform_indices = @transform_15, window_bounds = array<i64: 1, 256>}, {pipeline_mode = #tpu.pipeline_mode<synchronous>, transform_indices = @transform_16, window_bounds = array<i64: 1, 256>}, {pipeline_mode = #tpu.pipeline_mode<synchronous>, transform_indices = @transform_17, window_bounds = array<i64: 256, 512>}, {pipeline_mode = #tpu.pipeline_mode<synchronous>, transform_indices = @transform_18, window_bounds = array<i64: 1, 512>}, {pipeline_mode = #tpu.pipeline_mode<synchronous>, transform_indices = @transform_19, window_bounds = array<i64: 512, 256>}, {pipeline_mode = #tpu.pipeline_mode<synchronous>, transform_indices = @transform_20, window_bounds = array<i64: 1, 256>}, {pipeline_mode = #tpu.pipeline_mode<synchronous>, transform_indices = @transform_21, window_bounds = array<i64: 1, 256>}, {pipeline_mode = #tpu.pipeline_mode<synchronous>, transform_indices = @transform_22, window_bounds = array<i64: 1, 256>}, {transform_indices = @transform_23, window_bounds = array<i64: 1, 8, 256>}, {transform_indices = @transform_24, window_bounds = array<i64: 1, 8, 256>}]} {
    %c0 = arith.constant 0 : index
    %c0_0 = arith.constant 0 : index
    %c0_1 = arith.constant 0 : index
    %0 = vector.load %arg1[%c0, %c0_0, %c0_1] : memref<1x8x256xf32, #tpu.memory_space<vmem>>, vector<1x8x256xf32>
    %1 = vector.shape_cast %0 : vector<1x8x256xf32> to vector<8x256xf32>
    %cst = arith.constant 1.600000e+01 : f32
    %2 = vector.broadcast %cst : f32 to vector<8x256xf32>
    %3 = arith.mulf %1, %2 : vector<8x256xf32>
    %c0_2 = arith.constant 0 : index
    %c0_3 = arith.constant 0 : index
    %c0_4 = arith.constant 0 : index
    %4 = vector.load %arg2[%c0_2, %c0_3, %c0_4] : memref<1x8x256xf32, #tpu.memory_space<vmem>>, vector<1x8x256xf32>
    %5 = vector.shape_cast %4 : vector<1x8x256xf32> to vector<8x256xf32>
    %6 = arith.addf %3, %5 : vector<8x256xf32>
    %c0_5 = arith.constant 0 : index
    %c0_6 = arith.constant 0 : index
    %c0_7 = arith.constant 0 : index
    %7 = vector.load %arg25[%c0_5, %c0_6, %c0_7] : memref<1x8x256xf32, #tpu.memory_space<vmem>>, vector<1x8x256xf32>
    %8 = vector.shape_cast %7 : vector<1x8x256xf32> to vector<8x256xf32>
    %9 = vector.shape_cast %6 : vector<8x256xf32> to vector<1x8x256xf32>
    tpu.vector_store %arg25[%c0_5, %c0_6, %c0_7], %9 {strides = array<i32>} : memref<1x8x256xf32, #tpu.memory_space<vmem>>, vector<1x8x256xf32>,
    %10 = arith.truncf %6 : vector<8x256xf32> to vector<8x256xbf16>
    %c0_8 = arith.constant 0 : index
    %c0_9 = arith.constant 0 : index
    %11 = vector.load %arg4[%c0_8, %c0_9] : memref<256x768xbf16, #tpu.memory_space<vmem>>, vector<256x768xbf16>
    %cst_10 = arith.constant dense<0.000000e+00> : vector<8x768xf32>
    %12 = tpu.matmul %10, %11, %cst_10 {dimension_numbers = #tpu.dot_dimension_numbers<[1], [0], [0], [1], [0, 0, 1, 1], [], []>} : vector<8x256xbf16>, vector<256x768xbf16>, vector<8x768xf32> -> vector<8x768xf32>
    %c0_11 = arith.constant 0 : index
    %c0_12 = arith.constant 0 : index
    %13 = vector.load %arg5[%c0_11, %c0_12] : memref<1x768xf32, #tpu.memory_space<vmem>>, vector<1x768xf32>
    %14 = vector.broadcast %13 : vector<1x768xf32> to vector<8x768xf32>
    %15 = arith.addf %12, %14 : vector<8x768xf32>
    %16 = vector.extract_strided_slice %15 {offsets = [0, 0], sizes = [8, 256], strides = [1, 1]} : vector<8x768xf32> to vector<8x256xf32>
    %17 = vector.extract_strided_slice %15 {offsets = [0, 256], sizes = [8, 256], strides = [1, 1]} : vector<8x768xf32> to vector<8x256xf32>
    %18 = vector.extract_strided_slice %15 {offsets = [0, 512], sizes = [8, 256], strides = [1, 1]} : vector<8x768xf32> to vector<8x256xf32>
    %19 = arith.truncf %17 : vector<8x256xf32> to vector<8x256xbf16>
    %20 = arith.truncf %18 : vector<8x256xf32> to vector<8x256xbf16>
    %cst_13 = arith.constant 0.0883883461 : f32
    %21 = vector.broadcast %cst_13 : f32 to vector<8x256xf32>
    %22 = arith.mulf %16, %21 : vector<8x256xf32>
    %23 = arith.truncf %22 : vector<8x256xf32> to vector<8x256xbf16>
    %24 = vector.extract_strided_slice %23 {offsets = [0, 0], sizes = [8, 128], strides = [1, 1]} : vector<8x256xbf16> to vector<8x128xbf16>
    %25 = vector.extract_strided_slice %19 {offsets = [0, 0], sizes = [8, 128], strides = [1, 1]} : vector<8x256xbf16> to vector<8x128xbf16>
    %26 = vector.extract_strided_slice %20 {offsets = [0, 0], sizes = [8, 128], strides = [1, 1]} : vector<8x256xbf16> to vector<8x128xbf16>
    %cst_14 = arith.constant dense<0.000000e+00> : vector<8x8xf32>
    %27 = tpu.matmul %24, %25, %cst_14 {dimension_numbers = #tpu.dot_dimension_numbers<[1], [1], [0], [0], [0, 0, 1, 0], [], []>} : vector<8x128xbf16>, vector<8x128xbf16>, vector<8x8xf32> -> vector<8x8xf32>
    %cst_15 = arith.constant dense<0xFF800000> : vector<8xf32>
    %28 = vector.multi_reduction <maximumf>, %27, %cst_15 [1] : vector<8x8xf32> to vector<8xf32>
    %29 = vector.shape_cast %28 : vector<8xf32> to vector<8x1xf32>
    %30 = vector.broadcast %29 : vector<8x1xf32> to vector<8x8xf32>
    %31 = arith.subf %27, %30 : vector<8x8xf32>
    %32 = math.exp %31 : vector<8x8xf32>
    %cst_16 = arith.constant dense<0.000000e+00> : vector<8xf32>
    %33 = vector.multi_reduction <add>, %32, %cst_16 [1] : vector<8x8xf32> to vector<8xf32>
    %34 = vector.shape_cast %33 : vector<8xf32> to vector<8x1xf32>
    %35 = tpu.reciprocal %34 {approx = true} : vector<8x1xf32> -> vector<8x1xf32>
    %36 = vector.broadcast %35 : vector<8x1xf32> to vector<8x8xf32>
    %37 = arith.mulf %32, %36 : vector<8x8xf32>
    %38 = arith.truncf %37 : vector<8x8xf32> to vector<8x8xbf16>
    %cst_17 = arith.constant dense<0.000000e+00> : vector<8x128xf32>
    %39 = tpu.matmul %38, %26, %cst_17 {dimension_numbers = #tpu.dot_dimension_numbers<[1], [0], [0], [1], [0, 0, 1, 1], [], []>} : vector<8x8xbf16>, vector<8x128xbf16>, vector<8x128xf32> -> vector<8x128xf32>
    %40 = vector.extract_strided_slice %23 {offsets = [0, 128], sizes = [8, 128], strides = [1, 1]} : vector<8x256xbf16> to vector<8x128xbf16>
    %41 = vector.extract_strided_slice %19 {offsets = [0, 128], sizes = [8, 128], strides = [1, 1]} : vector<8x256xbf16> to vector<8x128xbf16>
    %42 = vector.extract_strided_slice %20 {offsets = [0, 128], sizes = [8, 128], strides = [1, 1]} : vector<8x256xbf16> to vector<8x128xbf16>
    %cst_18 = arith.constant dense<0.000000e+00> : vector<8x8xf32>
    %43 = tpu.matmul %40, %41, %cst_18 {dimension_numbers = #tpu.dot_dimension_numbers<[1], [1], [0], [0], [0, 0, 1, 0], [], []>} : vector<8x128xbf16>, vector<8x128xbf16>, vector<8x8xf32> -> vector<8x8xf32>
    %cst_19 = arith.constant dense<0xFF800000> : vector<8xf32>
    %44 = vector.multi_reduction <maximumf>, %43, %cst_19 [1] : vector<8x8xf32> to vector<8xf32>
    %45 = vector.shape_cast %44 : vector<8xf32> to vector<8x1xf32>
    %46 = vector.broadcast %45 : vector<8x1xf32> to vector<8x8xf32>
    %47 = arith.subf %43, %46 : vector<8x8xf32>
    %48 = math.exp %47 : vector<8x8xf32>
    %cst_20 = arith.constant dense<0.000000e+00> : vector<8xf32>
    %49 = vector.multi_reduction <add>, %48, %cst_20 [1] : vector<8x8xf32> to vector<8xf32>
    %50 = vector.shape_cast %49 : vector<8xf32> to vector<8x1xf32>
    %51 = tpu.reciprocal %50 {approx = true} : vector<8x1xf32> -> vector<8x1xf32>
    %52 = vector.broadcast %51 : vector<8x1xf32> to vector<8x8xf32>
    %53 = arith.mulf %48, %52 : vector<8x8xf32>
    %54 = arith.truncf %53 : vector<8x8xf32> to vector<8x8xbf16>
    %cst_21 = arith.constant dense<0.000000e+00> : vector<8x128xf32>
    %55 = tpu.matmul %54, %42, %cst_21 {dimension_numbers = #tpu.dot_dimension_numbers<[1], [0], [0], [1], [0, 0, 1, 1], [], []>} : vector<8x8xbf16>, vector<8x128xbf16>, vector<8x128xf32> -> vector<8x128xf32>
    %56 = tpu.concatenate %39, %55 in 1 : vector<8x128xf32>, vector<8x128xf32> -> vector<8x256xf32>
    %57 = arith.truncf %56 : vector<8x256xf32> to vector<8x256xbf16>
    %c0_22 = arith.constant 0 : index
    %c0_23 = arith.constant 0 : index
    %58 = vector.load %arg6[%c0_22, %c0_23] : memref<256x256xbf16, #tpu.memory_space<vmem>>, vector<256x256xbf16>
    %cst_24 = arith.constant dense<0.000000e+00> : vector<8x256xf32>
    %59 = tpu.matmul %57, %58, %cst_24 {dimension_numbers = #tpu.dot_dimension_numbers<[1], [0], [0], [1], [0, 0, 1, 1], [], []>} : vector<8x256xbf16>, vector<256x256xbf16>, vector<8x256xf32> -> vector<8x256xf32>
    %c0_25 = arith.constant 0 : index
    %c0_26 = arith.constant 0 : index
    %60 = vector.load %arg7[%c0_25, %c0_26] : memref<1x256xf32, #tpu.memory_space<vmem>>, vector<1x256xf32>
    %61 = vector.broadcast %60 : vector<1x256xf32> to vector<8x256xf32>
    %62 = arith.addf %59, %61 : vector<8x256xf32>
    %63 = arith.addf %6, %62 : vector<8x256xf32>
    %c0_27 = arith.constant 0 : index
    %c0_28 = arith.constant 0 : index
    %64 = vector.load %arg8[%c0_27, %c0_28] : memref<1x256xf32, #tpu.memory_space<vmem>>, vector<1x256xf32>
    %c0_29 = arith.constant 0 : index
    %c0_30 = arith.constant 0 : index
    %65 = vector.load %arg9[%c0_29, %c0_30] : memref<1x256xf32, #tpu.memory_space<vmem>>, vector<1x256xf32>
    %cst_31 = arith.constant dense<0.000000e+00> : vector<8xf32>
    %66 = vector.multi_reduction <add>, %63, %cst_31 [1] : vector<8x256xf32> to vector<8xf32>
    %67 = vector.shape_cast %66 : vector<8xf32> to vector<8x1xf32>
    %cst_32 = arith.constant 2.560000e+02 : f32
    %68 = vector.broadcast %cst_32 : f32 to vector<8x1xf32>
    %69 = arith.divf %67, %68 : vector<8x1xf32>
    %70 = vector.broadcast %69 : vector<8x1xf32> to vector<8x256xf32>
    %71 = arith.subf %63, %70 : vector<8x256xf32>
    %72 = vector.broadcast %69 : vector<8x1xf32> to vector<8x256xf32>
    %73 = arith.subf %63, %72 : vector<8x256xf32>
    %74 = arith.mulf %71, %73 : vector<8x256xf32>
    %cst_33 = arith.constant dense<0.000000e+00> : vector<8xf32>
    %75 = vector.multi_reduction <add>, %74, %cst_33 [1] : vector<8x256xf32> to vector<8xf32>
    %76 = vector.shape_cast %75 : vector<8xf32> to vector<8x1xf32>
    %cst_34 = arith.constant 2.560000e+02 : f32
    %77 = vector.broadcast %cst_34 : f32 to vector<8x1xf32>
    %78 = arith.divf %76, %77 : vector<8x1xf32>
    %79 = vector.broadcast %69 : vector<8x1xf32> to vector<8x256xf32>
    %80 = arith.subf %63, %79 : vector<8x256xf32>
    %cst_35 = arith.constant 9.99999974E-6 : f32
    %81 = vector.broadcast %cst_35 : f32 to vector<8x1xf32>
    %82 = arith.addf %78, %81 : vector<8x1xf32>
    %83 = math.rsqrt %82 : vector<8x1xf32>
    %84 = vector.broadcast %83 : vector<8x1xf32> to vector<8x256xf32>
    %85 = arith.mulf %80, %84 : vector<8x256xf32>
    %86 = vector.broadcast %64 : vector<1x256xf32> to vector<8x256xf32>
    %87 = arith.mulf %85, %86 : vector<8x256xf32>
    %88 = vector.broadcast %65 : vector<1x256xf32> to vector<8x256xf32>
    %89 = arith.addf %87, %88 : vector<8x256xf32>
    %90 = arith.truncf %89 : vector<8x256xf32> to vector<8x256xbf16>
    %c0_36 = arith.constant 0 : index
    %c0_37 = arith.constant 0 : index
    %91 = vector.load %arg10[%c0_36, %c0_37] : memref<256x256xbf16, #tpu.memory_space<vmem>>, vector<256x256xbf16>
    %cst_38 = arith.constant dense<0.000000e+00> : vector<8x256xf32>
    %92 = tpu.matmul %90, %91, %cst_38 {dimension_numbers = #tpu.dot_dimension_numbers<[1], [0], [0], [1], [0, 0, 1, 1], [], []>} : vector<8x256xbf16>, vector<256x256xbf16>, vector<8x256xf32> -> vector<8x256xf32>
    %c0_39 = arith.constant 0 : index
    %c0_40 = arith.constant 0 : index
    %93 = vector.load %arg11[%c0_39, %c0_40] : memref<1x256xf32, #tpu.memory_space<vmem>>, vector<1x256xf32>
    %94 = vector.broadcast %93 : vector<1x256xf32> to vector<8x256xf32>
    %95 = arith.addf %92, %94 : vector<8x256xf32>
    %c0_41 = arith.constant 0 : index
    %c0_42 = arith.constant 0 : index
    %c0_43 = arith.constant 0 : index
    %96 = vector.load %arg3[%c0_41, %c0_42, %c0_43] : memref<1x8x256xf32, #tpu.memory_space<vmem>>, vector<1x8x256xf32>
    %97 = vector.shape_cast %96 : vector<1x8x256xf32> to vector<8x256xf32>
    %98 = arith.truncf %97 : vector<8x256xf32> to vector<8x256xbf16>
    %c0_44 = arith.constant 0 : index
    %c0_45 = arith.constant 0 : index
    %99 = vector.load %arg12[%c0_44, %c0_45] : memref<256x512xbf16, #tpu.memory_space<vmem>>, vector<256x512xbf16>
    %cst_46 = arith.constant dense<0.000000e+00> : vector<8x512xf32>
    %100 = tpu.matmul %98, %99, %cst_46 {dimension_numbers = #tpu.dot_dimension_numbers<[1], [0], [0], [1], [0, 0, 1, 1], [], []>} : vector<8x256xbf16>, vector<256x512xbf16>, vector<8x512xf32> -> vector<8x512xf32>
    %c0_47 = arith.constant 0 : index
    %c0_48 = arith.constant 0 : index
    %101 = vector.load %arg13[%c0_47, %c0_48] : memref<1x512xf32, #tpu.memory_space<vmem>>, vector<1x512xf32>
    %102 = vector.broadcast %101 : vector<1x512xf32> to vector<8x512xf32>
    %103 = arith.addf %100, %102 : vector<8x512xf32>
    %104 = vector.extract_strided_slice %103 {offsets = [0, 0], sizes = [8, 256], strides = [1, 1]} : vector<8x512xf32> to vector<8x256xf32>
    %105 = arith.truncf %104 : vector<8x256xf32> to vector<8x256xbf16>
    %106 = vector.extract_strided_slice %103 {offsets = [0, 256], sizes = [8, 256], strides = [1, 1]} : vector<8x512xf32> to vector<8x256xf32>
    %107 = arith.truncf %106 : vector<8x256xf32> to vector<8x256xbf16>
    %cst_49 = arith.constant 0.0883883461 : f32
    %108 = vector.broadcast %cst_49 : f32 to vector<8x256xf32>
    %109 = arith.mulf %95, %108 : vector<8x256xf32>
    %110 = arith.truncf %109 : vector<8x256xf32> to vector<8x256xbf16>
    %111 = vector.extract_strided_slice %110 {offsets = [0, 0], sizes = [8, 128], strides = [1, 1]} : vector<8x256xbf16> to vector<8x128xbf16>
    %112 = vector.extract_strided_slice %105 {offsets = [0, 0], sizes = [8, 128], strides = [1, 1]} : vector<8x256xbf16> to vector<8x128xbf16>
    %113 = vector.extract_strided_slice %107 {offsets = [0, 0], sizes = [8, 128], strides = [1, 1]} : vector<8x256xbf16> to vector<8x128xbf16>
    %cst_50 = arith.constant dense<0.000000e+00> : vector<8x8xf32>
    %114 = tpu.matmul %111, %112, %cst_50 {dimension_numbers = #tpu.dot_dimension_numbers<[1], [1], [0], [0], [0, 0, 1, 0], [], []>} : vector<8x128xbf16>, vector<8x128xbf16>, vector<8x8xf32> -> vector<8x8xf32>
    %cst_51 = arith.constant dense<0xFF800000> : vector<8xf32>
    %115 = vector.multi_reduction <maximumf>, %114, %cst_51 [1] : vector<8x8xf32> to vector<8xf32>
    %116 = vector.shape_cast %115 : vector<8xf32> to vector<8x1xf32>
    %117 = vector.broadcast %116 : vector<8x1xf32> to vector<8x8xf32>
    %118 = arith.subf %114, %117 : vector<8x8xf32>
    %119 = math.exp %118 : vector<8x8xf32>
    %cst_52 = arith.constant dense<0.000000e+00> : vector<8xf32>
    %120 = vector.multi_reduction <add>, %119, %cst_52 [1] : vector<8x8xf32> to vector<8xf32>
    %121 = vector.shape_cast %120 : vector<8xf32> to vector<8x1xf32>
    %122 = tpu.reciprocal %121 {approx = true} : vector<8x1xf32> -> vector<8x1xf32>
    %123 = vector.broadcast %122 : vector<8x1xf32> to vector<8x8xf32>
    %124 = arith.mulf %119, %123 : vector<8x8xf32>
    %125 = arith.truncf %124 : vector<8x8xf32> to vector<8x8xbf16>
    %cst_53 = arith.constant dense<0.000000e+00> : vector<8x128xf32>
    %126 = tpu.matmul %125, %113, %cst_53 {dimension_numbers = #tpu.dot_dimension_numbers<[1], [0], [0], [1], [0, 0, 1, 1], [], []>} : vector<8x8xbf16>, vector<8x128xbf16>, vector<8x128xf32> -> vector<8x128xf32>
    %127 = vector.extract_strided_slice %110 {offsets = [0, 128], sizes = [8, 128], strides = [1, 1]} : vector<8x256xbf16> to vector<8x128xbf16>
    %128 = vector.extract_strided_slice %105 {offsets = [0, 128], sizes = [8, 128], strides = [1, 1]} : vector<8x256xbf16> to vector<8x128xbf16>
    %129 = vector.extract_strided_slice %107 {offsets = [0, 128], sizes = [8, 128], strides = [1, 1]} : vector<8x256xbf16> to vector<8x128xbf16>
    %cst_54 = arith.constant dense<0.000000e+00> : vector<8x8xf32>
    %130 = tpu.matmul %127, %128, %cst_54 {dimension_numbers = #tpu.dot_dimension_numbers<[1], [1], [0], [0], [0, 0, 1, 0], [], []>} : vector<8x128xbf16>, vector<8x128xbf16>, vector<8x8xf32> -> vector<8x8xf32>
    %cst_55 = arith.constant dense<0xFF800000> : vector<8xf32>
    %131 = vector.multi_reduction <maximumf>, %130, %cst_55 [1] : vector<8x8xf32> to vector<8xf32>
    %132 = vector.shape_cast %131 : vector<8xf32> to vector<8x1xf32>
    %133 = vector.broadcast %132 : vector<8x1xf32> to vector<8x8xf32>
    %134 = arith.subf %130, %133 : vector<8x8xf32>
    %135 = math.exp %134 : vector<8x8xf32>
    %cst_56 = arith.constant dense<0.000000e+00> : vector<8xf32>
    %136 = vector.multi_reduction <add>, %135, %cst_56 [1] : vector<8x8xf32> to vector<8xf32>
    %137 = vector.shape_cast %136 : vector<8xf32> to vector<8x1xf32>
    %138 = tpu.reciprocal %137 {approx = true} : vector<8x1xf32> -> vector<8x1xf32>
    %139 = vector.broadcast %138 : vector<8x1xf32> to vector<8x8xf32>
    %140 = arith.mulf %135, %139 : vector<8x8xf32>
    %141 = arith.truncf %140 : vector<8x8xf32> to vector<8x8xbf16>
    %cst_57 = arith.constant dense<0.000000e+00> : vector<8x128xf32>
    %142 = tpu.matmul %141, %129, %cst_57 {dimension_numbers = #tpu.dot_dimension_numbers<[1], [0], [0], [1], [0, 0, 1, 1], [], []>} : vector<8x8xbf16>, vector<8x128xbf16>, vector<8x128xf32> -> vector<8x128xf32>
    %143 = tpu.concatenate %126, %142 in 1 : vector<8x128xf32>, vector<8x128xf32> -> vector<8x256xf32>
    %144 = arith.truncf %143 : vector<8x256xf32> to vector<8x256xbf16>
    %c0_58 = arith.constant 0 : index
    %c0_59 = arith.constant 0 : index
    %145 = vector.load %arg14[%c0_58, %c0_59] : memref<256x256xbf16, #tpu.memory_space<vmem>>, vector<256x256xbf16>
    %cst_60 = arith.constant dense<0.000000e+00> : vector<8x256xf32>
    %146 = tpu.matmul %144, %145, %cst_60 {dimension_numbers = #tpu.dot_dimension_numbers<[1], [0], [0], [1], [0, 0, 1, 1], [], []>} : vector<8x256xbf16>, vector<256x256xbf16>, vector<8x256xf32> -> vector<8x256xf32>
    %c0_61 = arith.constant 0 : index
    %c0_62 = arith.constant 0 : index
    %147 = vector.load %arg15[%c0_61, %c0_62] : memref<1x256xf32, #tpu.memory_space<vmem>>, vector<1x256xf32>
    %148 = vector.broadcast %147 : vector<1x256xf32> to vector<8x256xf32>
    %149 = arith.addf %146, %148 : vector<8x256xf32>
    %150 = arith.addf %89, %149 : vector<8x256xf32>
    %c0_63 = arith.constant 0 : index
    %c0_64 = arith.constant 0 : index
    %151 = vector.load %arg16[%c0_63, %c0_64] : memref<1x256xf32, #tpu.memory_space<vmem>>, vector<1x256xf32>
    %c0_65 = arith.constant 0 : index
    %c0_66 = arith.constant 0 : index
    %152 = vector.load %arg17[%c0_65, %c0_66] : memref<1x256xf32, #tpu.memory_space<vmem>>, vector<1x256xf32>
    %cst_67 = arith.constant dense<0.000000e+00> : vector<8xf32>
    %153 = vector.multi_reduction <add>, %150, %cst_67 [1] : vector<8x256xf32> to vector<8xf32>
    %154 = vector.shape_cast %153 : vector<8xf32> to vector<8x1xf32>
    %cst_68 = arith.constant 2.560000e+02 : f32
    %155 = vector.broadcast %cst_68 : f32 to vector<8x1xf32>
    %156 = arith.divf %154, %155 : vector<8x1xf32>
    %157 = vector.broadcast %156 : vector<8x1xf32> to vector<8x256xf32>
    %158 = arith.subf %150, %157 : vector<8x256xf32>
    %159 = vector.broadcast %156 : vector<8x1xf32> to vector<8x256xf32>
    %160 = arith.subf %150, %159 : vector<8x256xf32>
    %161 = arith.mulf %158, %160 : vector<8x256xf32>
    %cst_69 = arith.constant dense<0.000000e+00> : vector<8xf32>
    %162 = vector.multi_reduction <add>, %161, %cst_69 [1] : vector<8x256xf32> to vector<8xf32>
    %163 = vector.shape_cast %162 : vector<8xf32> to vector<8x1xf32>
    %cst_70 = arith.constant 2.560000e+02 : f32
    %164 = vector.broadcast %cst_70 : f32 to vector<8x1xf32>
    %165 = arith.divf %163, %164 : vector<8x1xf32>
    %166 = vector.broadcast %156 : vector<8x1xf32> to vector<8x256xf32>
    %167 = arith.subf %150, %166 : vector<8x256xf32>
    %cst_71 = arith.constant 9.99999974E-6 : f32
    %168 = vector.broadcast %cst_71 : f32 to vector<8x1xf32>
    %169 = arith.addf %165, %168 : vector<8x1xf32>
    %170 = math.rsqrt %169 : vector<8x1xf32>
    %171 = vector.broadcast %170 : vector<8x1xf32> to vector<8x256xf32>
    %172 = arith.mulf %167, %171 : vector<8x256xf32>
    %173 = vector.broadcast %151 : vector<1x256xf32> to vector<8x256xf32>
    %174 = arith.mulf %172, %173 : vector<8x256xf32>
    %175 = vector.broadcast %152 : vector<1x256xf32> to vector<8x256xf32>
    %176 = arith.addf %174, %175 : vector<8x256xf32>
    %177 = arith.truncf %176 : vector<8x256xf32> to vector<8x256xbf16>
    %c0_72 = arith.constant 0 : index
    %c0_73 = arith.constant 0 : index
    %178 = vector.load %arg18[%c0_72, %c0_73] : memref<256x512xbf16, #tpu.memory_space<vmem>>, vector<256x512xbf16>
    %cst_74 = arith.constant dense<0.000000e+00> : vector<8x512xf32>
    %179 = tpu.matmul %177, %178, %cst_74 {dimension_numbers = #tpu.dot_dimension_numbers<[1], [0], [0], [1], [0, 0, 1, 1], [], []>} : vector<8x256xbf16>, vector<256x512xbf16>, vector<8x512xf32> -> vector<8x512xf32>
    %c0_75 = arith.constant 0 : index
    %c0_76 = arith.constant 0 : index
    %180 = vector.load %arg19[%c0_75, %c0_76] : memref<1x512xf32, #tpu.memory_space<vmem>>, vector<1x512xf32>
    %181 = vector.broadcast %180 : vector<1x512xf32> to vector<8x512xf32>
    %182 = arith.addf %179, %181 : vector<8x512xf32>
    %cst_77 = arith.constant 0.000000e+00 : f32
    %183 = vector.broadcast %cst_77 : f32 to vector<8x512xf32>
    %184 = arith.maximumf %182, %183 : vector<8x512xf32>
    %185 = arith.truncf %184 : vector<8x512xf32> to vector<8x512xbf16>
    %c0_78 = arith.constant 0 : index
    %c0_79 = arith.constant 0 : index
    %186 = vector.load %arg20[%c0_78, %c0_79] : memref<512x256xbf16, #tpu.memory_space<vmem>>, vector<512x256xbf16>
    %cst_80 = arith.constant dense<0.000000e+00> : vector<8x256xf32>
    %187 = tpu.matmul %185, %186, %cst_80 {dimension_numbers = #tpu.dot_dimension_numbers<[1], [0], [0], [1], [0, 0, 1, 1], [], []>} : vector<8x512xbf16>, vector<512x256xbf16>, vector<8x256xf32> -> vector<8x256xf32>
    %c0_81 = arith.constant 0 : index
    %c0_82 = arith.constant 0 : index
    %188 = vector.load %arg21[%c0_81, %c0_82] : memref<1x256xf32, #tpu.memory_space<vmem>>, vector<1x256xf32>
    %189 = vector.broadcast %188 : vector<1x256xf32> to vector<8x256xf32>
    %190 = arith.addf %187, %189 : vector<8x256xf32>
    %191 = arith.addf %176, %190 : vector<8x256xf32>
    %c0_83 = arith.constant 0 : index
    %c0_84 = arith.constant 0 : index
    %192 = vector.load %arg22[%c0_83, %c0_84] : memref<1x256xf32, #tpu.memory_space<vmem>>, vector<1x256xf32>
    %c0_85 = arith.constant 0 : index
    %c0_86 = arith.constant 0 : index
    %193 = vector.load %arg23[%c0_85, %c0_86] : memref<1x256xf32, #tpu.memory_space<vmem>>, vector<1x256xf32>
    %cst_87 = arith.constant dense<0.000000e+00> : vector<8xf32>
    %194 = vector.multi_reduction <add>, %191, %cst_87 [1] : vector<8x256xf32> to vector<8xf32>
    %195 = vector.shape_cast %194 : vector<8xf32> to vector<8x1xf32>
    %cst_88 = arith.constant 2.560000e+02 : f32
    %196 = vector.broadcast %cst_88 : f32 to vector<8x1xf32>
    %197 = arith.divf %195, %196 : vector<8x1xf32>
    %198 = vector.broadcast %197 : vector<8x1xf32> to vector<8x256xf32>
    %199 = arith.subf %191, %198 : vector<8x256xf32>
    %200 = vector.broadcast %197 : vector<8x1xf32> to vector<8x256xf32>
    %201 = arith.subf %191, %200 : vector<8x256xf32>
    %202 = arith.mulf %199, %201 : vector<8x256xf32>
    %cst_89 = arith.constant dense<0.000000e+00> : vector<8xf32>
    %203 = vector.multi_reduction <add>, %202, %cst_89 [1] : vector<8x256xf32> to vector<8xf32>
    %204 = vector.shape_cast %203 : vector<8xf32> to vector<8x1xf32>
    %cst_90 = arith.constant 2.560000e+02 : f32
    %205 = vector.broadcast %cst_90 : f32 to vector<8x1xf32>
    %206 = arith.divf %204, %205 : vector<8x1xf32>
    %207 = vector.broadcast %197 : vector<8x1xf32> to vector<8x256xf32>
    %208 = arith.subf %191, %207 : vector<8x256xf32>
    %cst_91 = arith.constant 9.99999974E-6 : f32
    %209 = vector.broadcast %cst_91 : f32 to vector<8x1xf32>
    %210 = arith.addf %206, %209 : vector<8x1xf32>
    %211 = math.rsqrt %210 : vector<8x1xf32>
    %212 = vector.broadcast %211 : vector<8x1xf32> to vector<8x256xf32>
    %213 = arith.mulf %208, %212 : vector<8x256xf32>
    %214 = vector.broadcast %192 : vector<1x256xf32> to vector<8x256xf32>
    %215 = arith.mulf %213, %214 : vector<8x256xf32>
    %216 = vector.broadcast %193 : vector<1x256xf32> to vector<8x256xf32>
    %217 = arith.addf %215, %216 : vector<8x256xf32>
    %c0_92 = arith.constant 0 : index
    %c0_93 = arith.constant 0 : index
    %c0_94 = arith.constant 0 : index
    %218 = vector.load %arg24[%c0_92, %c0_93, %c0_94] : memref<1x8x256xf32, #tpu.memory_space<vmem>>, vector<1x8x256xf32>
    %219 = vector.shape_cast %218 : vector<1x8x256xf32> to vector<8x256xf32>
    %220 = vector.shape_cast %217 : vector<8x256xf32> to vector<1x8x256xf32>
    tpu.vector_store %arg24[%c0_92, %c0_93, %c0_94], %220 {strides = array<i32>} : memref<1x8x256xf32, #tpu.memory_space<vmem>>, vector<1x8x256xf32>,
    return
  }
  func.func @transform_0(%arg0: i32) -> (i32, i32, i32) {
    %c0_i32 = arith.constant 0 : i32
    %c0_i32_0 = arith.constant 0 : i32
    %c0_i32_1 = arith.constant 0 : i32
    return %arg0, %c0_i32, %c0_i32_0 : i32, i32, i32
  }
  func.func @transform_1(%arg0: i32) -> (i32, i32, i32) {
    %c0_i32 = arith.constant 0 : i32
    %c0_i32_0 = arith.constant 0 : i32
    %c0_i32_1 = arith.constant 0 : i32
    %c0_i32_2 = arith.constant 0 : i32
    return %c0_i32, %c0_i32_0, %c0_i32_1 : i32, i32, i32
  }
  func.func @transform_2(%arg0: i32) -> (i32, i32, i32) {
    %c0_i32 = arith.constant 0 : i32
    %c0_i32_0 = arith.constant 0 : i32
    %c0_i32_1 = arith.constant 0 : i32
    return %arg0, %c0_i32, %c0_i32_0 : i32, i32, i32
  }
  func.func @transform_3(%arg0: i32) -> (i32, i32) {
    %c0_i32 = arith.constant 0 : i32
    %c0_i32_0 = arith.constant 0 : i32
    %c0_i32_1 = arith.constant 0 : i32
    return %c0_i32, %c0_i32_0 : i32, i32
  }
  func.func @transform_4(%arg0: i32) -> (i32, i32) {
    %c0_i32 = arith.constant 0 : i32
    %c0_i32_0 = arith.constant 0 : i32
    %c0_i32_1 = arith.constant 0 : i32
    return %c0_i32, %c0_i32_0 : i32, i32
  }
  func.func @transform_5(%arg0: i32) -> (i32, i32) {
    %c0_i32 = arith.constant 0 : i32
    %c0_i32_0 = arith.constant 0 : i32
    %c0_i32_1 = arith.constant 0 : i32
    return %c0_i32, %c0_i32_0 : i32, i32
  }
  func.func @transform_6(%arg0: i32) -> (i32, i32) {
    %c0_i32 = arith.constant 0 : i32
    %c0_i32_0 = arith.constant 0 : i32
    %c0_i32_1 = arith.constant 0 : i32
    return %c0_i32, %c0_i32_0 : i32, i32
  }
  func.func @transform_7(%arg0: i32) -> (i32, i32) {
    %c0_i32 = arith.constant 0 : i32
    %c0_i32_0 = arith.constant 0 : i32
    %c0_i32_1 = arith.constant 0 : i32
    return %c0_i32, %c0_i32_0 : i32, i32
  }
  func.func @transform_8(%arg0: i32) -> (i32, i32) {
    %c0_i32 = arith.constant 0 : i32
    %c0_i32_0 = arith.constant 0 : i32
    %c0_i32_1 = arith.constant 0 : i32
    return %c0_i32, %c0_i32_0 : i32, i32
  }
  func.func @transform_9(%arg0: i32) -> (i32, i32) {
    %c0_i32 = arith.constant 0 : i32
    %c0_i32_0 = arith.constant 0 : i32
    %c0_i32_1 = arith.constant 0 : i32
    return %c0_i32, %c0_i32_0 : i32, i32
  }
  func.func @transform_10(%arg0: i32) -> (i32, i32) {
    %c0_i32 = arith.constant 0 : i32
    %c0_i32_0 = arith.constant 0 : i32
    %c0_i32_1 = arith.constant 0 : i32
    return %c0_i32, %c0_i32_0 : i32, i32
  }
  func.func @transform_11(%arg0: i32) -> (i32, i32) {
    %c0_i32 = arith.constant 0 : i32
    %c0_i32_0 = arith.constant 0 : i32
    %c0_i32_1 = arith.constant 0 : i32
    return %c0_i32, %c0_i32_0 : i32, i32
  }
  func.func @transform_12(%arg0: i32) -> (i32, i32) {
    %c0_i32 = arith.constant 0 : i32
    %c0_i32_0 = arith.constant 0 : i32
    %c0_i32_1 = arith.constant 0 : i32
    return %c0_i32, %c0_i32_0 : i32, i32
  }
  func.func @transform_13(%arg0: i32) -> (i32, i32) {
    %c0_i32 = arith.constant 0 : i32
    %c0_i32_0 = arith.constant 0 : i32
    %c0_i32_1 = arith.constant 0 : i32
    return %c0_i32, %c0_i32_0 : i32, i32
  }
  func.func @transform_14(%arg0: i32) -> (i32, i32) {
    %c0_i32 = arith.constant 0 : i32
    %c0_i32_0 = arith.constant 0 : i32
    %c0_i32_1 = arith.constant 0 : i32
    return %c0_i32, %c0_i32_0 : i32, i32
  }
  func.func @transform_15(%arg0: i32) -> (i32, i32) {
    %c0_i32 = arith.constant 0 : i32
    %c0_i32_0 = arith.constant 0 : i32
    %c0_i32_1 = arith.constant 0 : i32
    return %c0_i32, %c0_i32_0 : i32, i32
  }
  func.func @transform_16(%arg0: i32) -> (i32, i32) {
    %c0_i32 = arith.constant 0 : i32
    %c0_i32_0 = arith.constant 0 : i32
    %c0_i32_1 = arith.constant 0 : i32
    return %c0_i32, %c0_i32_0 : i32, i32
  }
  func.func @transform_17(%arg0: i32) -> (i32, i32) {
    %c0_i32 = arith.constant 0 : i32
    %c0_i32_0 = arith.constant 0 : i32
    %c0_i32_1 = arith.constant 0 : i32
    return %c0_i32, %c0_i32_0 : i32, i32
  }
  func.func @transform_18(%arg0: i32) -> (i32, i32) {
    %c0_i32 = arith.constant 0 : i32
    %c0_i32_0 = arith.constant 0 : i32
    %c0_i32_1 = arith.constant 0 : i32
    return %c0_i32, %c0_i32_0 : i32, i32
  }
  func.func @transform_19(%arg0: i32) -> (i32, i32) {
    %c0_i32 = arith.constant 0 : i32
    %c0_i32_0 = arith.constant 0 : i32
    %c0_i32_1 = arith.constant 0 : i32
    return %c0_i32, %c0_i32_0 : i32, i32
  }
  func.func @transform_20(%arg0: i32) -> (i32, i32) {
    %c0_i32 = arith.constant 0 : i32
    %c0_i32_0 = arith.constant 0 : i32
    %c0_i32_1 = arith.constant 0 : i32
    return %c0_i32, %c0_i32_0 : i32, i32
  }
  func.func @transform_21(%arg0: i32) -> (i32, i32) {
    %c0_i32 = arith.constant 0 : i32
    %c0_i32_0 = arith.constant 0 : i32
    %c0_i32_1 = arith.constant 0 : i32
    return %c0_i32, %c0_i32_0 : i32, i32
  }
  func.func @transform_22(%arg0: i32) -> (i32, i32) {
    %c0_i32 = arith.constant 0 : i32
    %c0_i32_0 = arith.constant 0 : i32
    %c0_i32_1 = arith.constant 0 : i32
    return %c0_i32, %c0_i32_0 : i32, i32
  }
  func.func @transform_23(%arg0: i32) -> (i32, i32, i32) {
    %c0_i32 = arith.constant 0 : i32
    %c0_i32_0 = arith.constant 0 : i32
    %c0_i32_1 = arith.constant 0 : i32
    return %arg0, %c0_i32, %c0_i32_0 : i32, i32, i32
  }
  func.func @transform_24(%arg0: i32) -> (i32, i32, i32) {
    %c0_i32 = arith.constant 0 : i32
    %c0_i32_0 = arith.constant 0 : i32
    %c0_i32_1 = arith.constant 0 : i32
    return %arg0, %c0_i32, %c0_i32_0 : i32, i32, i32
  }
}

</mosaic_0001>

<llo_original>
// kernel: tpu_custom_call.1
$region0: #{tpu_custom_call.1}
  #allocation0 [shape = 'u32[]', space=smem, size = 0x4, offset = 0x4, fixed_abs, tag = 'smem constant byte address 0x4 - core index']
  #allocation1 [shape = 'u32[144,128]{1,0:T(1,128)}', space=vmem, size = 0x12000, scoped, tag = 'internal scratch']
  %s0 = inlined_call_operand.hbm [shape: f32[2,8,256], index: 0, kind: input, shape index: {}]
  %s1 = inlined_call_operand.hbm [shape: f32[1,8,256], index: 1, kind: input, shape index: {}]
  %s2 = inlined_call_operand.hbm [shape: f32[2,8,256], index: 2, kind: input, shape index: {}]
  %s3 = inlined_call_operand.hbm [shape: bf16[256,768], index: 3, kind: input, shape index: {}]
  %s4 = inlined_call_operand.vmem [shape: f32[1,768], index: 4, kind: input, shape index: {}]
  %s5 = inlined_call_operand.hbm [shape: bf16[256,256], index: 5, kind: input, shape index: {}]
  %s6 = inlined_call_operand.hbm [shape: f32[1,256], index: 6, kind: input, shape index: {}]
  %s7 = inlined_call_operand.hbm [shape: f32[1,256], index: 7, kind: input, shape index: {}]
  %s8 = inlined_call_operand.hbm [shape: f32[1,256], index: 8, kind: input, shape index: {}]
  %s9 = inlined_call_operand.hbm [shape: bf16[256,256], index: 9, kind: input, shape index: {}]
  %s10 = inlined_call_operand.vmem [shape: f32[1,256], index: 10, kind: input, shape index: {}]
  %s11 = inlined_call_operand.hbm [shape: bf16[256,512], index: 11, kind: input, shape index: {}]
  %s12 = inlined_call_operand.vmem [shape: f32[1,512], index: 12, kind: input, shape index: {}]
  %s13 = inlined_call_operand.hbm [shape: bf16[256,256], index: 13, kind: input, shape index: {}]
  %s14 = inlined_call_operand.vmem [shape: f32[1,256], index: 14, kind: input, shape index: {}]
  %s15 = inlined_call_operand.vmem [shape: f32[1,256], index: 15, kind: input, shape index: {}]
  %s16 = inlined_call_operand.vmem [shape: f32[1,256], index: 16, kind: input, shape index: {}]
  %s17 = inlined_call_operand.hbm [shape: bf16[256,512], index: 17, kind: input, shape index: {}]
  %s18 = inlined_call_operand.vmem [shape: f32[1,512], index: 18, kind: input, shape index: {}]
  %s19 = inlined_call_operand.hbm [shape: bf16[512,256], index: 19, kind: input, shape index: {}]
  %s20 = inlined_call_operand.vmem [shape: f32[1,256], index: 20, kind: input, shape index: {}]
  %s21 = inlined_call_operand.vmem [shape: f32[1,256], index: 21, kind: input, shape index: {}]
  %s22 = inlined_call_operand.vmem [shape: f32[1,256], index: 22, kind: input, shape index: {}]
  %s23 = inlined_call_operand.hbm [shape: f32[2,8,256], index: 23, kind: output, shape index: {0}]
  %s24 = inlined_call_operand.hbm [shape: f32[2,8,256], index: 24, kind: output, shape index: {1}]
  %25 = xla_tuple %s23, %s24
  %s26 = sld [smem:[#allocation0]]
  $region185: #{tpu_custom_call.1} parent=0
    _
  %s28 = ssub.s32 1, %s26
  %s29 = scalar_select 0, %s28, %s26
  $region1: #{tpu_custom_call.1} parent=0
    #allocation2 [shape = 'u8[16384]{0}', space=vmem, size = 0x4000, scoped, tag = 'input window, operand 0']
    #allocation3 [shape = 's32[2]{0}', space=sflag, size = 0x8, scoped, tag = 'scoped memory for tpu_custom_call.1']
    #allocation4 [shape = 's32[2]{0}', space=sflag, size = 0x8, scoped, tag = 'scoped memory for tpu_custom_call.1']
    #allocation5 [shape = 'u8[8192]{0}', space=vmem, size = 0x2000, scoped, tag = 'input window, operand 1, single buffered']
    #allocation6 [shape = 's32[1]{0}', space=sflag, size = 0x4, scoped, tag = 'scoped memory for tpu_custom_call.1']
    #allocation7 [shape = 'u8[16384]{0}', space=vmem, size = 0x4000, scoped, tag = 'input window, operand 2']
    #allocation8 [shape = 'u8[393216]{0}', space=vmem, size = 0x60000, scoped, tag = 'input window, operand 3, single buffered']
    #allocation9 [shape = 'u8[131072]{0}', space=vmem, size = 0x20000, scoped, tag = 'input window, operand 5, single buffered']
    #allocation10 [shape = 's32[1]{0}', space=sflag, size = 0x4, scoped, tag = 'scoped memory for tpu_custom_call.1']
    #allocation11 [shape = 'u8[1024]{0}', space=vmem, size = 0x400, scoped, tag = 'input window, operand 6, single buffered']
    #allocation12 [shape = 'u8[1024]{0}', space=vmem, size = 0x400, scoped, tag = 'input window, operand 7, single buffered']
    #allocation13 [shape = 's32[1]{0}', space=sflag, size = 0x4, scoped, tag = 'scoped memory for tpu_custom_call.1']
    #allocation14 [shape = 'u8[1024]{0}', space=vmem, size = 0x400, scoped, tag = 'input window, operand 8, single buffered']
    #allocation15 [shape = 'u8[131072]{0}', space=vmem, size = 0x20000, scoped, tag = 'input window, operand 9, single buffered']
    #allocation16 [shape = 's32[1]{0}', space=sflag, size = 0x4, scoped, tag = 'scoped memory for tpu_custom_call.1']
    #allocation17 [shape = 'u8[262144]{0}', space=vmem, size = 0x40000, scoped, tag = 'input window, operand 11, single buffered']
    #allocation18 [shape = 'u8[131072]{0}', space=vmem, size = 0x20000, scoped, tag = 'input window, operand 13, single buffered']
    #allocation19 [shape = 's32[1]{0}', space=sflag, size = 0x4, scoped, tag = 'scoped memory for tpu_custom_call.1']
    #allocation20 [shape = 'u8[262144]{0}', space=vmem, size = 0x40000, scoped, tag = 'input window, operand 17, single buffered']
    #allocation21 [shape = 'u8[262144]{0}', space=vmem, size = 0x40000, scoped, tag = 'input window, operand 19, single buffered']
    #allocation22 [shape = 's32[1]{0}', space=sflag, size = 0x4, scoped, tag = 'scoped memory for tpu_custom_call.1']
    #allocation23 [shape = 'u8[16384]{0}', space=vmem, size = 0x4000, scoped, tag = 'output window, operand 0']
    #allocation24 [shape = 'u8[16384]{0}', space=vmem, size = 0x4000, scoped, tag = 'output window, operand 1']
    #allocation25 [shape = 's32[2]{0}', space=sflag, size = 0x8, scoped, tag = 'scoped memory for tpu_custom_call.1']
    %30 = vsyncpa [#allocation3], 0
    %s31 = scalar_lea.sflag [#allocation3], 1
    %32 = vsyncpa %s31, 0
    %33 = vsyncpa [#allocation6], 0
    %34 = vsyncpa [#allocation10], 0
    %35 = vsyncpa [#allocation13], 0
    %36 = vsyncpa [#allocation16], 0
    %37 = vsyncpa [#allocation19], 0
    %38 = vsyncpa [#allocation22], 0
    %39 = vsyncpa [#allocation4], 0
    %s40 = scalar_lea.sflag [#allocation4], 1
    %41 = vsyncpa %s40, 0
    %42 = vsyncpa [#allocation25], 0
    %s43 = scalar_lea.sflag [#allocation25], 1
    %44 = vsyncpa %s43, 0
    loop: start=0, step=1, limit=4
    $region2: #{tpu_custom_call.1} parent=1 // loop_pre_header
      _
    $region3: #{tpu_custom_call.1} parent=1 // loop_header
      %s46 = sphi 0, %s50
      %p47 = scmp.ge.s32.totalorder %s46, 4
      %s56 = sphi 0, %s58
      %s59 = sphi 0, %s56
      %s60 = sphi 0, %s59
      %s76 = sphi 0, %s60
      %s80 = sphi 0, %s80
      %s82 = sphi 0, %s80
      %s83 = sphi 0, %s82
      %s97 = sphi 0, %s83
      %s103 = sphi 0, %s105
      %s106 = sphi 0, %s103
      %s107 = sphi 0, %s106
      %s123 = sphi 0, %s107
      %s127 = sphi 0, %s127
      %s129 = sphi 0, %s127
      %s130 = sphi 0, %s129
      %s144 = sphi 0, %s130
      %s148 = sphi 0, %s148
      %s150 = sphi 0, %s148
      %s151 = sphi 0, %s150
      %s165 = sphi 0, %s151
      %s169 = sphi 0, %s169
      %s171 = sphi 0, %s169
      %s172 = sphi 0, %s171
      %s186 = sphi 0, %s172
      %s190 = sphi 0, %s190
      %s192 = sphi 0, %s190
      %s193 = sphi 0, %s192
      %s207 = sphi 0, %s193
      %s211 = sphi 0, %s211
      %s213 = sphi 0, %s211
      %s214 = sphi 0, %s213
      %s228 = sphi 0, %s214
      %s232 = sphi 0, %s232
      %s234 = sphi 0, %s232
      %s235 = sphi 0, %s234
      %s249 = sphi 0, %s235
      %s253 = sphi 0, %s253
      %s255 = sphi 0, %s253
      %s256 = sphi 0, %s255
      %s270 = sphi 0, %s256
      %s274 = sphi 0, %s274
      %s276 = sphi 0, %s274
      %s277 = sphi 0, %s276
      %s291 = sphi 0, %s277
      %s295 = sphi 0, %s295
      %s297 = sphi 0, %s295
      %s298 = sphi 0, %s297
      %s312 = sphi 0, %s298
      %s316 = sphi 0, %s316
      %s318 = sphi 0, %s316
      %s319 = sphi 0, %s318
      %s333 = sphi 0, %s319
      %s337 = sphi 0, %s337
      %s339 = sphi 0, %s337
      %s340 = sphi 0, %s339
      %s354 = sphi 0, %s340
      %s358 = sphi 0, %s358
      %s360 = sphi 0, %s358
      %s361 = sphi 0, %s360
      %s375 = sphi 0, %s361
      %s379 = sphi 0, %s379
      %s381 = sphi 0, %s379
      %s382 = sphi 0, %s381
      %s396 = sphi 0, %s382
      %s400 = sphi 0, %s400
      %s402 = sphi 0, %s400
      %s403 = sphi 0, %s402
      %s417 = sphi 0, %s403
      %s421 = sphi 0, %s421
      %s423 = sphi 0, %s421
      %s424 = sphi 0, %s423
      %s438 = sphi 0, %s424
      %s442 = sphi 0, %s442
      %s444 = sphi 0, %s442
      %s445 = sphi 0, %s444
      %s459 = sphi 0, %s445
      %s463 = sphi 0, %s463
      %s465 = sphi 0, %s463
      %s466 = sphi 0, %s465
      %s480 = sphi 0, %s466
      %s484 = sphi 0, %s484
      %s486 = sphi 0, %s484
      %s487 = sphi 0, %s486
      %s501 = sphi 0, %s487
      %s505 = sphi 0, %s505
      %s507 = sphi 0, %s505
      %s508 = sphi 0, %s507
      %s522 = sphi 0, %s508
      %s526 = sphi 0, %s526
      %s528 = sphi 0, %s526
      %s529 = sphi 0, %s528
      %s543 = sphi 0, %s529
      %s549 = sphi 0, %s551
      %s552 = sphi 0, %s549
      %s553 = sphi 0, %s552
      %s569 = sphi 0, %s553
      %s575 = sphi 0, %s577
      %s578 = sphi 0, %s575
      %s579 = sphi 0, %s578
      %s595 = sphi 0, %s579
    $region4: #{tpu_custom_call.1} parent=1 // loop_header_branch
      %49 = sbr.rel (%p47) target = $region8
    $region5: #{tpu_custom_call.1} parent=1 // loop_body
      %s51 = ssub.s32 %s46, 1
      %s52 = ssub.s32 %s46, 2
      %s53 = sadd.s32 %s46, 1
      %s54 = ssub.s32 %s46, %s53
      %p55 = scmp.eq.s32.totalorder %s54, 0
      %s57 = sadd.s32 %s56, 1
      %s58 = scalar_select %p55, %s56, %s57
      %p61 = pneg %p55
      %p62 = scmp.eq.s32.totalorder %s46, 1
      %p63 = por %p61, %p62
      %p64 = scmp.ne.s32.totalorder %s56, %s59
      %p65 = scmp.eq.s32.totalorder %s46, 0
      %p66 = por %p64, %p65
      %p67 = scmp.ne.s32.totalorder %s56, %s59
      %p68 = scmp.eq.s32.totalorder %s51, 1
      %p69 = por %p67, %p68
      %p70 = scmp.ne.s32.totalorder %s59, %s60
      %p71 = scmp.eq.s32.totalorder %s51, 0
      %p72 = por %p70, %p71
      %p73 = scmp.ne.s32.totalorder %s59, %s60
      %p74 = scmp.eq.s32.totalorder %s52, 1
      %p75 = por %p73, %p74
      %p77 = scmp.ne.s32.totalorder %s60, %s76
      %p78 = scmp.eq.s32.totalorder %s52, 0
      %p79 = por %p77, %p78
      %s81 = sadd.s32 %s80, 1
      %p84 = scmp.eq.s32.totalorder %s46, 1
      %p85 = scmp.ne.s32.totalorder %s80, %s82
      %p86 = scmp.eq.s32.totalorder %s46, 0
      %p87 = por %p85, %p86
      %p88 = scmp.ne.s32.totalorder %s80, %s82
      %p89 = scmp.eq.s32.totalorder %s51, 1
      %p90 = por %p88, %p89
      %p91 = scmp.ne.s32.totalorder %s82, %s83
      %p92 = scmp.eq.s32.totalorder %s51, 0
      %p93 = por %p91, %p92
      %p94 = scmp.ne.s32.totalorder %s82, %s83
      %p95 = scmp.eq.s32.totalorder %s52, 1
      %p96 = por %p94, %p95
      %p98 = scmp.ne.s32.totalorder %s83, %s97
      %p99 = scmp.eq.s32.totalorder %s52, 0
      %p100 = por %p98, %p99
      %s101 = ssub.s32 %s46, %s53
      %p102 = scmp.eq.s32.totalorder %s101, 0
      %s104 = sadd.s32 %s103, 1
      %s105 = scalar_select %p102, %s103, %s104
      %p108 = pneg %p102
      %p109 = scmp.eq.s32.totalorder %s46, 1
      %p110 = por %p108, %p109
      %p111 = scmp.ne.s32.totalorder %s103, %s106
      %p112 = scmp.eq.s32.totalorder %s46, 0
      %p113 = por %p111, %p112
      %p114 = scmp.ne.s32.totalorder %s103, %s106
      %p115 = scmp.eq.s32.totalorder %s51, 1
      %p116 = por %p114, %p115
      %p117 = scmp.ne.s32.totalorder %s106, %s107
      %p118 = scmp.eq.s32.totalorder %s51, 0
      %p119 = por %p117, %p118
      %p120 = scmp.ne.s32.totalorder %s106, %s107
      %p121 = scmp.eq.s32.totalorder %s52, 1
      %p122 = por %p120, %p121
      %p124 = scmp.ne.s32.totalorder %s107, %s123
      %p125 = scmp.eq.s32.totalorder %s52, 0
      %p126 = por %p124, %p125
      %s128 = sadd.s32 %s127, 1
      %p131 = scmp.eq.s32.totalorder %s46, 1
      %p132 = scmp.ne.s32.totalorder %s127, %s129
      %p133 = scmp.eq.s32.totalorder %s46, 0
      %p134 = por %p132, %p133
      %p135 = scmp.ne.s32.totalorder %s127, %s129
      %p136 = scmp.eq.s32.totalorder %s51, 1
      %p137 = por %p135, %p136
      %p138 = scmp.ne.s32.totalorder %s129, %s130
      %p139 = scmp.eq.s32.totalorder %s51, 0
      %p140 = por %p138, %p139
      %p141 = scmp.ne.s32.totalorder %s129, %s130
      %p142 = scmp.eq.s32.totalorder %s52, 1
      %p143 = por %p141, %p142
      %p145 = scmp.ne.s32.totalorder %s130, %s144
      %p146 = scmp.eq.s32.totalorder %s52, 0
      %p147 = por %p145, %p146
      %s149 = sadd.s32 %s148, 1
      %p152 = scmp.eq.s32.totalorder %s46, 1
      %p153 = scmp.ne.s32.totalorder %s148, %s150
      %p154 = scmp.eq.s32.totalorder %s46, 0
      %p155 = por %p153, %p154
      %p156 = scmp.ne.s32.totalorder %s148, %s150
      %p157 = scmp.eq.s32.totalorder %s51, 1
      %p158 = por %p156, %p157
      %p159 = scmp.ne.s32.totalorder %s150, %s151
      %p160 = scmp.eq.s32.totalorder %s51, 0
      %p161 = por %p159, %p160
      %p162 = scmp.ne.s32.totalorder %s150, %s151
      %p163 = scmp.eq.s32.totalorder %s52, 1
      %p164 = por %p162, %p163
      %p166 = scmp.ne.s32.totalorder %s151, %s165
      %p167 = scmp.eq.s32.totalorder %s52, 0
      %p168 = por %p166, %p167
      %s170 = sadd.s32 %s169, 1
      %p173 = scmp.eq.s32.totalorder %s46, 1
      %p174 = scmp.ne.s32.totalorder %s169, %s171
      %p175 = scmp.eq.s32.totalorder %s46, 0
      %p176 = por %p174, %p175
      %p177 = scmp.ne.s32.totalorder %s169, %s171
      %p178 = scmp.eq.s32.totalorder %s51, 1
      %p179 = por %p177, %p178
      %p180 = scmp.ne.s32.totalorder %s171, %s172
      %p181 = scmp.eq.s32.totalorder %s51, 0
      %p182 = por %p180, %p181
      %p183 = scmp.ne.s32.totalorder %s171, %s172
      %p184 = scmp.eq.s32.totalorder %s52, 1
      %p185 = por %p183, %p184
      %p187 = scmp.ne.s32.totalorder %s172, %s186
      %p188 = scmp.eq.s32.totalorder %s52, 0
      %p189 = por %p187, %p188
      %s191 = sadd.s32 %s190, 1
      %p194 = scmp.eq.s32.totalorder %s46, 1
      %p195 = scmp.ne.s32.totalorder %s190, %s192
      %p196 = scmp.eq.s32.totalorder %s46, 0
      %p197 = por %p195, %p196
      %p198 = scmp.ne.s32.totalorder %s190, %s192
      %p199 = scmp.eq.s32.totalorder %s51, 1
      %p200 = por %p198, %p199
      %p201 = scmp.ne.s32.totalorder %s192, %s193
      %p202 = scmp.eq.s32.totalorder %s51, 0
      %p203 = por %p201, %p202
      %p204 = scmp.ne.s32.totalorder %s192, %s193
      %p205 = scmp.eq.s32.totalorder %s52, 1
      %p206 = por %p204, %p205
      %p208 = scmp.ne.s32.totalorder %s193, %s207
      %p209 = scmp.eq.s32.totalorder %s52, 0
      %p210 = por %p208, %p209
      %s212 = sadd.s32 %s211, 1
      %p215 = scmp.eq.s32.totalorder %s46, 1
      %p216 = scmp.ne.s32.totalorder %s211, %s213
      %p217 = scmp.eq.s32.totalorder %s46, 0
      %p218 = por %p216, %p217
      %p219 = scmp.ne.s32.totalorder %s211, %s213
      %p220 = scmp.eq.s32.totalorder %s51, 1
      %p221 = por %p219, %p220
      %p222 = scmp.ne.s32.totalorder %s213, %s214
      %p223 = scmp.eq.s32.totalorder %s51, 0
      %p224 = por %p222, %p223
      %p225 = scmp.ne.s32.totalorder %s213, %s214
      %p226 = scmp.eq.s32.totalorder %s52, 1
      %p227 = por %p225, %p226
      %p229 = scmp.ne.s32.totalorder %s214, %s228
      %p230 = scmp.eq.s32.totalorder %s52, 0
      %p231 = por %p229, %p230
      %s233 = sadd.s32 %s232, 1
      %p236 = scmp.eq.s32.totalorder %s46, 1
      %p237 = scmp.ne.s32.totalorder %s232, %s234
      %p238 = scmp.eq.s32.totalorder %s46, 0
      %p239 = por %p237, %p238
      %p240 = scmp.ne.s32.totalorder %s232, %s234
      %p241 = scmp.eq.s32.totalorder %s51, 1
      %p242 = por %p240, %p241
      %p243 = scmp.ne.s32.totalorder %s234, %s235
      %p244 = scmp.eq.s32.totalorder %s51, 0
      %p245 = por %p243, %p244
      %p246 = scmp.ne.s32.totalorder %s234, %s235
      %p247 = scmp.eq.s32.totalorder %s52, 1
      %p248 = por %p246, %p247
      %p250 = scmp.ne.s32.totalorder %s235, %s249
      %p251 = scmp.eq.s32.totalorder %s52, 0
      %p252 = por %p250, %p251
      %s254 = sadd.s32 %s253, 1
      %p257 = scmp.eq.s32.totalorder %s46, 1
      %p258 = scmp.ne.s32.totalorder %s253, %s255
      %p259 = scmp.eq.s32.totalorder %s46, 0
      %p260 = por %p258, %p259
      %p261 = scmp.ne.s32.totalorder %s253, %s255
      %p262 = scmp.eq.s32.totalorder %s51, 1
      %p263 = por %p261, %p262
      %p264 = scmp.ne.s32.totalorder %s255, %s256
      %p265 = scmp.eq.s32.totalorder %s51, 0
      %p266 = por %p264, %p265
      %p267 = scmp.ne.s32.totalorder %s255, %s256
      %p268 = scmp.eq.s32.totalorder %s52, 1
      %p269 = por %p267, %p268
      %p271 = scmp.ne.s32.totalorder %s256, %s270
      %p272 = scmp.eq.s32.totalorder %s52, 0
      %p273 = por %p271, %p272
      %s275 = sadd.s32 %s274, 1
      %p278 = scmp.eq.s32.totalorder %s46, 1
      %p279 = scmp.ne.s32.totalorder %s274, %s276
      %p280 = scmp.eq.s32.totalorder %s46, 0
      %p281 = por %p279, %p280
      %p282 = scmp.ne.s32.totalorder %s274, %s276
      %p283 = scmp.eq.s32.totalorder %s51, 1
      %p284 = por %p282, %p283
      %p285 = scmp.ne.s32.totalorder %s276, %s277
      %p286 = scmp.eq.s32.totalorder %s51, 0
      %p287 = por %p285, %p286
      %p288 = scmp.ne.s32.totalorder %s276, %s277
      %p289 = scmp.eq.s32.totalorder %s52, 1
      %p290 = por %p288, %p289
      %p292 = scmp.ne.s32.totalorder %s277, %s291
      %p293 = scmp.eq.s32.totalorder %s52, 0
      %p294 = por %p292, %p293
      %s296 = sadd.s32 %s295, 1
      %p299 = scmp.eq.s32.totalorder %s46, 1
      %p300 = scmp.ne.s32.totalorder %s295, %s297
      %p301 = scmp.eq.s32.totalorder %s46, 0
      %p302 = por %p300, %p301
      %p303 = scmp.ne.s32.totalorder %s295, %s297
      %p304 = scmp.eq.s32.totalorder %s51, 1
      %p305 = por %p303, %p304
      %p306 = scmp.ne.s32.totalorder %s297, %s298
      %p307 = scmp.eq.s32.totalorder %s51, 0
      %p308 = por %p306, %p307
      %p309 = scmp.ne.s32.totalorder %s297, %s298
      %p310 = scmp.eq.s32.totalorder %s52, 1
      %p311 = por %p309, %p310
      %p313 = scmp.ne.s32.totalorder %s298, %s312
      %p314 = scmp.eq.s32.totalorder %s52, 0
      %p315 = por %p313, %p314
      %s317 = sadd.s32 %s316, 1
      %p320 = scmp.eq.s32.totalorder %s46, 1
      %p321 = scmp.ne.s32.totalorder %s316, %s318
      %p322 = scmp.eq.s32.totalorder %s46, 0
      %p323 = por %p321, %p322
      %p324 = scmp.ne.s32.totalorder %s316, %s318
      %p325 = scmp.eq.s32.totalorder %s51, 1
      %p326 = por %p324, %p325
      %p327 = scmp.ne.s32.totalorder %s318, %s319
      %p328 = scmp.eq.s32.totalorder %s51, 0
      %p329 = por %p327, %p328
      %p330 = scmp.ne.s32.totalorder %s318, %s319
      %p331 = scmp.eq.s32.totalorder %s52, 1
      %p332 = por %p330, %p331
      %p334 = scmp.ne.s32.totalorder %s319, %s333
      %p335 = scmp.eq.s32.totalorder %s52, 0
      %p336 = por %p334, %p335
      %s338 = sadd.s32 %s337, 1
      %p341 = scmp.eq.s32.totalorder %s46, 1
      %p342 = scmp.ne.s32.totalorder %s337, %s339
      %p343 = scmp.eq.s32.totalorder %s46, 0
      %p344 = por %p342, %p343
      %p345 = scmp.ne.s32.totalorder %s337, %s339
      %p346 = scmp.eq.s32.totalorder %s51, 1
      %p347 = por %p345, %p346
      %p348 = scmp.ne.s32.totalorder %s339, %s340
      %p349 = scmp.eq.s32.totalorder %s51, 0
      %p350 = por %p348, %p349
      %p351 = scmp.ne.s32.totalorder %s339, %s340
      %p352 = scmp.eq.s32.totalorder %s52, 1
      %p353 = por %p351, %p352
      %p355 = scmp.ne.s32.totalorder %s340, %s354
      %p356 = scmp.eq.s32.totalorder %s52, 0
      %p357 = por %p355, %p356
      %s359 = sadd.s32 %s358, 1
      %p362 = scmp.eq.s32.totalorder %s46, 1
      %p363 = scmp.ne.s32.totalorder %s358, %s360
      %p364 = scmp.eq.s32.totalorder %s46, 0
      %p365 = por %p363, %p364
      %p366 = scmp.ne.s32.totalorder %s358, %s360
      %p367 = scmp.eq.s32.totalorder %s51, 1
      %p368 = por %p366, %p367
      %p369 = scmp.ne.s32.totalorder %s360, %s361
      %p370 = scmp.eq.s32.totalorder %s51, 0
      %p371 = por %p369, %p370
      %p372 = scmp.ne.s32.totalorder %s360, %s361
      %p373 = scmp.eq.s32.totalorder %s52, 1
      %p374 = por %p372, %p373
      %p376 = scmp.ne.s32.totalorder %s361, %s375
      %p377 = scmp.eq.s32.totalorder %s52, 0
      %p378 = por %p376, %p377
      %s380 = sadd.s32 %s379, 1
      %p383 = scmp.eq.s32.totalorder %s46, 1
      %p384 = scmp.ne.s32.totalorder %s379, %s381
      %p385 = scmp.eq.s32.totalorder %s46, 0
      %p386 = por %p384, %p385
      %p387 = scmp.ne.s32.totalorder %s379, %s381
      %p388 = scmp.eq.s32.totalorder %s51, 1
      %p389 = por %p387, %p388
      %p390 = scmp.ne.s32.totalorder %s381, %s382
      %p391 = scmp.eq.s32.totalorder %s51, 0
      %p392 = por %p390, %p391
      %p393 = scmp.ne.s32.totalorder %s381, %s382
      %p394 = scmp.eq.s32.totalorder %s52, 1
      %p395 = por %p393, %p394
      %p397 = scmp.ne.s32.totalorder %s382, %s396
      %p398 = scmp.eq.s32.totalorder %s52, 0
      %p399 = por %p397, %p398
      %s401 = sadd.s32 %s400, 1
      %p404 = scmp.eq.s32.totalorder %s46, 1
      %p405 = scmp.ne.s32.totalorder %s400, %s402
      %p406 = scmp.eq.s32.totalorder %s46, 0
      %p407 = por %p405, %p406
      %p408 = scmp.ne.s32.totalorder %s400, %s402
      %p409 = scmp.eq.s32.totalorder %s51, 1
      %p410 = por %p408, %p409
      %p411 = scmp.ne.s32.totalorder %s402, %s403
      %p412 = scmp.eq.s32.totalorder %s51, 0
      %p413 = por %p411, %p412
      %p414 = scmp.ne.s32.totalorder %s402, %s403
      %p415 = scmp.eq.s32.totalorder %s52, 1
      %p416 = por %p414, %p415
      %p418 = scmp.ne.s32.totalorder %s403, %s417
      %p419 = scmp.eq.s32.totalorder %s52, 0
      %p420 = por %p418, %p419
      %s422 = sadd.s32 %s421, 1
      %p425 = scmp.eq.s32.totalorder %s46, 1
      %p426 = scmp.ne.s32.totalorder %s421, %s423
      %p427 = scmp.eq.s32.totalorder %s46, 0
      %p428 = por %p426, %p427
      %p429 = scmp.ne.s32.totalorder %s421, %s423
      %p430 = scmp.eq.s32.totalorder %s51, 1
      %p431 = por %p429, %p430
      %p432 = scmp.ne.s32.totalorder %s423, %s424
      %p433 = scmp.eq.s32.totalorder %s51, 0
      %p434 = por %p432, %p433
      %p435 = scmp.ne.s32.totalorder %s423, %s424
      %p436 = scmp.eq.s32.totalorder %s52, 1
      %p437 = por %p435, %p436
      %p439 = scmp.ne.s32.totalorder %s424, %s438
      %p440 = scmp.eq.s32.totalorder %s52, 0
      %p441 = por %p439, %p440
      %s443 = sadd.s32 %s442, 1
      %p446 = scmp.eq.s32.totalorder %s46, 1
      %p447 = scmp.ne.s32.totalorder %s442, %s444
      %p448 = scmp.eq.s32.totalorder %s46, 0
      %p449 = por %p447, %p448
      %p450 = scmp.ne.s32.totalorder %s442, %s444
      %p451 = scmp.eq.s32.totalorder %s51, 1
      %p452 = por %p450, %p451
      %p453 = scmp.ne.s32.totalorder %s444, %s445
      %p454 = scmp.eq.s32.totalorder %s51, 0
      %p455 = por %p453, %p454
      %p456 = scmp.ne.s32.totalorder %s444, %s445
      %p457 = scmp.eq.s32.totalorder %s52, 1
      %p458 = por %p456, %p457
      %p460 = scmp.ne.s32.totalorder %s445, %s459
      %p461 = scmp.eq.s32.totalorder %s52, 0
      %p462 = por %p460, %p461
      %s464 = sadd.s32 %s463, 1
      %p467 = scmp.eq.s32.totalorder %s46, 1
      %p468 = scmp.ne.s32.totalorder %s463, %s465
      %p469 = scmp.eq.s32.totalorder %s46, 0
      %p470 = por %p468, %p469
      %p471 = scmp.ne.s32.totalorder %s463, %s465
      %p472 = scmp.eq.s32.totalorder %s51, 1
      %p473 = por %p471, %p472
      %p474 = scmp.ne.s32.totalorder %s465, %s466
      %p475 = scmp.eq.s32.totalorder %s51, 0
      %p476 = por %p474, %p475
      %p477 = scmp.ne.s32.totalorder %s465, %s466
      %p478 = scmp.eq.s32.totalorder %s52, 1
      %p479 = por %p477, %p478
      %p481 = scmp.ne.s32.totalorder %s466, %s480
      %p482 = scmp.eq.s32.totalorder %s52, 0
      %p483 = por %p481, %p482
      %s485 = sadd.s32 %s484, 1
      %p488 = scmp.eq.s32.totalorder %s46, 1
      %p489 = scmp.ne.s32.totalorder %s484, %s486
      %p490 = scmp.eq.s32.totalorder %s46, 0
      %p491 = por %p489, %p490
      %p492 = scmp.ne.s32.totalorder %s484, %s486
      %p493 = scmp.eq.s32.totalorder %s51, 1
      %p494 = por %p492, %p493
      %p495 = scmp.ne.s32.totalorder %s486, %s487
      %p496 = scmp.eq.s32.totalorder %s51, 0
      %p497 = por %p495, %p496
      %p498 = scmp.ne.s32.totalorder %s486, %s487
      %p499 = scmp.eq.s32.totalorder %s52, 1
      %p500 = por %p498, %p499
      %p502 = scmp.ne.s32.totalorder %s487, %s501
      %p503 = scmp.eq.s32.totalorder %s52, 0
      %p504 = por %p502, %p503
      %s506 = sadd.s32 %s505, 1
      %p509 = scmp.eq.s32.totalorder %s46, 1
      %p510 = scmp.ne.s32.totalorder %s505, %s507
      %p511 = scmp.eq.s32.totalorder %s46, 0
      %p512 = por %p510, %p511
      %p513 = scmp.ne.s32.totalorder %s505, %s507
      %p514 = scmp.eq.s32.totalorder %s51, 1
      %p515 = por %p513, %p514
      %p516 = scmp.ne.s32.totalorder %s507, %s508
      %p517 = scmp.eq.s32.totalorder %s51, 0
      %p518 = por %p516, %p517
      %p519 = scmp.ne.s32.totalorder %s507, %s508
      %p520 = scmp.eq.s32.totalorder %s52, 1
      %p521 = por %p519, %p520
      %p523 = scmp.ne.s32.totalorder %s508, %s522
      %p524 = scmp.eq.s32.totalorder %s52, 0
      %p525 = por %p523, %p524
      %s527 = sadd.s32 %s526, 1
      %p530 = scmp.eq.s32.totalorder %s46, 1
      %p531 = scmp.ne.s32.totalorder %s526, %s528
      %p532 = scmp.eq.s32.totalorder %s46, 0
      %p533 = por %p531, %p532
      %p534 = scmp.ne.s32.totalorder %s526, %s528
      %p535 = scmp.eq.s32.totalorder %s51, 1
      %p536 = por %p534, %p535
      %p537 = scmp.ne.s32.totalorder %s528, %s529
      %p538 = scmp.eq.s32.totalorder %s51, 0
      %p539 = por %p537, %p538
      %p540 = scmp.ne.s32.totalorder %s528, %s529
      %p541 = scmp.eq.s32.totalorder %s52, 1
      %p542 = por %p540, %p541
      %p544 = scmp.ne.s32.totalorder %s529, %s543
      %p545 = scmp.eq.s32.totalorder %s52, 0
      %p546 = por %p544, %p545
      %s547 = ssub.s32 %s46, %s53
      %p548 = scmp.eq.s32.totalorder %s547, 0
      %s550 = sadd.s32 %s549, 1
      %s551 = scalar_select %p548, %s549, %s550
      %p554 = pneg %p548
      %p555 = scmp.eq.s32.totalorder %s46, 1
      %p556 = por %p554, %p555
      %p557 = scmp.ne.s32.totalorder %s549, %s552
      %p558 = scmp.eq.s32.totalorder %s46, 0
      %p559 = por %p557, %p558
      %p560 = scmp.ne.s32.totalorder %s549, %s552
      %p561 = scmp.eq.s32.totalorder %s51, 1
      %p562 = por %p560, %p561
      %p563 = scmp.ne.s32.totalorder %s552, %s553
      %p564 = scmp.eq.s32.totalorder %s51, 0
      %p565 = por %p563, %p564
      %p566 = scmp.ne.s32.totalorder %s552, %s553
      %p567 = scmp.eq.s32.totalorder %s52, 1
      %p568 = por %p566, %p567
      %p570 = scmp.ne.s32.totalorder %s553, %s569
      %p571 = scmp.eq.s32.totalorder %s52, 0
      %p572 = por %p570, %p571
      %s573 = ssub.s32 %s46, %s53
      %p574 = scmp.eq.s32.totalorder %s573, 0
      %s576 = sadd.s32 %s575, 1
      %s577 = scalar_select %p574, %s575, %s576
      %p580 = pneg %p574
      %p581 = scmp.eq.s32.totalorder %s46, 1
      %p582 = por %p580, %p581
      %p583 = scmp.ne.s32.totalorder %s575, %s578
      %p584 = scmp.eq.s32.totalorder %s46, 0
      %p585 = por %p583, %p584
      %p586 = scmp.ne.s32.totalorder %s575, %s578
      %p587 = scmp.eq.s32.totalorder %s51, 1
      %p588 = por %p586, %p587
      %p589 = scmp.ne.s32.totalorder %s578, %s579
      %p590 = scmp.eq.s32.totalorder %s51, 0
      %p591 = por %p589, %p590
      %p592 = scmp.ne.s32.totalorder %s578, %s579
      %p593 = scmp.eq.s32.totalorder %s52, 1
      %p594 = por %p592, %p593
      %p596 = scmp.ne.s32.totalorder %s579, %s595
      %p597 = scmp.eq.s32.totalorder %s52, 0
      %p598 = por %p596, %p597
      %p599 = scmp.le.s32.totalorder 1, %s46
      %p600 = scmp.lt.s32.totalorder %s46, 3
      %p601 = pnand %p599, %p600
      %p602 = pneg %p601
      // Predicated region
      $region9: #{tpu_custom_call.1} parent=5 // pred_check
        _
      $region10: #{tpu_custom_call.1} parent=5 // pred_check_branch
        %604 = sbr.rel (%p601) target = $region12
      $region11: #{tpu_custom_call.1} parent=5 // pred_region
        %s605 = ssub.s32 %s46, 1
        // Predicated region
        $region13: #{tpu_custom_call.1} parent=11 // pred_check
          %p606 = pneg %p93
        $region14: #{tpu_custom_call.1} parent=11 // pred_check_branch
          %608 = sbr.rel (%p606) target = $region16
        $region15: #{tpu_custom_call.1} parent=11 // pred_region
          %s610 = ssub.s32 256, 256
          %611 = vsyncadd [#allocation6], %s610
          %s613 = sshll.u32 [#allocation5], 4
          %s614 = int_to_ptr.vmem [resolvable:$true] %s613
          %616 = dma.hbm_to_vmem [thread:$0]  %s1, 256, %s614, [#allocation6]
        $region16: #{tpu_custom_call.1} parent=11 // pred_fallthru
          _
        // Predicated region
        $region17: #{tpu_custom_call.1} parent=11 // pred_check
          %p617 = pneg %p140
        $region18: #{tpu_custom_call.1} parent=11 // pred_check_branch
          %619 = sbr.rel (%p617) target = $region20
        $region19: #{tpu_custom_call.1} parent=11 // pred_region
          %s621 = ssub.s32 12288, 12288
          %622 = vsyncadd [#allocation6], %s621
          %s623 = sshll.u32 [#allocation8], 4
          %s624 = int_to_ptr.vmem [resolvable:$true] %s623
          %629 = dma.hbm_to_vmem [thread:$0]  %s3, 12288, %s624, [#allocation6], 384, 384, 24
        $region20: #{tpu_custom_call.1} parent=11 // pred_fallthru
          _
        // Predicated region
        $region21: #{tpu_custom_call.1} parent=11 // pred_check
          %p630 = pneg %p161
        $region22: #{tpu_custom_call.1} parent=11 // pred_check_branch
          %632 = sbr.rel (%p630) target = $region24
        $region23: #{tpu_custom_call.1} parent=11 // pred_region
          _
        $region24: #{tpu_custom_call.1} parent=11 // pred_fallthru
          _
        // Predicated region
        $region25: #{tpu_custom_call.1} parent=11 // pred_check
          %p633 = pneg %p182
        $region26: #{tpu_custom_call.1} parent=11 // pred_check_branch
          %635 = sbr.rel (%p633) target = $region28
        $region27: #{tpu_custom_call.1} parent=11 // pred_region
          %s637 = ssub.s32 4096, 4096
          %638 = vsyncadd [#allocation10], %s637
          %s639 = sshll.u32 [#allocation9], 4
          %s640 = int_to_ptr.vmem [resolvable:$true] %s639
          %645 = dma.hbm_to_vmem [thread:$0]  %s5, 4096, %s640, [#allocation10], 128, 128, 8
        $region28: #{tpu_custom_call.1} parent=11 // pred_fallthru
          _
        // Predicated region
        $region29: #{tpu_custom_call.1} parent=11 // pred_check
          %p646 = pneg %p203
        $region30: #{tpu_custom_call.1} parent=11 // pred_check_branch
          %648 = sbr.rel (%p646) target = $region32
        $region31: #{tpu_custom_call.1} parent=11 // pred_region
          %s650 = ssub.s32 32, 32
          %651 = vsyncadd [#allocation10], %s650
          %s653 = sshll.u32 [#allocation11], 4
          %s654 = int_to_ptr.vmem [resolvable:$true] %s653
          %656 = dma.hbm_to_vmem [thread:$0]  %s6, 32, %s654, [#allocation10]
        $region32: #{tpu_custom_call.1} parent=11 // pred_fallthru
          _
        // Predicated region
        $region33: #{tpu_custom_call.1} parent=11 // pred_check
          %p657 = pneg %p224
        $region34: #{tpu_custom_call.1} parent=11 // pred_check_branch
          %659 = sbr.rel (%p657) target = $region36
        $region35: #{tpu_custom_call.1} parent=11 // pred_region
          %s661 = ssub.s32 32, 32
          %662 = vsyncadd [#allocation13], %s661
          %s664 = sshll.u32 [#allocation12], 4
          %s665 = int_to_ptr.vmem [resolvable:$true] %s664
          %667 = dma.hbm_to_vmem [thread:$0]  %s7, 32, %s665, [#allocation13]
        $region36: #{tpu_custom_call.1} parent=11 // pred_fallthru
          _
        // Predicated region
        $region37: #{tpu_custom_call.1} parent=11 // pred_check
          %p668 = pneg %p245
        $region38: #{tpu_custom_call.1} parent=11 // pred_check_branch
          %670 = sbr.rel (%p668) target = $region40
        $region39: #{tpu_custom_call.1} parent=11 // pred_region
          %s672 = ssub.s32 32, 32
          %673 = vsyncadd [#allocation13], %s672
          %s675 = sshll.u32 [#allocation14], 4
          %s676 = int_to_ptr.vmem [resolvable:$true] %s675
          %678 = dma.hbm_to_vmem [thread:$0]  %s8, 32, %s676, [#allocation13]
        $region40: #{tpu_custom_call.1} parent=11 // pred_fallthru
          _
        // Predicated region
        $region41: #{tpu_custom_call.1} parent=11 // pred_check
          %p679 = pneg %p266
        $region42: #{tpu_custom_call.1} parent=11 // pred_check_branch
          %681 = sbr.rel (%p679) target = $region44
        $region43: #{tpu_custom_call.1} parent=11 // pred_region
          %s683 = ssub.s32 4096, 4096
          %684 = vsyncadd [#allocation16], %s683
          %s685 = sshll.u32 [#allocation15], 4
          %s686 = int_to_ptr.vmem [resolvable:$true] %s685
          %691 = dma.hbm_to_vmem [thread:$0]  %s9, 4096, %s686, [#allocation16], 128, 128, 8
        $region44: #{tpu_custom_call.1} parent=11 // pred_fallthru
          _
        // Predicated region
        $region45: #{tpu_custom_call.1} parent=11 // pred_check
          %p692 = pneg %p287
        $region46: #{tpu_custom_call.1} parent=11 // pred_check_branch
          %694 = sbr.rel (%p692) target = $region48
        $region47: #{tpu_custom_call.1} parent=11 // pred_region
          _
        $region48: #{tpu_custom_call.1} parent=11 // pred_fallthru
          _
        // Predicated region
        $region49: #{tpu_custom_call.1} parent=11 // pred_check
          %p695 = pneg %p308
        $region50: #{tpu_custom_call.1} parent=11 // pred_check_branch
          %697 = sbr.rel (%p695) target = $region52
        $region51: #{tpu_custom_call.1} parent=11 // pred_region
          %s699 = ssub.s32 8192, 8192
          %700 = vsyncadd [#allocation16], %s699
          %s701 = sshll.u32 [#allocation17], 4
          %s702 = int_to_ptr.vmem [resolvable:$true] %s701
          %707 = dma.hbm_to_vmem [thread:$0]  %s11, 8192, %s702, [#allocation16], 256, 256, 16
        $region52: #{tpu_custom_call.1} parent=11 // pred_fallthru
          _
        // Predicated region
        $region53: #{tpu_custom_call.1} parent=11 // pred_check
          %p708 = pneg %p329
        $region54: #{tpu_custom_call.1} parent=11 // pred_check_branch
          %710 = sbr.rel (%p708) target = $region56
        $region55: #{tpu_custom_call.1} parent=11 // pred_region
          _
        $region56: #{tpu_custom_call.1} parent=11 // pred_fallthru
          _
        // Predicated region
        $region57: #{tpu_custom_call.1} parent=11 // pred_check
          %p711 = pneg %p350
        $region58: #{tpu_custom_call.1} parent=11 // pred_check_branch
          %713 = sbr.rel (%p711) target = $region60
        $region59: #{tpu_custom_call.1} parent=11 // pred_region
          %s715 = ssub.s32 4096, 4096
          %716 = vsyncadd [#allocation19], %s715
          %s717 = sshll.u32 [#allocation18], 4
          %s718 = int_to_ptr.vmem [resolvable:$true] %s717
          %723 = dma.hbm_to_vmem [thread:$0]  %s13, 4096, %s718, [#allocation19], 128, 128, 8
        $region60: #{tpu_custom_call.1} parent=11 // pred_fallthru
          _
        // Predicated region
        $region61: #{tpu_custom_call.1} parent=11 // pred_check
          %p724 = pneg %p371
        $region62: #{tpu_custom_call.1} parent=11 // pred_check_branch
          %726 = sbr.rel (%p724) target = $region64
        $region63: #{tpu_custom_call.1} parent=11 // pred_region
          _
        $region64: #{tpu_custom_call.1} parent=11 // pred_fallthru
          _
        // Predicated region
        $region65: #{tpu_custom_call.1} parent=11 // pred_check
          %p727 = pneg %p392
        $region66: #{tpu_custom_call.1} parent=11 // pred_check_branch
          %729 = sbr.rel (%p727) target = $region68
        $region67: #{tpu_custom_call.1} parent=11 // pred_region
          _
        $region68: #{tpu_custom_call.1} parent=11 // pred_fallthru
          _
        // Predicated region
        $region69: #{tpu_custom_call.1} parent=11 // pred_check
          %p730 = pneg %p413
        $region70: #{tpu_custom_call.1} parent=11 // pred_check_branch
          %732 = sbr.rel (%p730) target = $region72
        $region71: #{tpu_custom_call.1} parent=11 // pred_region
          _
        $region72: #{tpu_custom_call.1} parent=11 // pred_fallthru
          _
        // Predicated region
        $region73: #{tpu_custom_call.1} parent=11 // pred_check
          %p733 = pneg %p434
        $region74: #{tpu_custom_call.1} parent=11 // pred_check_branch
          %735 = sbr.rel (%p733) target = $region76
        $region75: #{tpu_custom_call.1} parent=11 // pred_region
          %s737 = ssub.s32 8192, 8192
          %738 = vsyncadd [#allocation19], %s737
          %s739 = sshll.u32 [#allocation20], 4
          %s740 = int_to_ptr.vmem [resolvable:$true] %s739
          %745 = dma.hbm_to_vmem [thread:$0]  %s17, 8192, %s740, [#allocation19], 256, 256, 16
        $region76: #{tpu_custom_call.1} parent=11 // pred_fallthru
          _
        // Predicated region
        $region77: #{tpu_custom_call.1} parent=11 // pred_check
          %p746 = pneg %p455
        $region78: #{tpu_custom_call.1} parent=11 // pred_check_branch
          %748 = sbr.rel (%p746) target = $region80
        $region79: #{tpu_custom_call.1} parent=11 // pred_region
          _
        $region80: #{tpu_custom_call.1} parent=11 // pred_fallthru
          _
        // Predicated region
        $region81: #{tpu_custom_call.1} parent=11 // pred_check
          %p749 = pneg %p476
        $region82: #{tpu_custom_call.1} parent=11 // pred_check_branch
          %751 = sbr.rel (%p749) target = $region84
        $region83: #{tpu_custom_call.1} parent=11 // pred_region
          %s753 = ssub.s32 8192, 8192
          %754 = vsyncadd [#allocation22], %s753
          %s755 = sshll.u32 [#allocation21], 4
          %s756 = int_to_ptr.vmem [resolvable:$true] %s755
          %761 = dma.hbm_to_vmem [thread:$0]  %s19, 8192, %s756, [#allocation22], 128, 128, 8
        $region84: #{tpu_custom_call.1} parent=11 // pred_fallthru
          _
        // Predicated region
        $region85: #{tpu_custom_call.1} parent=11 // pred_check
          %p762 = pneg %p497
        $region86: #{tpu_custom_call.1} parent=11 // pred_check_branch
          %764 = sbr.rel (%p762) target = $region88
        $region87: #{tpu_custom_call.1} parent=11 // pred_region
          _
        $region88: #{tpu_custom_call.1} parent=11 // pred_fallthru
          _
        // Predicated region
        $region89: #{tpu_custom_call.1} parent=11 // pred_check
          %p765 = pneg %p518
        $region90: #{tpu_custom_call.1} parent=11 // pred_check_branch
          %767 = sbr.rel (%p765) target = $region92
        $region91: #{tpu_custom_call.1} parent=11 // pred_region
          _
        $region92: #{tpu_custom_call.1} parent=11 // pred_fallthru
          _
        // Predicated region
        $region93: #{tpu_custom_call.1} parent=11 // pred_check
          %p768 = pneg %p539
        $region94: #{tpu_custom_call.1} parent=11 // pred_check_branch
          %770 = sbr.rel (%p768) target = $region96
        $region95: #{tpu_custom_call.1} parent=11 // pred_region
          _
        $region96: #{tpu_custom_call.1} parent=11 // pred_fallthru
          _
      $region12: #{tpu_custom_call.1} parent=5 // pred_fallthru
        _
      %p771 = scmp.lt.s32.totalorder %s46, 2
      // Predicated region
      $region97: #{tpu_custom_call.1} parent=5 // pred_check
        %p772 = pneg %p771
      $region98: #{tpu_custom_call.1} parent=5 // pred_check_branch
        %774 = sbr.rel (%p772) target = $region100
      $region99: #{tpu_custom_call.1} parent=5 // pred_region
        // Predicated region
        $region101: #{tpu_custom_call.1} parent=99 // pred_check
          %p775 = pneg %p66
        $region102: #{tpu_custom_call.1} parent=99 // pred_check_branch
          %777 = sbr.rel (%p775) target = $region104
        $region103: #{tpu_custom_call.1} parent=99 // pred_region
          %s778 = sand.u32 %s46, 1
          %s779 = scalar_lea.sflag [#allocation3], %s778
          %s780 = sand.u32 %s56, 1
          %s781 = smul.addr %s780, 16
          %s782 = scalar_lea.vmem [#allocation2], %s781
          %s784 = ssub.s32 256, 256
          %785 = vsyncadd %s779, %s784
          %s786 = smul.addr %s46, 2
          %s787 = smul.addr %s786, 128
          %s788 = scalar_lea.hbm %s0, %s787
          %s790 = sshll.u32 %s782, 4
          %s791 = int_to_ptr.vmem [resolvable:$true] %s790
          %793 = dma.hbm_to_vmem [thread:$0]  %s788, 256, %s791, %s779
        $region104: #{tpu_custom_call.1} parent=99 // pred_fallthru
          _
        // Predicated region
        $region105: #{tpu_custom_call.1} parent=99 // pred_check
          %p794 = pneg %p113
        $region106: #{tpu_custom_call.1} parent=99 // pred_check_branch
          %796 = sbr.rel (%p794) target = $region108
        $region107: #{tpu_custom_call.1} parent=99 // pred_region
          %s797 = sand.u32 %s46, 1
          %s798 = scalar_lea.sflag [#allocation3], %s797
          %s799 = sand.u32 %s103, 1
          %s800 = smul.addr %s799, 16
          %s801 = scalar_lea.vmem [#allocation7], %s800
          %s803 = ssub.s32 256, 256
          %804 = vsyncadd %s798, %s803
          %s805 = smul.addr %s46, 2
          %s806 = smul.addr %s805, 128
          %s807 = scalar_lea.hbm %s2, %s806
          %s809 = sshll.u32 %s801, 4
          %s810 = int_to_ptr.vmem [resolvable:$true] %s809
          %812 = dma.hbm_to_vmem [thread:$0]  %s807, 256, %s810, %s798
        $region108: #{tpu_custom_call.1} parent=99 // pred_fallthru
          _
      $region100: #{tpu_custom_call.1} parent=5 // pred_fallthru
        _
      %p813 = scmp.le.s32.totalorder 1, %s46
      %p814 = scmp.lt.s32.totalorder %s46, 3
      %p815 = pnand %p813, %p814
      %p816 = pneg %p815
      // Predicated region
      $region109: #{tpu_custom_call.1} parent=5 // pred_check
        _
      $region110: #{tpu_custom_call.1} parent=5 // pred_check_branch
        %818 = sbr.rel (%p815) target = $region112
      $region111: #{tpu_custom_call.1} parent=5 // pred_region
        %s819 = ssub.s32 %s46, 1
        %s820 = sand.u32 %s51, 1
        %s821 = scalar_lea.sflag [#allocation3], %s820
        %s822 = sand.u32 %s59, 1
        %s823 = smul.addr %s822, 16
        %s824 = scalar_lea.vmem [#allocation2], %s823
        // Predicated region
        $region113: #{tpu_custom_call.1} parent=111 // pred_check
          %p825 = pneg %p72
        $region114: #{tpu_custom_call.1} parent=111 // pred_check_branch
          %827 = sbr.rel (%p825) target = $region116
        $region115: #{tpu_custom_call.1} parent=111 // pred_region
          %828 = dma.done %s821, 256
        $region116: #{tpu_custom_call.1} parent=111 // pred_fallthru
          _
        // Predicated region
        $region117: #{tpu_custom_call.1} parent=111 // pred_check
          %p829 = pneg %p93
        $region118: #{tpu_custom_call.1} parent=111 // pred_check_branch
          %831 = sbr.rel (%p829) target = $region120
        $region119: #{tpu_custom_call.1} parent=111 // pred_region
          %832 = dma.done [#allocation6], 256
        $region120: #{tpu_custom_call.1} parent=111 // pred_fallthru
          _
        %s833 = sand.u32 %s51, 1
        %s834 = scalar_lea.sflag [#allocation3], %s833
        %s835 = sand.u32 %s106, 1
        %s836 = smul.addr %s835, 16
        %s837 = scalar_lea.vmem [#allocation7], %s836
        // Predicated region
        $region121: #{tpu_custom_call.1} parent=111 // pred_check
          %p838 = pneg %p119
        $region122: #{tpu_custom_call.1} parent=111 // pred_check_branch
          %840 = sbr.rel (%p838) target = $region124
        $region123: #{tpu_custom_call.1} parent=111 // pred_region
          %841 = dma.done %s834, 256
        $region124: #{tpu_custom_call.1} parent=111 // pred_fallthru
          _
        // Predicated region
        $region125: #{tpu_custom_call.1} parent=111 // pred_check
          %p842 = pneg %p140
        $region126: #{tpu_custom_call.1} parent=111 // pred_check_branch
          %844 = sbr.rel (%p842) target = $region128
        $region127: #{tpu_custom_call.1} parent=111 // pred_region
          %845 = dma.done [#allocation6], 12288
        $region128: #{tpu_custom_call.1} parent=111 // pred_fallthru
          _
        // Predicated region
        $region129: #{tpu_custom_call.1} parent=111 // pred_check
          %p846 = pneg %p182
        $region130: #{tpu_custom_call.1} parent=111 // pred_check_branch
          %848 = sbr.rel (%p846) target = $region132
        $region131: #{tpu_custom_call.1} parent=111 // pred_region
          %849 = dma.done [#allocation10], 4096
        $region132: #{tpu_custom_call.1} parent=111 // pred_fallthru
          _
        // Predicated region
        $region133: #{tpu_custom_call.1} parent=111 // pred_check
          %p850 = pneg %p203
        $region134: #{tpu_custom_call.1} parent=111 // pred_check_branch
          %852 = sbr.rel (%p850) target = $region136
        $region135: #{tpu_custom_call.1} parent=111 // pred_region
          %853 = dma.done [#allocation10], 32
        $region136: #{tpu_custom_call.1} parent=111 // pred_fallthru
          _
        // Predicated region
        $region137: #{tpu_custom_call.1} parent=111 // pred_check
          %p854 = pneg %p224
        $region138: #{tpu_custom_call.1} parent=111 // pred_check_branch
          %856 = sbr.rel (%p854) target = $region140
        $region139: #{tpu_custom_call.1} parent=111 // pred_region
          %857 = dma.done [#allocation13], 32
        $region140: #{tpu_custom_call.1} parent=111 // pred_fallthru
          _
        // Predicated region
        $region141: #{tpu_custom_call.1} parent=111 // pred_check
          %p858 = pneg %p245
        $region142: #{tpu_custom_call.1} parent=111 // pred_check_branch
          %860 = sbr.rel (%p858) target = $region144
        $region143: #{tpu_custom_call.1} parent=111 // pred_region
          %861 = dma.done [#allocation13], 32
        $region144: #{tpu_custom_call.1} parent=111 // pred_fallthru
          _
        // Predicated region
        $region145: #{tpu_custom_call.1} parent=111 // pred_check
          %p862 = pneg %p266
        $region146: #{tpu_custom_call.1} parent=111 // pred_check_branch
          %864 = sbr.rel (%p862) target = $region148
        $region147: #{tpu_custom_call.1} parent=111 // pred_region
          %865 = dma.done [#allocation16], 4096
        $region148: #{tpu_custom_call.1} parent=111 // pred_fallthru
          _
        // Predicated region
        $region149: #{tpu_custom_call.1} parent=111 // pred_check
          %p866 = pneg %p308
        $region150: #{tpu_custom_call.1} parent=111 // pred_check_branch
          %868 = sbr.rel (%p866) target = $region152
        $region151: #{tpu_custom_call.1} parent=111 // pred_region
          %869 = dma.done [#allocation16], 8192
        $region152: #{tpu_custom_call.1} parent=111 // pred_fallthru
          _
        // Predicated region
        $region153: #{tpu_custom_call.1} parent=111 // pred_check
          %p870 = pneg %p350
        $region154: #{tpu_custom_call.1} parent=111 // pred_check_branch
          %872 = sbr.rel (%p870) target = $region156
        $region155: #{tpu_custom_call.1} parent=111 // pred_region
          %873 = dma.done [#allocation19], 4096
        $region156: #{tpu_custom_call.1} parent=111 // pred_fallthru
          _
        // Predicated region
        $region157: #{tpu_custom_call.1} parent=111 // pred_check
          %p874 = pneg %p434
        $region158: #{tpu_custom_call.1} parent=111 // pred_check_branch
          %876 = sbr.rel (%p874) target = $region160
        $region159: #{tpu_custom_call.1} parent=111 // pred_region
          %877 = dma.done [#allocation19], 8192
        $region160: #{tpu_custom_call.1} parent=111 // pred_fallthru
          _
        // Predicated region
        $region161: #{tpu_custom_call.1} parent=111 // pred_check
          %p878 = pneg %p476
        $region162: #{tpu_custom_call.1} parent=111 // pred_check_branch
          %880 = sbr.rel (%p878) target = $region164
        $region163: #{tpu_custom_call.1} parent=111 // pred_region
          %881 = dma.done [#allocation22], 8192
        $region164: #{tpu_custom_call.1} parent=111 // pred_fallthru
          _
        %s882 = sand.u32 %s51, 1
        %s883 = scalar_lea.sflag [#allocation3], %s882
        %s884 = sand.u32 %s59, 1
        %s885 = smul.addr %s884, 16
        %s886 = scalar_lea.vmem [#allocation2], %s885
        %p887 = pneg %p72
        %p888 = pneg %p69
        %p889 = pneg %p93
        %p890 = pneg %p90
        %s891 = sand.u32 %s51, 1
        %s892 = scalar_lea.sflag [#allocation3], %s891
        %s893 = sand.u32 %s106, 1
        %s894 = smul.addr %s893, 16
        %s895 = scalar_lea.vmem [#allocation7], %s894
        %p896 = pneg %p119
        %p897 = pneg %p116
        %p898 = pneg %p140
        %p899 = pneg %p137
        %p900 = pneg %p161
        %p901 = pneg %p158
        %p902 = pneg %p182
        %p903 = pneg %p179
        %p904 = pneg %p203
        %p905 = pneg %p200
        %p906 = pneg %p224
        %p907 = pneg %p221
        %p908 = pneg %p245
        %p909 = pneg %p242
        %p910 = pneg %p266
        %p911 = pneg %p263
        %p912 = pneg %p287
        %p913 = pneg %p284
        %p914 = pneg %p308
        %p915 = pneg %p305
        %p916 = pneg %p329
        %p917 = pneg %p326
        %p918 = pneg %p350
        %p919 = pneg %p347
        %p920 = pneg %p371
        %p921 = pneg %p368
        %p922 = pneg %p392
        %p923 = pneg %p389
        %p924 = pneg %p413
        %p925 = pneg %p410
        %p926 = pneg %p434
        %p927 = pneg %p431
        %p928 = pneg %p455
        %p929 = pneg %p452
        %p930 = pneg %p476
        %p931 = pneg %p473
        %p932 = pneg %p497
        %p933 = pneg %p494
        %p934 = pneg %p518
        %p935 = pneg %p515
        %p936 = pneg %p539
        %p937 = pneg %p536
        %p938 = pneg %p565
        %p939 = pneg %p562
        %s940 = sand.u32 %s552, 1
        %s941 = scalar_lea.sflag [#allocation4], %s940
        %s942 = sand.u32 %s552, 1
        %s943 = smul.addr %s942, 16
        %s944 = scalar_lea.vmem [#allocation23], %s943
        %p945 = pneg %p591
        %p946 = pneg %p588
        %s947 = sand.u32 %s578, 1
        %s948 = scalar_lea.sflag [#allocation25], %s947
        %s949 = sand.u32 %s578, 1
        %s950 = smul.addr %s949, 16
        %s951 = scalar_lea.vmem [#allocation24], %s950
        %v953 = vld [vmem:[%s824] sm:$0xff]
        %v954 = vld [vmem:[%s824 + $0x8] sm:$0xff]
        %v955 = vmul.f32 %v953, 16.0
        %v956 = vmul.f32 %v954, 16.0
        %v957 = vld [vmem:[#allocation5] sm:$0xff]
        %v958 = vld [vmem:[#allocation5 + $0x8] sm:$0xff]
        %v959 = vadd.f32 %v955, %v957
        %v960 = vadd.f32 %v956, %v958
        %961 = vst [vmem:[%s951] sm:$0xff] %v959
        %962 = vst [vmem:[%s951 + $0x8] sm:$0xff] %v960
        %v963 = vpack.c.bf16 %v959, %v959
        %v964 = vpack.c.bf16 %v960, %v960
        %v965 = vld [vmem:[#allocation8] sm:$0xff]
        %v966 = vld [vmem:[#allocation8 + $0x8] sm:$0xff]
        %v967 = vld [vmem:[#allocation8 + $0x10] sm:$0xff]
        %v968 = vld [vmem:[#allocation8 + $0x18] sm:$0xff]
        %v969 = vld [vmem:[#allocation8 + $0x20] sm:$0xff]
        %v970 = vld [vmem:[#allocation8 + $0x28] sm:$0xff]
        %v971 = vld [vmem:[#allocation8 + $0x30] sm:$0xff]
        %v972 = vld [vmem:[#allocation8 + $0x38] sm:$0xff]
        %v973 = vld [vmem:[#allocation8 + $0x40] sm:$0xff]
        %v974 = vld [vmem:[#allocation8 + $0x48] sm:$0xff]
        %v975 = vld [vmem:[#allocation8 + $0x50] sm:$0xff]
        %v976 = vld [vmem:[#allocation8 + $0x58] sm:$0xff]
        %v977 = vld [vmem:[#allocation8 + $0x60] sm:$0xff]
        %v978 = vld [vmem:[#allocation8 + $0x68] sm:$0xff]
        %v979 = vld [vmem:[#allocation8 + $0x70] sm:$0xff]
        %v980 = vld [vmem:[#allocation8 + $0x78] sm:$0xff]
        %v981 = vld [vmem:[#allocation8 + $0x80] sm:$0xff]
        %v982 = vld [vmem:[#allocation8 + $0x88] sm:$0xff]
        %v983 = vld [vmem:[#allocation8 + $0x90] sm:$0xff]
        %v984 = vld [vmem:[#allocation8 + $0x98] sm:$0xff]
        %v985 = vld [vmem:[#allocation8 + $0xa0] sm:$0xff]
        %v986 = vld [vmem:[#allocation8 + $0xa8] sm:$0xff]
        %v987 = vld [vmem:[#allocation8 + $0xb0] sm:$0xff]
        %v988 = vld [vmem:[#allocation8 + $0xb8] sm:$0xff]
        %v989 = vld [vmem:[#allocation8 + $0xc0] sm:$0xff]
        %v990 = vld [vmem:[#allocation8 + $0xc8] sm:$0xff]
        %v991 = vld [vmem:[#allocation8 + $0xd0] sm:$0xff]
        %v992 = vld [vmem:[#allocation8 + $0xd8] sm:$0xff]
        %v993 = vld [vmem:[#allocation8 + $0xe0] sm:$0xff]
        %v994 = vld [vmem:[#allocation8 + $0xe8] sm:$0xff]
        %v995 = vld [vmem:[#allocation8 + $0xf0] sm:$0xff]
        %v996 = vld [vmem:[#allocation8 + $0xf8] sm:$0xff]
        %v997 = vld [vmem:[#allocation8 + $0x100] sm:$0xff]
        %v998 = vld [vmem:[#allocation8 + $0x108] sm:$0xff]
        %v999 = vld [vmem:[#allocation8 + $0x110] sm:$0xff]
        %v1000 = vld [vmem:[#allocation8 + $0x118] sm:$0xff]
        %v1001 = vld [vmem:[#allocation8 + $0x120] sm:$0xff]
        %v1002 = vld [vmem:[#allocation8 + $0x128] sm:$0xff]
        %v1003 = vld [vmem:[#allocation8 + $0x130] sm:$0xff]
        %v1004 = vld [vmem:[#allocation8 + $0x138] sm:$0xff]
        %v1005 = vld [vmem:[#allocation8 + $0x140] sm:$0xff]
        %v1006 = vld [vmem:[#allocation8 + $0x148] sm:$0xff]
        %v1007 = vld [vmem:[#allocation8 + $0x150] sm:$0xff]
        %v1008 = vld [vmem:[#allocation8 + $0x158] sm:$0xff]
        %v1009 = vld [vmem:[#allocation8 + $0x160] sm:$0xff]
        %v1010 = vld [vmem:[#allocation8 + $0x168] sm:$0xff]
        %v1011 = vld [vmem:[#allocation8 + $0x170] sm:$0xff]
        %v1012 = vld [vmem:[#allocation8 + $0x178] sm:$0xff]
        %v1013 = vld [vmem:[#allocation8 + $0x180] sm:$0xff]
        %v1014 = vld [vmem:[#allocation8 + $0x188] sm:$0xff]
        %v1015 = vld [vmem:[#allocation8 + $0x190] sm:$0xff]
        %v1016 = vld [vmem:[#allocation8 + $0x198] sm:$0xff]
        %v1017 = vld [vmem:[#allocation8 + $0x1a0] sm:$0xff]
        %v1018 = vld [vmem:[#allocation8 + $0x1a8] sm:$0xff]
        %v1019 = vld [vmem:[#allocation8 + $0x1b0] sm:$0xff]
        %v1020 = vld [vmem:[#allocation8 + $0x1b8] sm:$0xff]
        %v1021 = vld [vmem:[#allocation8 + $0x1c0] sm:$0xff]
        %v1022 = vld [vmem:[#allocation8 + $0x1c8] sm:$0xff]
        %v1023 = vld [vmem:[#allocation8 + $0x1d0] sm:$0xff]
        %v1024 = vld [vmem:[#allocation8 + $0x1d8] sm:$0xff]
        %v1025 = vld [vmem:[#allocation8 + $0x1e0] sm:$0xff]
        %v1026 = vld [vmem:[#allocation8 + $0x1e8] sm:$0xff]
        %v1027 = vld [vmem:[#allocation8 + $0x1f0] sm:$0xff]
        %v1028 = vld [vmem:[#allocation8 + $0x1f8] sm:$0xff]
        %v1029 = vld [vmem:[#allocation8 + $0x200] sm:$0xff]
        %v1030 = vld [vmem:[#allocation8 + $0x208] sm:$0xff]
        %v1031 = vld [vmem:[#allocation8 + $0x210] sm:$0xff]
        %v1032 = vld [vmem:[#allocation8 + $0x218] sm:$0xff]
        %v1033 = vld [vmem:[#allocation8 + $0x220] sm:$0xff]
        %v1034 = vld [vmem:[#allocation8 + $0x228] sm:$0xff]
        %v1035 = vld [vmem:[#allocation8 + $0x230] sm:$0xff]
        %v1036 = vld [vmem:[#allocation8 + $0x238] sm:$0xff]
        %v1037 = vld [vmem:[#allocation8 + $0x240] sm:$0xff]
        %v1038 = vld [vmem:[#allocation8 + $0x248] sm:$0xff]
        %v1039 = vld [vmem:[#allocation8 + $0x250] sm:$0xff]
        %v1040 = vld [vmem:[#allocation8 + $0x258] sm:$0xff]
        %v1041 = vld [vmem:[#allocation8 + $0x260] sm:$0xff]
        %v1042 = vld [vmem:[#allocation8 + $0x268] sm:$0xff]
        %v1043 = vld [vmem:[#allocation8 + $0x270] sm:$0xff]
        %v1044 = vld [vmem:[#allocation8 + $0x278] sm:$0xff]
        %v1045 = vld [vmem:[#allocation8 + $0x280] sm:$0xff]
        %v1046 = vld [vmem:[#allocation8 + $0x288] sm:$0xff]
        %v1047 = vld [vmem:[#allocation8 + $0x290] sm:$0xff]
        %v1048 = vld [vmem:[#allocation8 + $0x298] sm:$0xff]
        %v1049 = vld [vmem:[#allocation8 + $0x2a0] sm:$0xff]
        %v1050 = vld [vmem:[#allocation8 + $0x2a8] sm:$0xff]
        %v1051 = vld [vmem:[#allocation8 + $0x2b0] sm:$0xff]
        %v1052 = vld [vmem:[#allocation8 + $0x2b8] sm:$0xff]
        %v1053 = vld [vmem:[#allocation8 + $0x2c0] sm:$0xff]
        %v1054 = vld [vmem:[#allocation8 + $0x2c8] sm:$0xff]
        %v1055 = vld [vmem:[#allocation8 + $0x2d0] sm:$0xff]
        %v1056 = vld [vmem:[#allocation8 + $0x2d8] sm:$0xff]
        %v1057 = vld [vmem:[#allocation8 + $0x2e0] sm:$0xff]
        %v1058 = vld [vmem:[#allocation8 + $0x2e8] sm:$0xff]
        %v1059 = vld [vmem:[#allocation8 + $0x2f0] sm:$0xff]
        %v1060 = vld [vmem:[#allocation8 + $0x2f8] sm:$0xff]
        %v1061 = vld [vmem:[%s4] sm:$0x3f]
        %v1063 = vlaneseq
        %v1064 = vshrl.u32 %v1063, 7
        %v1065 = vsub.s32 0, %v1064
        %v1066 = vrot.slane %v1061, %v1065
        %v1067 = vlaneseq
        %v1068 = vshrl.u32 %v1067, 7
        %v1069 = vsub.s32 1, %v1068
        %v1070 = vrot.slane %v1061, %v1069
        %v1071 = vlaneseq
        %v1072 = vshrl.u32 %v1071, 7
        %v1073 = vsub.s32 2, %v1072
        %v1074 = vrot.slane %v1061, %v1073
        %v1075 = vlaneseq
        %v1076 = vshrl.u32 %v1075, 7
        %v1077 = vsub.s32 3, %v1076
        %v1078 = vrot.slane %v1061, %v1077
        %v1079 = vlaneseq
        %v1080 = vshrl.u32 %v1079, 7
        %v1081 = vsub.s32 4, %v1080
        %v1082 = vrot.slane %v1061, %v1081
        %v1083 = vlaneseq
        %v1084 = vshrl.u32 %v1083, 7
        %v1085 = vsub.s32 5, %v1084
        %v1086 = vrot.slane %v1061, %v1085
        %v1189 = vunpack.c.l.b16 %v965
        %v1190 = vunpack.c.h.b16 %v965
        %v1191 = vunpack.c.l.b16 %v966
        %v1192 = vunpack.c.h.b16 %v966
        %v1193 = vunpack.c.l.b16 %v967
        %v1194 = vunpack.c.h.b16 %v967
        %v1195 = vunpack.c.l.b16 %v968
        %v1196 = vunpack.c.h.b16 %v968
        %v1197 = vunpack.c.l.b16 %v969
        %v1198 = vunpack.c.h.b16 %v969
        %v1199 = vunpack.c.l.b16 %v970
        %v1200 = vunpack.c.h.b16 %v970
        %v1201 = vunpack.c.l.b16 %v971
        %v1202 = vunpack.c.h.b16 %v971
        %v1203 = vunpack.c.l.b16 %v972
        %v1204 = vunpack.c.h.b16 %v972
        %v1205 = vunpack.c.l.b16 %v973
        %v1206 = vunpack.c.h.b16 %v973
        %v1207 = vunpack.c.l.b16 %v974
        %v1208 = vunpack.c.h.b16 %v974
        %v1209 = vunpack.c.l.b16 %v975
        %v1210 = vunpack.c.h.b16 %v975
        %v1211 = vunpack.c.l.b16 %v976
        %v1212 = vunpack.c.h.b16 %v976
        %v1213 = vunpack.c.l.b16 %v977
        %v1214 = vunpack.c.h.b16 %v977
        %v1215 = vunpack.c.l.b16 %v978
        %v1216 = vunpack.c.h.b16 %v978
        %v1217 = vunpack.c.l.b16 %v979
        %v1218 = vunpack.c.h.b16 %v979
        %v1219 = vunpack.c.l.b16 %v980
        %v1220 = vunpack.c.h.b16 %v980
        %v1221 = vunpack.c.l.b16 %v981
        %v1222 = vunpack.c.h.b16 %v981
        %v1223 = vunpack.c.l.b16 %v982
        %v1224 = vunpack.c.h.b16 %v982
        %v1225 = vunpack.c.l.b16 %v983
        %v1226 = vunpack.c.h.b16 %v983
        %v1227 = vunpack.c.l.b16 %v984
        %v1228 = vunpack.c.h.b16 %v984
        %v1229 = vunpack.c.l.b16 %v985
        %v1230 = vunpack.c.h.b16 %v985
        %v1231 = vunpack.c.l.b16 %v986
        %v1232 = vunpack.c.h.b16 %v986
        %v1233 = vunpack.c.l.b16 %v987
        %v1234 = vunpack.c.h.b16 %v987
        %v1235 = vunpack.c.l.b16 %v988
        %v1236 = vunpack.c.h.b16 %v988
        %v1237 = vunpack.c.l.b16 %v989
        %v1238 = vunpack.c.h.b16 %v989
        %v1239 = vunpack.c.l.b16 %v990
        %v1240 = vunpack.c.h.b16 %v990
        %v1241 = vunpack.c.l.b16 %v991
        %v1242 = vunpack.c.h.b16 %v991
        %v1243 = vunpack.c.l.b16 %v992
        %v1244 = vunpack.c.h.b16 %v992
        %v1245 = vunpack.c.l.b16 %v993
        %v1246 = vunpack.c.h.b16 %v993
        %v1247 = vunpack.c.l.b16 %v994
        %v1248 = vunpack.c.h.b16 %v994
        %v1249 = vunpack.c.l.b16 %v995
        %v1250 = vunpack.c.h.b16 %v995
        %v1251 = vunpack.c.l.b16 %v996
        %v1252 = vunpack.c.h.b16 %v996
        %v1253 = vunpack.c.l.b16 %v997
        %v1254 = vunpack.c.h.b16 %v997
        %v1255 = vunpack.c.l.b16 %v998
        %v1256 = vunpack.c.h.b16 %v998
        %v1257 = vunpack.c.l.b16 %v999
        %v1258 = vunpack.c.h.b16 %v999
        %v1259 = vunpack.c.l.b16 %v1000
        %v1260 = vunpack.c.h.b16 %v1000
        %v1261 = vunpack.c.l.b16 %v1001
        %v1262 = vunpack.c.h.b16 %v1001
        %v1263 = vunpack.c.l.b16 %v1002
        %v1264 = vunpack.c.h.b16 %v1002
        %v1265 = vunpack.c.l.b16 %v1003
        %v1266 = vunpack.c.h.b16 %v1003
        %v1267 = vunpack.c.l.b16 %v1004
        %v1268 = vunpack.c.h.b16 %v1004
        %v1269 = vunpack.c.l.b16 %v1005
        %v1270 = vunpack.c.h.b16 %v1005
        %v1271 = vunpack.c.l.b16 %v1006
        %v1272 = vunpack.c.h.b16 %v1006
        %v1273 = vunpack.c.l.b16 %v1007
        %v1274 = vunpack.c.h.b16 %v1007
        %v1275 = vunpack.c.l.b16 %v1008
        %v1276 = vunpack.c.h.b16 %v1008
        %v1277 = vunpack.c.l.b16 %v1009
        %v1278 = vunpack.c.h.b16 %v1009
        %v1279 = vunpack.c.l.b16 %v1010
        %v1280 = vunpack.c.h.b16 %v1010
        %v1281 = vunpack.c.l.b16 %v1011
        %v1282 = vunpack.c.h.b16 %v1011
        %v1283 = vunpack.c.l.b16 %v1012
        %v1284 = vunpack.c.h.b16 %v1012
        %v1285 = vunpack.c.l.b16 %v1013
        %v1286 = vunpack.c.h.b16 %v1013
        %v1287 = vunpack.c.l.b16 %v1014
        %v1288 = vunpack.c.h.b16 %v1014
        %v1289 = vunpack.c.l.b16 %v1015
        %v1290 = vunpack.c.h.b16 %v1015
        %v1291 = vunpack.c.l.b16 %v1016
        %v1292 = vunpack.c.h.b16 %v1016
        %v1293 = vunpack.c.l.b16 %v1017
        %v1294 = vunpack.c.h.b16 %v1017
        %v1295 = vunpack.c.l.b16 %v1018
        %v1296 = vunpack.c.h.b16 %v1018
        %v1297 = vunpack.c.l.b16 %v1019
        %v1298 = vunpack.c.h.b16 %v1019
        %v1299 = vunpack.c.l.b16 %v1020
        %v1300 = vunpack.c.h.b16 %v1020
        %v1301 = vunpack.c.l.b16 %v1021
        %v1302 = vunpack.c.h.b16 %v1021
        %v1303 = vunpack.c.l.b16 %v1022
        %v1304 = vunpack.c.h.b16 %v1022
        %v1305 = vunpack.c.l.b16 %v1023
        %v1306 = vunpack.c.h.b16 %v1023
        %v1307 = vunpack.c.l.b16 %v1024
        %v1308 = vunpack.c.h.b16 %v1024
        %v1309 = vunpack.c.l.b16 %v1025
        %v1310 = vunpack.c.h.b16 %v1025
        %v1311 = vunpack.c.l.b16 %v1026
        %v1312 = vunpack.c.h.b16 %v1026
        %v1313 = vunpack.c.l.b16 %v1027
        %v1314 = vunpack.c.h.b16 %v1027
        %v1315 = vunpack.c.l.b16 %v1028
        %v1316 = vunpack.c.h.b16 %v1028
        %v1317 = vunpack.c.l.b16 %v1029
        %v1318 = vunpack.c.h.b16 %v1029
        %v1319 = vunpack.c.l.b16 %v1030
        %v1320 = vunpack.c.h.b16 %v1030
        %v1321 = vunpack.c.l.b16 %v1031
        %v1322 = vunpack.c.h.b16 %v1031
        %v1323 = vunpack.c.l.b16 %v1032
        %v1324 = vunpack.c.h.b16 %v1032
        %v1325 = vunpack.c.l.b16 %v1033
        %v1326 = vunpack.c.h.b16 %v1033
        %v1327 = vunpack.c.l.b16 %v1034
        %v1328 = vunpack.c.h.b16 %v1034
        %v1329 = vunpack.c.l.b16 %v1035
        %v1330 = vunpack.c.h.b16 %v1035
        %v1331 = vunpack.c.l.b16 %v1036
        %v1332 = vunpack.c.h.b16 %v1036
        %v1333 = vunpack.c.l.b16 %v1037
        %v1334 = vunpack.c.h.b16 %v1037
        %v1335 = vunpack.c.l.b16 %v1038
        %v1336 = vunpack.c.h.b16 %v1038
        %v1337 = vunpack.c.l.b16 %v1039
        %v1338 = vunpack.c.h.b16 %v1039
        %v1339 = vunpack.c.l.b16 %v1040
        %v1340 = vunpack.c.h.b16 %v1040
        %v1341 = vunpack.c.l.b16 %v1041
        %v1342 = vunpack.c.h.b16 %v1041
        %v1343 = vunpack.c.l.b16 %v1042
        %v1344 = vunpack.c.h.b16 %v1042
        %v1345 = vunpack.c.l.b16 %v1043
        %v1346 = vunpack.c.h.b16 %v1043
        %v1347 = vunpack.c.l.b16 %v1044
        %v1348 = vunpack.c.h.b16 %v1044
        %v1349 = vunpack.c.l.b16 %v1045
        %v1350 = vunpack.c.h.b16 %v1045
        %v1351 = vunpack.c.l.b16 %v1046
        %v1352 = vunpack.c.h.b16 %v1046
        %v1353 = vunpack.c.l.b16 %v1047
        %v1354 = vunpack.c.h.b16 %v1047
        %v1355 = vunpack.c.l.b16 %v1048
        %v1356 = vunpack.c.h.b16 %v1048
        %v1357 = vunpack.c.l.b16 %v1049
        %v1358 = vunpack.c.h.b16 %v1049
        %v1359 = vunpack.c.l.b16 %v1050
        %v1360 = vunpack.c.h.b16 %v1050
        %v1361 = vunpack.c.l.b16 %v1051
        %v1362 = vunpack.c.h.b16 %v1051
        %v1363 = vunpack.c.l.b16 %v1052
        %v1364 = vunpack.c.h.b16 %v1052
        %v1365 = vunpack.c.l.b16 %v1053
        %v1366 = vunpack.c.h.b16 %v1053
        %v1367 = vunpack.c.l.b16 %v1054
        %v1368 = vunpack.c.h.b16 %v1054
        %v1369 = vunpack.c.l.b16 %v1055
        %v1370 = vunpack.c.h.b16 %v1055
        %v1371 = vunpack.c.l.b16 %v1056
        %v1372 = vunpack.c.h.b16 %v1056
        %v1373 = vunpack.c.l.b16 %v1057
        %v1374 = vunpack.c.h.b16 %v1057
        %v1375 = vunpack.c.l.b16 %v1058
        %v1376 = vunpack.c.h.b16 %v1058
        %v1377 = vunpack.c.l.b16 %v1059
        %v1378 = vunpack.c.h.b16 %v1059
        %v1379 = vunpack.c.l.b16 %v1060
        %v1380 = vunpack.c.h.b16 %v1060
        %v1381 = vpack.c.b16 %v1195, %v1189
        %v1382 = vpack.c.b16 %v1196, %v1190
        %v1383 = vpack.c.b16 %v1197, %v1191
        %v1384 = vpack.c.b16 %v1198, %v1192
        %v1385 = vpack.c.b16 %v1199, %v1193
        %v1386 = vpack.c.b16 %v1200, %v1194
        %v1387 = vpack.c.b16 %v1207, %v1201
        %v1388 = vpack.c.b16 %v1208, %v1202
        %v1389 = vpack.c.b16 %v1209, %v1203
        %v1390 = vpack.c.b16 %v1210, %v1204
        %v1391 = vpack.c.b16 %v1211, %v1205
        %v1392 = vpack.c.b16 %v1212, %v1206
        %v1393 = vpack.c.b16 %v1219, %v1213
        %v1394 = vpack.c.b16 %v1220, %v1214
        %v1395 = vpack.c.b16 %v1221, %v1215
        %v1396 = vpack.c.b16 %v1222, %v1216
        %v1397 = vpack.c.b16 %v1223, %v1217
        %v1398 = vpack.c.b16 %v1224, %v1218
        %v1399 = vpack.c.b16 %v1231, %v1225
        %v1400 = vpack.c.b16 %v1232, %v1226
        %v1401 = vpack.c.b16 %v1233, %v1227
        %v1402 = vpack.c.b16 %v1234, %v1228
        %v1403 = vpack.c.b16 %v1235, %v1229
        %v1404 = vpack.c.b16 %v1236, %v1230
        %v1405 = vpack.c.b16 %v1243, %v1237
        %v1406 = vpack.c.b16 %v1244, %v1238
        %v1407 = vpack.c.b16 %v1245, %v1239
        %v1408 = vpack.c.b16 %v1246, %v1240
        %v1409 = vpack.c.b16 %v1247, %v1241
        %v1410 = vpack.c.b16 %v1248, %v1242
        %v1411 = vpack.c.b16 %v1255, %v1249
        %v1412 = vpack.c.b16 %v1256, %v1250
        %v1413 = vpack.c.b16 %v1257, %v1251
        %v1414 = vpack.c.b16 %v1258, %v1252
        %v1415 = vpack.c.b16 %v1259, %v1253
        %v1416 = vpack.c.b16 %v1260, %v1254
        %v1417 = vpack.c.b16 %v1267, %v1261
        %v1418 = vpack.c.b16 %v1268, %v1262
        %v1419 = vpack.c.b16 %v1269, %v1263
        %v1420 = vpack.c.b16 %v1270, %v1264
        %v1421 = vpack.c.b16 %v1271, %v1265
        %v1422 = vpack.c.b16 %v1272, %v1266
        %v1423 = vpack.c.b16 %v1279, %v1273
        %v1424 = vpack.c.b16 %v1280, %v1274
        %v1425 = vpack.c.b16 %v1281, %v1275
        %v1426 = vpack.c.b16 %v1282, %v1276
        %v1427 = vpack.c.b16 %v1283, %v1277
        %v1428 = vpack.c.b16 %v1284, %v1278
        %v1429 = vpack.c.b16 %v1291, %v1285
        %v1430 = vpack.c.b16 %v1292, %v1286
        %v1431 = vpack.c.b16 %v1293, %v1287
        %v1432 = vpack.c.b16 %v1294, %v1288
        %v1433 = vpack.c.b16 %v1295, %v1289
        %v1434 = vpack.c.b16 %v1296, %v1290
        %v1435 = vpack.c.b16 %v1303, %v1297
        %v1436 = vpack.c.b16 %v1304, %v1298
        %v1437 = vpack.c.b16 %v1305, %v1299
        %v1438 = vpack.c.b16 %v1306, %v1300
        %v1439 = vpack.c.b16 %v1307, %v1301
        %v1440 = vpack.c.b16 %v1308, %v1302
        %v1441 = vpack.c.b16 %v1315, %v1309
        %v1442 = vpack.c.b16 %v1316, %v1310
        %v1443 = vpack.c.b16 %v1317, %v1311
        %v1444 = vpack.c.b16 %v1318, %v1312
        %v1445 = vpack.c.b16 %v1319, %v1313
        %v1446 = vpack.c.b16 %v1320, %v1314
        %v1447 = vpack.c.b16 %v1327, %v1321
        %v1448 = vpack.c.b16 %v1328, %v1322
        %v1449 = vpack.c.b16 %v1329, %v1323
        %v1450 = vpack.c.b16 %v1330, %v1324
        %v1451 = vpack.c.b16 %v1331, %v1325
        %v1452 = vpack.c.b16 %v1332, %v1326
        %v1453 = vpack.c.b16 %v1339, %v1333
        %v1454 = vpack.c.b16 %v1340, %v1334
        %v1455 = vpack.c.b16 %v1341, %v1335
        %v1456 = vpack.c.b16 %v1342, %v1336
        %v1457 = vpack.c.b16 %v1343, %v1337
        %v1458 = vpack.c.b16 %v1344, %v1338
        %v1459 = vpack.c.b16 %v1351, %v1345
        %v1460 = vpack.c.b16 %v1352, %v1346
        %v1461 = vpack.c.b16 %v1353, %v1347
        %v1462 = vpack.c.b16 %v1354, %v1348
        %v1463 = vpack.c.b16 %v1355, %v1349
        %v1464 = vpack.c.b16 %v1356, %v1350
        %v1465 = vpack.c.b16 %v1363, %v1357
        %v1466 = vpack.c.b16 %v1364, %v1358
        %v1467 = vpack.c.b16 %v1365, %v1359
        %v1468 = vpack.c.b16 %v1366, %v1360
        %v1469 = vpack.c.b16 %v1367, %v1361
        %v1470 = vpack.c.b16 %v1368, %v1362
        %v1471 = vpack.c.b16 %v1375, %v1369
        %v1472 = vpack.c.b16 %v1376, %v1370
        %v1473 = vpack.c.b16 %v1377, %v1371
        %v1474 = vpack.c.b16 %v1378, %v1372
        %v1475 = vpack.c.b16 %v1379, %v1373
        %v1476 = vpack.c.b16 %v1380, %v1374
        %1573 = vmatprep.subr.bf16.mxu0 %v1424
        %1574 = vmatpush1.bf16.msra.mxu0 %v1423
        %1575 = vmatprep.subr.bf16.mxu0 %v1418
        %1576 = vmatpush1.bf16.msra.mxu0 %v1417
        %1577 = vmatprep.subr.bf16.mxu0 %v1412
        %1578 = vmatpush1.bf16.msra.mxu0 %v1411
        %1579 = vmatprep.subr.bf16.mxu0 %v1406
        %1580 = vmatpush1.bf16.msra.mxu0 %v1405
        %1581 = vmatprep.subr.bf16.mxu0 %v1400
        %1582 = vmatpush1.bf16.msra.mxu0 %v1399
        %1583 = vmatprep.subr.bf16.mxu0 %v1394
        %1584 = vmatpush1.bf16.msra.mxu0 %v1393
        %1585 = vmatprep.subr.bf16.mxu0 %v1388
        %1586 = vmatpush1.bf16.msra.mxu0 %v1387
        %1587 = vmatprep.subr.bf16.mxu0 %v1382
        %1588 = vmatpush1.bf16.msra.mxu0 %v1381
        %1589 = vmatprep.subr.bf16.mxu0 %v1472
        %1590 = vmatpush2.bf16.msra.mxu0 %v1471
        %1591 = vmatprep.subr.bf16.mxu0 %v1466
        %1592 = vmatpush2.bf16.msra.mxu0 %v1465
        %1593 = vmatprep.subr.bf16.mxu0 %v1460
        %1594 = vmatpush2.bf16.msra.mxu0 %v1459
        %1595 = vmatprep.subr.bf16.mxu0 %v1454
        %1596 = vmatpush2.bf16.msra.mxu0 %v1453
        %1597 = vmatprep.subr.bf16.mxu0 %v1448
        %1598 = vmatpush2.bf16.msra.mxu0 %v1447
        %1599 = vmatprep.subr.bf16.mxu0 %v1442
        %1600 = vmatpush2.bf16.msra.mxu0 %v1441
        %1601 = vmatprep.subr.bf16.mxu0 %v1436
        %1602 = vmatpush2.bf16.msra.mxu0 %v1435
        %1603 = vmatprep.subr.bf16.mxu0 %v1430
        %1604 = vmatpush2.bf16.msra.mxu0 %v1429
        %1605 = vmatprep.mubr.bf16.mxu0 %v964
        %1606 = vmatmul.mubr.bf16.gmra.mxu0 %v963
        %v1607 = vpop.f32.mrf.mxu0
        %v1608 = vadd.f32 %v1066, %v1607
        %v1609 = vpop.f32.mrf.mxu0
        %v1610 = vadd.f32 %v1070, %v1609
        %v1611 = vpop.f32.mrf.mxu0
        %v1612 = vpop.f32.mrf.mxu0
        %1613 = vdwg.mxu0
        %1614 = vmatprep.subr.bf16.mxu0 %v1426
        %1615 = vmatpush1.bf16.msra.mxu0 %v1425
        %1616 = vmatprep.subr.bf16.mxu0 %v1420
        %1617 = vmatpush1.bf16.msra.mxu0 %v1419
        %1618 = vmatprep.subr.bf16.mxu0 %v1414
        %1619 = vmatpush1.bf16.msra.mxu0 %v1413
        %1620 = vmatprep.subr.bf16.mxu0 %v1408
        %1621 = vmatpush1.bf16.msra.mxu0 %v1407
        %1622 = vmatprep.subr.bf16.mxu0 %v1402
        %1623 = vmatpush1.bf16.msra.mxu0 %v1401
        %1624 = vmatprep.subr.bf16.mxu0 %v1396
        %1625 = vmatpush1.bf16.msra.mxu0 %v1395
        %1626 = vmatprep.subr.bf16.mxu0 %v1390
        %1627 = vmatpush1.bf16.msra.mxu0 %v1389
        %1628 = vmatprep.subr.bf16.mxu0 %v1384
        %1629 = vmatpush1.bf16.msra.mxu0 %v1383
        %1630 = vmatprep.subr.bf16.mxu0 %v1474
        %1631 = vmatpush2.bf16.msra.mxu0 %v1473
        %1632 = vmatprep.subr.bf16.mxu0 %v1468
        %1633 = vmatpush2.bf16.msra.mxu0 %v1467
        %1634 = vmatprep.subr.bf16.mxu0 %v1462
        %1635 = vmatpush2.bf16.msra.mxu0 %v1461
        %1636 = vmatprep.subr.bf16.mxu0 %v1456
        %1637 = vmatpush2.bf16.msra.mxu0 %v1455
        %1638 = vmatprep.subr.bf16.mxu0 %v1450
        %1639 = vmatpush2.bf16.msra.mxu0 %v1449
        %1640 = vmatprep.subr.bf16.mxu0 %v1444
        %1641 = vmatpush2.bf16.msra.mxu0 %v1443
        %1642 = vmatprep.subr.bf16.mxu0 %v1438
        %1643 = vmatpush2.bf16.msra.mxu0 %v1437
        %1644 = vmatprep.subr.bf16.mxu0 %v1432
        %1645 = vmatpush2.bf16.msra.mxu0 %v1431
        %1646 = vmatprep.mubr.bf16.mxu0 %v964
        %1647 = vmatmul.mubr.bf16.gmra.mxu0 %v963
        %v1648 = vpop.f32.mrf.mxu0
        %v1649 = vadd.f32 %v1074, %v1648
        %v1650 = vpop.f32.mrf.mxu0
        %v1651 = vadd.f32 %v1078, %v1650
        %v1652 = vpop.f32.mrf.mxu0
        %v1653 = vpop.f32.mrf.mxu0
        %1654 = vdwg.mxu0
        %1655 = vmatprep.subr.bf16.mxu0 %v1428
        %1656 = vmatpush1.bf16.msra.mxu0 %v1427
        %1657 = vmatprep.subr.bf16.mxu0 %v1422
        %1658 = vmatpush1.bf16.msra.mxu0 %v1421
        %1659 = vmatprep.subr.bf16.mxu0 %v1416
        %1660 = vmatpush1.bf16.msra.mxu0 %v1415
        %1661 = vmatprep.subr.bf16.mxu0 %v1410
        %1662 = vmatpush1.bf16.msra.mxu0 %v1409
        %1663 = vmatprep.subr.bf16.mxu0 %v1404
        %1664 = vmatpush1.bf16.msra.mxu0 %v1403
        %1665 = vmatprep.subr.bf16.mxu0 %v1398
        %1666 = vmatpush1.bf16.msra.mxu0 %v1397
        %1667 = vmatprep.subr.bf16.mxu0 %v1392
        %1668 = vmatpush1.bf16.msra.mxu0 %v1391
        %1669 = vmatprep.subr.bf16.mxu0 %v1386
        %1670 = vmatpush1.bf16.msra.mxu0 %v1385
        %1671 = vmatprep.subr.bf16.mxu0 %v1476
        %1672 = vmatpush2.bf16.msra.mxu0 %v1475
        %1673 = vmatprep.subr.bf16.mxu0 %v1470
        %1674 = vmatpush2.bf16.msra.mxu0 %v1469
        %1675 = vmatprep.subr.bf16.mxu0 %v1464
        %1676 = vmatpush2.bf16.msra.mxu0 %v1463
        %1677 = vmatprep.subr.bf16.mxu0 %v1458
        %1678 = vmatpush2.bf16.msra.mxu0 %v1457
        %1679 = vmatprep.subr.bf16.mxu0 %v1452
        %1680 = vmatpush2.bf16.msra.mxu0 %v1451
        %1681 = vmatprep.subr.bf16.mxu0 %v1446
        %1682 = vmatpush2.bf16.msra.mxu0 %v1445
        %1683 = vmatprep.subr.bf16.mxu0 %v1440
        %1684 = vmatpush2.bf16.msra.mxu0 %v1439
        %1685 = vmatprep.subr.bf16.mxu0 %v1434
        %1686 = vmatpush2.bf16.msra.mxu0 %v1433
        %1687 = vmatprep.mubr.bf16.mxu0 %v964
        %1688 = vmatmul.mubr.bf16.gmra.mxu0 %v963
        %v1689 = vpop.f32.mrf.mxu0
        %v1690 = vadd.f32 %v1082, %v1689
        %v1691 = vpop.f32.mrf.mxu0
        %v1692 = vadd.f32 %v1086, %v1691
        %v1693 = vpop.f32.mrf.mxu0
        %v1694 = vpop.f32.mrf.mxu0
        %1695 = vdwg.mxu0
        %v1696 = vpack.c.bf16 %v1649, %v1649
        %v1697 = vpack.c.bf16 %v1651, %v1651
        %v1698 = vpack.c.bf16 %v1690, %v1690
        %v1699 = vpack.c.bf16 %v1692, %v1692
        %v1700 = vmul.f32 %v1608, 0.088388346
        %v1701 = vmul.f32 %v1610, 0.088388346
        %v1702 = vpack.c.bf16 %v1700, %v1700
        %v1703 = vpack.c.bf16 %v1701, %v1701
        %1704 = vmatprep.subr.bf16.mxu0 0
        %1705 = vmatpush1.bf16.xpose.msra.mxu0 0
        %1706 = vmatprep.subr.bf16.mxu0 0
        %1707 = vmatpush1.bf16.xpose.msra.mxu0 0
        %1708 = vmatprep.subr.bf16.mxu0 0
        %1709 = vmatpush1.bf16.xpose.msra.mxu0 0
        %1710 = vmatprep.subr.bf16.mxu0 0
        %1711 = vmatpush1.bf16.xpose.msra.mxu0 0
        %1712 = vmatprep.subr.bf16.mxu0 0
        %1713 = vmatpush1.bf16.xpose.msra.mxu0 0
        %1714 = vmatprep.subr.bf16.mxu0 0
        %1715 = vmatpush1.bf16.xpose.msra.mxu0 0
        %1716 = vmatprep.subr.bf16.mxu0 0
        %1717 = vmatpush1.bf16.xpose.msra.mxu0 0
        %1718 = vmatprep.subr.bf16.mxu0 0
        %1719 = vmatpush1.bf16.xpose.msra.mxu0 %v1696
        %1720 = vmatprep.subr.bf16.mxu0 0
        %1721 = vmatpush2.bf16.xpose.msra.mxu0 0
        %1722 = vmatprep.subr.bf16.mxu0 0
        %1723 = vmatpush2.bf16.xpose.msra.mxu0 0
        %1724 = vmatprep.subr.bf16.mxu0 0
        %1725 = vmatpush2.bf16.xpose.msra.mxu0 0
        %1726 = vmatprep.subr.bf16.mxu0 0
        %1727 = vmatpush2.bf16.xpose.msra.mxu0 0
        %1728 = vmatprep.subr.bf16.mxu0 0
        %1729 = vmatpush2.bf16.xpose.msra.mxu0 0
        %1730 = vmatprep.subr.bf16.mxu0 0
        %1731 = vmatpush2.bf16.xpose.msra.mxu0 0
        %1732 = vmatprep.subr.bf16.mxu0 0
        %1733 = vmatpush2.bf16.xpose.msra.mxu0 0
        %1734 = vmatprep.subr.bf16.mxu0 0
        %1735 = vmatpush2.bf16.xpose.msra.mxu0 0
        %1736 = vmatprep.mubr.bf16.mxu0 0
        %1737 = vmatmul.mubr.bf16.gmra.mxu0 %v1702
        %v1738 = vpop.f32.mrf.mxu0
        %v1739 = vadd.f32 0.0, %v1738
        %v1740 = vpop.f32.mrf.mxu0
        %v1741 = vpop.f32.mrf.mxu0
        %v1742 = vpop.f32.mrf.mxu0
        %1743 = vdwg.mxu0
        %vm1744 = vcmask 64512
        %v1745 = vsel %vm1744, %v1739, -inf
        %1746 = vmax.xlane.f32.xlu0 %v1745
        %v1747 = vpop.xlane.xlu0 %1746
        %v1748 = vsub.f32 %v1739, %v1747
        %v1749 = vmul.f32 %v1748, 1.442695
        %v1750 = vpow.pop %v1749
        %v1751 = vsel %vm1744, %v1750, 0.0
        %1752 = vadd.xlane.f32.xlu0 %v1751
        %v1753 = vpop.xlane.xlu0 %1752
        %v1754 = vrcp.pop %v1753
        %v1755 = vmul.f32 %v1750, %v1754
        %v1756 = vpack.c.bf16 %v1755, %v1755
        %v1758 = vsel %vm1744, %v1756, 0
        %vm1760 = vcmask 1043456
        %v1762 = vsel %vm1760, %v1698, 0
        %1764 = vmatprep.subr.bf16.mxu0 0
        %1765 = vmatpush1.bf16.msra.mxu0 0
        %1766 = vmatprep.subr.bf16.mxu0 0
        %1767 = vmatpush1.bf16.msra.mxu0 0
        %1768 = vmatprep.subr.bf16.mxu0 0
        %1769 = vmatpush1.bf16.msra.mxu0 0
        %1770 = vmatprep.subr.bf16.mxu0 0
        %1771 = vmatpush1.bf16.msra.mxu0 0
        %1772 = vmatprep.subr.bf16.mxu0 0
        %1773 = vmatpush1.bf16.msra.mxu0 0
        %1774 = vmatprep.subr.bf16.mxu0 0
        %1775 = vmatpush1.bf16.msra.mxu0 0
        %1776 = vmatprep.subr.bf16.mxu0 0
        %1777 = vmatpush1.bf16.msra.mxu0 0
        %1778 = vmatprep.subr.bf16.mxu0 0
        %1779 = vmatpush1.bf16.msra.mxu0 %v1762
        %1780 = vmatprep.subr.bf16.mxu0 0
        %1781 = vmatpush2.bf16.msra.mxu0 0
        %1782 = vmatprep.subr.bf16.mxu0 0
        %1783 = vmatpush2.bf16.msra.mxu0 0
        %1784 = vmatprep.subr.bf16.mxu0 0
        %1785 = vmatpush2.bf16.msra.mxu0 0
        %1786 = vmatprep.subr.bf16.mxu0 0
        %1787 = vmatpush2.bf16.msra.mxu0 0
        %1788 = vmatprep.subr.bf16.mxu0 0
        %1789 = vmatpush2.bf16.msra.mxu0 0
        %1790 = vmatprep.subr.bf16.mxu0 0
        %1791 = vmatpush2.bf16.msra.mxu0 0
        %1792 = vmatprep.subr.bf16.mxu0 0
        %1793 = vmatpush2.bf16.msra.mxu0 0
        %1794 = vmatprep.subr.bf16.mxu0 0
        %1795 = vmatpush2.bf16.msra.mxu0 0
        %1796 = vmatprep.mubr.bf16.mxu0 0
        %1797 = vmatmul.mubr.bf16.gmra.mxu0 %v1758
        %v1798 = vpop.f32.mrf.mxu0
        %v1799 = vadd.f32 0.0, %v1798
        %v1800 = vpop.f32.mrf.mxu0
        %v1801 = vpop.f32.mrf.mxu0
        %v1802 = vpop.f32.mrf.mxu0
        %1803 = vdwg.mxu0
        %1804 = vmatprep.subr.bf16.mxu0 0
        %1805 = vmatpush1.bf16.xpose.msra.mxu0 0
        %1806 = vmatprep.subr.bf16.mxu0 0
        %1807 = vmatpush1.bf16.xpose.msra.mxu0 0
        %1808 = vmatprep.subr.bf16.mxu0 0
        %1809 = vmatpush1.bf16.xpose.msra.mxu0 0
        %1810 = vmatprep.subr.bf16.mxu0 0
        %1811 = vmatpush1.bf16.xpose.msra.mxu0 0
        %1812 = vmatprep.subr.bf16.mxu0 0
        %1813 = vmatpush1.bf16.xpose.msra.mxu0 0
        %1814 = vmatprep.subr.bf16.mxu0 0
        %1815 = vmatpush1.bf16.xpose.msra.mxu0 0
        %1816 = vmatprep.subr.bf16.mxu0 0
        %1817 = vmatpush1.bf16.xpose.msra.mxu0 0
        %1818 = vmatprep.subr.bf16.mxu0 0
        %1819 = vmatpush1.bf16.xpose.msra.mxu0 %v1697
        %1820 = vmatprep.subr.bf16.mxu0 0
        %1821 = vmatpush2.bf16.xpose.msra.mxu0 0
        %1822 = vmatprep.subr.bf16.mxu0 0
        %1823 = vmatpush2.bf16.xpose.msra.mxu0 0
        %1824 = vmatprep.subr.bf16.mxu0 0
        %1825 = vmatpush2.bf16.xpose.msra.mxu0 0
        %1826 = vmatprep.subr.bf16.mxu0 0
        %1827 = vmatpush2.bf16.xpose.msra.mxu0 0
        %1828 = vmatprep.subr.bf16.mxu0 0
        %1829 = vmatpush2.bf16.xpose.msra.mxu0 0
        %1830 = vmatprep.subr.bf16.mxu0 0
        %1831 = vmatpush2.bf16.xpose.msra.mxu0 0
        %1832 = vmatprep.subr.bf16.mxu0 0
        %1833 = vmatpush2.bf16.xpose.msra.mxu0 0
        %1834 = vmatprep.subr.bf16.mxu0 0
        %1835 = vmatpush2.bf16.xpose.msra.mxu0 0
        %1836 = vmatprep.mubr.bf16.mxu0 0
        %1837 = vmatmul.mubr.bf16.gmra.mxu0 %v1703
        %v1838 = vpop.f32.mrf.mxu0
        %v1839 = vadd.f32 0.0, %v1838
        %v1840 = vpop.f32.mrf.mxu0
        %v1841 = vpop.f32.mrf.mxu0
        %v1842 = vpop.f32.mrf.mxu0
        %1843 = vdwg.mxu0
        %v1844 = vsel %vm1744, %v1839, -inf
        %1845 = vmax.xlane.f32.xlu0 %v1844
        %v1846 = vpop.xlane.xlu0 %1845
        %v1847 = vsub.f32 %v1839, %v1846
        %v1848 = vmul.f32 %v1847, 1.442695
        %v1849 = vpow.pop %v1848
        %v1850 = vsel %vm1744, %v1849, 0.0
        %1851 = vadd.xlane.f32.xlu0 %v1850
        %v1852 = vpop.xlane.xlu0 %1851
        %v1853 = vrcp.pop %v1852
        %v1854 = vmul.f32 %v1849, %v1853
        %v1855 = vpack.c.bf16 %v1854, %v1854
        %v1857 = vsel %vm1744, %v1855, 0
        %v1860 = vsel %vm1760, %v1699, 0
        %1862 = vmatprep.subr.bf16.mxu0 0
        %1863 = vmatpush1.bf16.msra.mxu0 0
        %1864 = vmatprep.subr.bf16.mxu0 0
        %1865 = vmatpush1.bf16.msra.mxu0 0
        %1866 = vmatprep.subr.bf16.mxu0 0
        %1867 = vmatpush1.bf16.msra.mxu0 0
        %1868 = vmatprep.subr.bf16.mxu0 0
        %1869 = vmatpush1.bf16.msra.mxu0 0
        %1870 = vmatprep.subr.bf16.mxu0 0
        %1871 = vmatpush1.bf16.msra.mxu0 0
        %1872 = vmatprep.subr.bf16.mxu0 0
        %1873 = vmatpush1.bf16.msra.mxu0 0
        %1874 = vmatprep.subr.bf16.mxu0 0
        %1875 = vmatpush1.bf16.msra.mxu0 0
        %1876 = vmatprep.subr.bf16.mxu0 0
        %1877 = vmatpush1.bf16.msra.mxu0 %v1860
        %1878 = vmatprep.subr.bf16.mxu0 0
        %1879 = vmatpush2.bf16.msra.mxu0 0
        %1880 = vmatprep.subr.bf16.mxu0 0
        %1881 = vmatpush2.bf16.msra.mxu0 0
        %1882 = vmatprep.subr.bf16.mxu0 0
        %1883 = vmatpush2.bf16.msra.mxu0 0
        %1884 = vmatprep.subr.bf16.mxu0 0
        %1885 = vmatpush2.bf16.msra.mxu0 0
        %1886 = vmatprep.subr.bf16.mxu0 0
        %1887 = vmatpush2.bf16.msra.mxu0 0
        %1888 = vmatprep.subr.bf16.mxu0 0
        %1889 = vmatpush2.bf16.msra.mxu0 0
        %1890 = vmatprep.subr.bf16.mxu0 0
        %1891 = vmatpush2.bf16.msra.mxu0 0
        %1892 = vmatprep.subr.bf16.mxu0 0
        %1893 = vmatpush2.bf16.msra.mxu0 0
        %1894 = vmatprep.mubr.bf16.mxu0 0
        %1895 = vmatmul.mubr.bf16.gmra.mxu0 %v1857
        %v1896 = vpop.f32.mrf.mxu0
        %v1897 = vadd.f32 0.0, %v1896
        %v1898 = vpop.f32.mrf.mxu0
        %v1899 = vpop.f32.mrf.mxu0
        %v1900 = vpop.f32.mrf.mxu0
        %1901 = vdwg.mxu0
        %v1902 = vpack.c.bf16 %v1799, %v1799
        %v1903 = vpack.c.bf16 %v1897, %v1897
        %v1904 = vld [vmem:[#allocation9] sm:$0xff]
        %v1905 = vld [vmem:[#allocation9 + $0x8] sm:$0xff]
        %v1906 = vld [vmem:[#allocation9 + $0x10] sm:$0xff]
        %v1907 = vld [vmem:[#allocation9 + $0x18] sm:$0xff]
        %v1908 = vld [vmem:[#allocation9 + $0x20] sm:$0xff]
        %v1909 = vld [vmem:[#allocation9 + $0x28] sm:$0xff]
        %v1910 = vld [vmem:[#allocation9 + $0x30] sm:$0xff]
        %v1911 = vld [vmem:[#allocation9 + $0x38] sm:$0xff]
        %v1912 = vld [vmem:[#allocation9 + $0x40] sm:$0xff]
        %v1913 = vld [vmem:[#allocation9 + $0x48] sm:$0xff]
        %v1914 = vld [vmem:[#allocation9 + $0x50] sm:$0xff]
        %v1915 = vld [vmem:[#allocation9 + $0x58] sm:$0xff]
        %v1916 = vld [vmem:[#allocation9 + $0x60] sm:$0xff]
        %v1917 = vld [vmem:[#allocation9 + $0x68] sm:$0xff]
        %v1918 = vld [vmem:[#allocation9 + $0x70] sm:$0xff]
        %v1919 = vld [vmem:[#allocation9 + $0x78] sm:$0xff]
        %v1920 = vld [vmem:[#allocation9 + $0x80] sm:$0xff]
        %v1921 = vld [vmem:[#allocation9 + $0x88] sm:$0xff]
        %v1922 = vld [vmem:[#allocation9 + $0x90] sm:$0xff]
        %v1923 = vld [vmem:[#allocation9 + $0x98] sm:$0xff]
        %v1924 = vld [vmem:[#allocation9 + $0xa0] sm:$0xff]
        %v1925 = vld [vmem:[#allocation9 + $0xa8] sm:$0xff]
        %v1926 = vld [vmem:[#allocation9 + $0xb0] sm:$0xff]
        %v1927 = vld [vmem:[#allocation9 + $0xb8] sm:$0xff]
        %v1928 = vld [vmem:[#allocation9 + $0xc0] sm:$0xff]
        %v1929 = vld [vmem:[#allocation9 + $0xc8] sm:$0xff]
        %v1930 = vld [vmem:[#allocation9 + $0xd0] sm:$0xff]
        %v1931 = vld [vmem:[#allocation9 + $0xd8] sm:$0xff]
        %v1932 = vld [vmem:[#allocation9 + $0xe0] sm:$0xff]
        %v1933 = vld [vmem:[#allocation9 + $0xe8] sm:$0xff]
        %v1934 = vld [vmem:[#allocation9 + $0xf0] sm:$0xff]
        %v1935 = vld [vmem:[#allocation9 + $0xf8] sm:$0xff]
        %v1936 = vld [vmem:[#allocation11] sm:$0x3]
        %v1938 = vlaneseq
        %v1939 = vshrl.u32 %v1938, 7
        %v1940 = vsub.s32 0, %v1939
        %v1941 = vrot.slane %v1936, %v1940
        %v1942 = vlaneseq
        %v1943 = vshrl.u32 %v1942, 7
        %v1944 = vsub.s32 1, %v1943
        %v1945 = vrot.slane %v1936, %v1944
        %v1980 = vunpack.c.l.b16 %v1904
        %v1981 = vunpack.c.h.b16 %v1904
        %v1982 = vunpack.c.l.b16 %v1905
        %v1983 = vunpack.c.h.b16 %v1905
        %v1984 = vunpack.c.l.b16 %v1906
        %v1985 = vunpack.c.h.b16 %v1906
        %v1986 = vunpack.c.l.b16 %v1907
        %v1987 = vunpack.c.h.b16 %v1907
        %v1988 = vunpack.c.l.b16 %v1908
        %v1989 = vunpack.c.h.b16 %v1908
        %v1990 = vunpack.c.l.b16 %v1909
        %v1991 = vunpack.c.h.b16 %v1909
        %v1992 = vunpack.c.l.b16 %v1910
        %v1993 = vunpack.c.h.b16 %v1910
        %v1994 = vunpack.c.l.b16 %v1911
        %v1995 = vunpack.c.h.b16 %v1911
        %v1996 = vunpack.c.l.b16 %v1912
        %v1997 = vunpack.c.h.b16 %v1912
        %v1998 = vunpack.c.l.b16 %v1913
        %v1999 = vunpack.c.h.b16 %v1913
        %v2000 = vunpack.c.l.b16 %v1914
        %v2001 = vunpack.c.h.b16 %v1914
        %v2002 = vunpack.c.l.b16 %v1915
        %v2003 = vunpack.c.h.b16 %v1915
        %v2004 = vunpack.c.l.b16 %v1916
        %v2005 = vunpack.c.h.b16 %v1916
        %v2006 = vunpack.c.l.b16 %v1917
        %v2007 = vunpack.c.h.b16 %v1917
        %v2008 = vunpack.c.l.b16 %v1918
        %v2009 = vunpack.c.h.b16 %v1918
        %v2010 = vunpack.c.l.b16 %v1919
        %v2011 = vunpack.c.h.b16 %v1919
        %v2012 = vunpack.c.l.b16 %v1920
        %v2013 = vunpack.c.h.b16 %v1920
        %v2014 = vunpack.c.l.b16 %v1921
        %v2015 = vunpack.c.h.b16 %v1921
        %v2016 = vunpack.c.l.b16 %v1922
        %v2017 = vunpack.c.h.b16 %v1922
        %v2018 = vunpack.c.l.b16 %v1923
        %v2019 = vunpack.c.h.b16 %v1923
        %v2020 = vunpack.c.l.b16 %v1924
        %v2021 = vunpack.c.h.b16 %v1924
        %v2022 = vunpack.c.l.b16 %v1925
        %v2023 = vunpack.c.h.b16 %v1925
        %v2024 = vunpack.c.l.b16 %v1926
        %v2025 = vunpack.c.h.b16 %v1926
        %v2026 = vunpack.c.l.b16 %v1927
        %v2027 = vunpack.c.h.b16 %v1927
        %v2028 = vunpack.c.l.b16 %v1928
        %v2029 = vunpack.c.h.b16 %v1928
        %v2030 = vunpack.c.l.b16 %v1929
        %v2031 = vunpack.c.h.b16 %v1929
        %v2032 = vunpack.c.l.b16 %v1930
        %v2033 = vunpack.c.h.b16 %v1930
        %v2034 = vunpack.c.l.b16 %v1931
        %v2035 = vunpack.c.h.b16 %v1931
        %v2036 = vunpack.c.l.b16 %v1932
        %v2037 = vunpack.c.h.b16 %v1932
        %v2038 = vunpack.c.l.b16 %v1933
        %v2039 = vunpack.c.h.b16 %v1933
        %v2040 = vunpack.c.l.b16 %v1934
        %v2041 = vunpack.c.h.b16 %v1934
        %v2042 = vunpack.c.l.b16 %v1935
        %v2043 = vunpack.c.h.b16 %v1935
        %v2044 = vpack.c.b16 %v1982, %v1980
        %v2045 = vpack.c.b16 %v1983, %v1981
        %v2046 = vpack.c.b16 %v1986, %v1984
        %v2047 = vpack.c.b16 %v1987, %v1985
        %v2048 = vpack.c.b16 %v1990, %v1988
        %v2049 = vpack.c.b16 %v1991, %v1989
        %v2050 = vpack.c.b16 %v1994, %v1992
        %v2051 = vpack.c.b16 %v1995, %v1993
        %v2052 = vpack.c.b16 %v1998, %v1996
        %v2053 = vpack.c.b16 %v1999, %v1997
        %v2054 = vpack.c.b16 %v2002, %v2000
        %v2055 = vpack.c.b16 %v2003, %v2001
        %v2056 = vpack.c.b16 %v2006, %v2004
        %v2057 = vpack.c.b16 %v2007, %v2005
        %v2058 = vpack.c.b16 %v2010, %v2008
        %v2059 = vpack.c.b16 %v2011, %v2009
        %v2060 = vpack.c.b16 %v2014, %v2012
        %v2061 = vpack.c.b16 %v2015, %v2013
        %v2062 = vpack.c.b16 %v2018, %v2016
        %v2063 = vpack.c.b16 %v2019, %v2017
        %v2064 = vpack.c.b16 %v2022, %v2020
        %v2065 = vpack.c.b16 %v2023, %v2021
        %v2066 = vpack.c.b16 %v2026, %v2024
        %v2067 = vpack.c.b16 %v2027, %v2025
        %v2068 = vpack.c.b16 %v2030, %v2028
        %v2069 = vpack.c.b16 %v2031, %v2029
        %v2070 = vpack.c.b16 %v2034, %v2032
        %v2071 = vpack.c.b16 %v2035, %v2033
        %v2072 = vpack.c.b16 %v2038, %v2036
        %v2073 = vpack.c.b16 %v2039, %v2037
        %v2074 = vpack.c.b16 %v2042, %v2040
        %v2075 = vpack.c.b16 %v2043, %v2041
        %2108 = vmatprep.subr.bf16.mxu0 %v2059
        %2109 = vmatpush1.bf16.msra.mxu0 %v2058
        %2110 = vmatprep.subr.bf16.mxu0 %v2057
        %2111 = vmatpush1.bf16.msra.mxu0 %v2056
        %2112 = vmatprep.subr.bf16.mxu0 %v2055
        %2113 = vmatpush1.bf16.msra.mxu0 %v2054
        %2114 = vmatprep.subr.bf16.mxu0 %v2053
        %2115 = vmatpush1.bf16.msra.mxu0 %v2052
        %2116 = vmatprep.subr.bf16.mxu0 %v2051
        %2117 = vmatpush1.bf16.msra.mxu0 %v2050
        %2118 = vmatprep.subr.bf16.mxu0 %v2049
        %2119 = vmatpush1.bf16.msra.mxu0 %v2048
        %2120 = vmatprep.subr.bf16.mxu0 %v2047
        %2121 = vmatpush1.bf16.msra.mxu0 %v2046
        %2122 = vmatprep.subr.bf16.mxu0 %v2045
        %2123 = vmatpush1.bf16.msra.mxu0 %v2044
        %2124 = vmatprep.subr.bf16.mxu0 %v2075
        %2125 = vmatpush2.bf16.msra.mxu0 %v2074
        %2126 = vmatprep.subr.bf16.mxu0 %v2073
        %2127 = vmatpush2.bf16.msra.mxu0 %v2072
        %2128 = vmatprep.subr.bf16.mxu0 %v2071
        %2129 = vmatpush2.bf16.msra.mxu0 %v2070
        %2130 = vmatprep.subr.bf16.mxu0 %v2069
        %2131 = vmatpush2.bf16.msra.mxu0 %v2068
        %2132 = vmatprep.subr.bf16.mxu0 %v2067
        %2133 = vmatpush2.bf16.msra.mxu0 %v2066
        %2134 = vmatprep.subr.bf16.mxu0 %v2065
        %2135 = vmatpush2.bf16.msra.mxu0 %v2064
        %2136 = vmatprep.subr.bf16.mxu0 %v2063
        %2137 = vmatpush2.bf16.msra.mxu0 %v2062
        %2138 = vmatprep.subr.bf16.mxu0 %v2061
        %2139 = vmatpush2.bf16.msra.mxu0 %v2060
        %2140 = vmatprep.mubr.bf16.mxu0 %v1903
        %2141 = vmatmul.mubr.bf16.gmra.mxu0 %v1902
        %v2142 = vpop.f32.mrf.mxu0
        %v2143 = vadd.f32 %v1941, %v2142
        %v2144 = vpop.f32.mrf.mxu0
        %v2145 = vadd.f32 %v1945, %v2144
        %v2146 = vpop.f32.mrf.mxu0
        %v2147 = vpop.f32.mrf.mxu0
        %2148 = vdwg.mxu0
        %v2149 = vadd.f32 %v959, %v2143
        %v2150 = vadd.f32 %v960, %v2145
        %v2151 = vld [vmem:[#allocation12] sm:$0x3]
        %v2152 = vld [vmem:[#allocation14] sm:$0x3]
        %v2153 = vadd.f32 %v2149, %v2150
        %2154 = vadd.xlane.f32.xlu0 %v2153
        %v2155 = vpop.xlane.xlu0 %2154
        %v2156 = vrcp.pop 256.0
        %v2157 = vmul.f32 %v2155, %v2156
        %v2158 = vsub.f32 %v2149, %v2157
        %v2159 = vsub.f32 %v2150, %v2157
        %v2160 = vmul.f32 %v2158, %v2158
        %v2161 = vmul.f32 %v2159, %v2159
        %v2162 = vadd.f32 %v2160, %v2161
        %2163 = vadd.xlane.f32.xlu0 %v2162
        %v2164 = vpop.xlane.xlu0 %2163
        %v2165 = vmul.f32 %v2164, %v2156
        %v2166 = vadd.f32 %v2165, 1e-05
        %v2167 = vrsqrt.pop %v2166
        %v2168 = vmul.f32 %v2158, %v2167
        %v2169 = vmul.f32 %v2159, %v2167
        %v2171 = vlaneseq
        %v2172 = vshrl.u32 %v2171, 7
        %v2173 = vsub.s32 0, %v2172
        %v2174 = vrot.slane %v2151, %v2173
        %v2175 = vlaneseq
        %v2176 = vshrl.u32 %v2175, 7
        %v2177 = vsub.s32 1, %v2176
        %v2178 = vrot.slane %v2151, %v2177
        %v2181 = vmul.f32 %v2168, %v2174
        %v2182 = vmul.f32 %v2169, %v2178
        %v2184 = vlaneseq
        %v2185 = vshrl.u32 %v2184, 7
        %v2186 = vsub.s32 0, %v2185
        %v2187 = vrot.slane %v2152, %v2186
        %v2188 = vlaneseq
        %v2189 = vshrl.u32 %v2188, 7
        %v2190 = vsub.s32 1, %v2189
        %v2191 = vrot.slane %v2152, %v2190
        %v2194 = vadd.f32 %v2181, %v2187
        %v2195 = vadd.f32 %v2182, %v2191
        %v2196 = vpack.c.bf16 %v2194, %v2194
        %v2197 = vpack.c.bf16 %v2195, %v2195
        %v2198 = vld [vmem:[#allocation15] sm:$0xff]
        %v2199 = vld [vmem:[#allocation15 + $0x8] sm:$0xff]
        %v2200 = vld [vmem:[#allocation15 + $0x10] sm:$0xff]
        %v2201 = vld [vmem:[#allocation15 + $0x18] sm:$0xff]
        %v2202 = vld [vmem:[#allocation15 + $0x20] sm:$0xff]
        %v2203 = vld [vmem:[#allocation15 + $0x28] sm:$0xff]
        %v2204 = vld [vmem:[#allocation15 + $0x30] sm:$0xff]
        %v2205 = vld [vmem:[#allocation15 + $0x38] sm:$0xff]
        %v2206 = vld [vmem:[#allocation15 + $0x40] sm:$0xff]
        %v2207 = vld [vmem:[#allocation15 + $0x48] sm:$0xff]
        %v2208 = vld [vmem:[#allocation15 + $0x50] sm:$0xff]
        %v2209 = vld [vmem:[#allocation15 + $0x58] sm:$0xff]
        %v2210 = vld [vmem:[#allocation15 + $0x60] sm:$0xff]
        %v2211 = vld [vmem:[#allocation15 + $0x68] sm:$0xff]
        %v2212 = vld [vmem:[#allocation15 + $0x70] sm:$0xff]
        %v2213 = vld [vmem:[#allocation15 + $0x78] sm:$0xff]
        %v2214 = vld [vmem:[#allocation15 + $0x80] sm:$0xff]
        %v2215 = vld [vmem:[#allocation15 + $0x88] sm:$0xff]
        %v2216 = vld [vmem:[#allocation15 + $0x90] sm:$0xff]
        %v2217 = vld [vmem:[#allocation15 + $0x98] sm:$0xff]
        %v2218 = vld [vmem:[#allocation15 + $0xa0] sm:$0xff]
        %v2219 = vld [vmem:[#allocation15 + $0xa8] sm:$0xff]
        %v2220 = vld [vmem:[#allocation15 + $0xb0] sm:$0xff]
        %v2221 = vld [vmem:[#allocation15 + $0xb8] sm:$0xff]
        %v2222 = vld [vmem:[#allocation15 + $0xc0] sm:$0xff]
        %v2223 = vld [vmem:[#allocation15 + $0xc8] sm:$0xff]
        %v2224 = vld [vmem:[#allocation15 + $0xd0] sm:$0xff]
        %v2225 = vld [vmem:[#allocation15 + $0xd8] sm:$0xff]
        %v2226 = vld [vmem:[#allocation15 + $0xe0] sm:$0xff]
        %v2227 = vld [vmem:[#allocation15 + $0xe8] sm:$0xff]
        %v2228 = vld [vmem:[#allocation15 + $0xf0] sm:$0xff]
        %v2229 = vld [vmem:[#allocation15 + $0xf8] sm:$0xff]
        %v2230 = vld [vmem:[%s10] sm:$0x3]
        %v2232 = vlaneseq
        %v2233 = vshrl.u32 %v2232, 7
        %v2234 = vsub.s32 0, %v2233
        %v2235 = vrot.slane %v2230, %v2234
        %v2236 = vlaneseq
        %v2237 = vshrl.u32 %v2236, 7
        %v2238 = vsub.s32 1, %v2237
        %v2239 = vrot.slane %v2230, %v2238
        %v2274 = vunpack.c.l.b16 %v2198
        %v2275 = vunpack.c.h.b16 %v2198
        %v2276 = vunpack.c.l.b16 %v2199
        %v2277 = vunpack.c.h.b16 %v2199
        %v2278 = vunpack.c.l.b16 %v2200
        %v2279 = vunpack.c.h.b16 %v2200
        %v2280 = vunpack.c.l.b16 %v2201
        %v2281 = vunpack.c.h.b16 %v2201
        %v2282 = vunpack.c.l.b16 %v2202
        %v2283 = vunpack.c.h.b16 %v2202
        %v2284 = vunpack.c.l.b16 %v2203
        %v2285 = vunpack.c.h.b16 %v2203
        %v2286 = vunpack.c.l.b16 %v2204
        %v2287 = vunpack.c.h.b16 %v2204
        %v2288 = vunpack.c.l.b16 %v2205
        %v2289 = vunpack.c.h.b16 %v2205
        %v2290 = vunpack.c.l.b16 %v2206
        %v2291 = vunpack.c.h.b16 %v2206
        %v2292 = vunpack.c.l.b16 %v2207
        %v2293 = vunpack.c.h.b16 %v2207
        %v2294 = vunpack.c.l.b16 %v2208
        %v2295 = vunpack.c.h.b16 %v2208
        %v2296 = vunpack.c.l.b16 %v2209
        %v2297 = vunpack.c.h.b16 %v2209
        %v2298 = vunpack.c.l.b16 %v2210
        %v2299 = vunpack.c.h.b16 %v2210
        %v2300 = vunpack.c.l.b16 %v2211
        %v2301 = vunpack.c.h.b16 %v2211
        %v2302 = vunpack.c.l.b16 %v2212
        %v2303 = vunpack.c.h.b16 %v2212
        %v2304 = vunpack.c.l.b16 %v2213
        %v2305 = vunpack.c.h.b16 %v2213
        %v2306 = vunpack.c.l.b16 %v2214
        %v2307 = vunpack.c.h.b16 %v2214
        %v2308 = vunpack.c.l.b16 %v2215
        %v2309 = vunpack.c.h.b16 %v2215
        %v2310 = vunpack.c.l.b16 %v2216
        %v2311 = vunpack.c.h.b16 %v2216
        %v2312 = vunpack.c.l.b16 %v2217
        %v2313 = vunpack.c.h.b16 %v2217
        %v2314 = vunpack.c.l.b16 %v2218
        %v2315 = vunpack.c.h.b16 %v2218
        %v2316 = vunpack.c.l.b16 %v2219
        %v2317 = vunpack.c.h.b16 %v2219
        %v2318 = vunpack.c.l.b16 %v2220
        %v2319 = vunpack.c.h.b16 %v2220
        %v2320 = vunpack.c.l.b16 %v2221
        %v2321 = vunpack.c.h.b16 %v2221
        %v2322 = vunpack.c.l.b16 %v2222
        %v2323 = vunpack.c.h.b16 %v2222
        %v2324 = vunpack.c.l.b16 %v2223
        %v2325 = vunpack.c.h.b16 %v2223
        %v2326 = vunpack.c.l.b16 %v2224
        %v2327 = vunpack.c.h.b16 %v2224
        %v2328 = vunpack.c.l.b16 %v2225
        %v2329 = vunpack.c.h.b16 %v2225
        %v2330 = vunpack.c.l.b16 %v2226
        %v2331 = vunpack.c.h.b16 %v2226
        %v2332 = vunpack.c.l.b16 %v2227
        %v2333 = vunpack.c.h.b16 %v2227
        %v2334 = vunpack.c.l.b16 %v2228
        %v2335 = vunpack.c.h.b16 %v2228
        %v2336 = vunpack.c.l.b16 %v2229
        %v2337 = vunpack.c.h.b16 %v2229
        %v2338 = vpack.c.b16 %v2276, %v2274
        %v2339 = vpack.c.b16 %v2277, %v2275
        %v2340 = vpack.c.b16 %v2280, %v2278
        %v2341 = vpack.c.b16 %v2281, %v2279
        %v2342 = vpack.c.b16 %v2284, %v2282
        %v2343 = vpack.c.b16 %v2285, %v2283
        %v2344 = vpack.c.b16 %v2288, %v2286
        %v2345 = vpack.c.b16 %v2289, %v2287
        %v2346 = vpack.c.b16 %v2292, %v2290
        %v2347 = vpack.c.b16 %v2293, %v2291
        %v2348 = vpack.c.b16 %v2296, %v2294
        %v2349 = vpack.c.b16 %v2297, %v2295
        %v2350 = vpack.c.b16 %v2300, %v2298
        %v2351 = vpack.c.b16 %v2301, %v2299
        %v2352 = vpack.c.b16 %v2304, %v2302
        %v2353 = vpack.c.b16 %v2305, %v2303
        %v2354 = vpack.c.b16 %v2308, %v2306
        %v2355 = vpack.c.b16 %v2309, %v2307
        %v2356 = vpack.c.b16 %v2312, %v2310
        %v2357 = vpack.c.b16 %v2313, %v2311
        %v2358 = vpack.c.b16 %v2316, %v2314
        %v2359 = vpack.c.b16 %v2317, %v2315
        %v2360 = vpack.c.b16 %v2320, %v2318
        %v2361 = vpack.c.b16 %v2321, %v2319
        %v2362 = vpack.c.b16 %v2324, %v2322
        %v2363 = vpack.c.b16 %v2325, %v2323
        %v2364 = vpack.c.b16 %v2328, %v2326
        %v2365 = vpack.c.b16 %v2329, %v2327
        %v2366 = vpack.c.b16 %v2332, %v2330
        %v2367 = vpack.c.b16 %v2333, %v2331
        %v2368 = vpack.c.b16 %v2336, %v2334
        %v2369 = vpack.c.b16 %v2337, %v2335
        %2402 = vmatprep.subr.bf16.mxu0 %v2353
        %2403 = vmatpush1.bf16.msra.mxu0 %v2352
        %2404 = vmatprep.subr.bf16.mxu0 %v2351
        %2405 = vmatpush1.bf16.msra.mxu0 %v2350
        %2406 = vmatprep.subr.bf16.mxu0 %v2349
        %2407 = vmatpush1.bf16.msra.mxu0 %v2348
        %2408 = vmatprep.subr.bf16.mxu0 %v2347
        %2409 = vmatpush1.bf16.msra.mxu0 %v2346
        %2410 = vmatprep.subr.bf16.mxu0 %v2345
        %2411 = vmatpush1.bf16.msra.mxu0 %v2344
        %2412 = vmatprep.subr.bf16.mxu0 %v2343
        %2413 = vmatpush1.bf16.msra.mxu0 %v2342
        %2414 = vmatprep.subr.bf16.mxu0 %v2341
        %2415 = vmatpush1.bf16.msra.mxu0 %v2340
        %2416 = vmatprep.subr.bf16.mxu0 %v2339
        %2417 = vmatpush1.bf16.msra.mxu0 %v2338
        %2418 = vmatprep.subr.bf16.mxu0 %v2369
        %2419 = vmatpush2.bf16.msra.mxu0 %v2368
        %2420 = vmatprep.subr.bf16.mxu0 %v2367
        %2421 = vmatpush2.bf16.msra.mxu0 %v2366
        %2422 = vmatprep.subr.bf16.mxu0 %v2365
        %2423 = vmatpush2.bf16.msra.mxu0 %v2364
        %2424 = vmatprep.subr.bf16.mxu0 %v2363
        %2425 = vmatpush2.bf16.msra.mxu0 %v2362
        %2426 = vmatprep.subr.bf16.mxu0 %v2361
        %2427 = vmatpush2.bf16.msra.mxu0 %v2360
        %2428 = vmatprep.subr.bf16.mxu0 %v2359
        %2429 = vmatpush2.bf16.msra.mxu0 %v2358
        %2430 = vmatprep.subr.bf16.mxu0 %v2357
        %2431 = vmatpush2.bf16.msra.mxu0 %v2356
        %2432 = vmatprep.subr.bf16.mxu0 %v2355
        %2433 = vmatpush2.bf16.msra.mxu0 %v2354
        %2434 = vmatprep.mubr.bf16.mxu0 %v2197
        %2435 = vmatmul.mubr.bf16.gmra.mxu0 %v2196
        %v2436 = vpop.f32.mrf.mxu0
        %v2437 = vadd.f32 %v2235, %v2436
        %v2438 = vpop.f32.mrf.mxu0
        %v2439 = vadd.f32 %v2239, %v2438
        %v2440 = vpop.f32.mrf.mxu0
        %v2441 = vpop.f32.mrf.mxu0
        %2442 = vdwg.mxu0
        %v2443 = vld [vmem:[%s837] sm:$0xff]
        %v2444 = vld [vmem:[%s837 + $0x8] sm:$0xff]
        %v2445 = vpack.c.bf16 %v2443, %v2443
        %v2446 = vpack.c.bf16 %v2444, %v2444
        %v2447 = vld [vmem:[#allocation17] sm:$0xff]
        %v2448 = vld [vmem:[#allocation17 + $0x8] sm:$0xff]
        %v2449 = vld [vmem:[#allocation17 + $0x10] sm:$0xff]
        %v2450 = vld [vmem:[#allocation17 + $0x18] sm:$0xff]
        %v2451 = vld [vmem:[#allocation17 + $0x20] sm:$0xff]
        %v2452 = vld [vmem:[#allocation17 + $0x28] sm:$0xff]
        %v2453 = vld [vmem:[#allocation17 + $0x30] sm:$0xff]
        %v2454 = vld [vmem:[#allocation17 + $0x38] sm:$0xff]
        %v2455 = vld [vmem:[#allocation17 + $0x40] sm:$0xff]
        %v2456 = vld [vmem:[#allocation17 + $0x48] sm:$0xff]
        %v2457 = vld [vmem:[#allocation17 + $0x50] sm:$0xff]
        %v2458 = vld [vmem:[#allocation17 + $0x58] sm:$0xff]
        %v2459 = vld [vmem:[#allocation17 + $0x60] sm:$0xff]
        %v2460 = vld [vmem:[#allocation17 + $0x68] sm:$0xff]
        %v2461 = vld [vmem:[#allocation17 + $0x70] sm:$0xff]
        %v2462 = vld [vmem:[#allocation17 + $0x78] sm:$0xff]
        %v2463 = vld [vmem:[#allocation17 + $0x80] sm:$0xff]
        %v2464 = vld [vmem:[#allocation17 + $0x88] sm:$0xff]
        %v2465 = vld [vmem:[#allocation17 + $0x90] sm:$0xff]
        %v2466 = vld [vmem:[#allocation17 + $0x98] sm:$0xff]
        %v2467 = vld [vmem:[#allocation17 + $0xa0] sm:$0xff]
        %v2468 = vld [vmem:[#allocation17 + $0xa8] sm:$0xff]
        %v2469 = vld [vmem:[#allocation17 + $0xb0] sm:$0xff]
        %v2470 = vld [vmem:[#allocation17 + $0xb8] sm:$0xff]
        %v2471 = vld [vmem:[#allocation17 + $0xc0] sm:$0xff]
        %v2472 = vld [vmem:[#allocation17 + $0xc8] sm:$0xff]
        %v2473 = vld [vmem:[#allocation17 + $0xd0] sm:$0xff]
        %v2474 = vld [vmem:[#allocation17 + $0xd8] sm:$0xff]
        %v2475 = vld [vmem:[#allocation17 + $0xe0] sm:$0xff]
        %v2476 = vld [vmem:[#allocation17 + $0xe8] sm:$0xff]
        %v2477 = vld [vmem:[#allocation17 + $0xf0] sm:$0xff]
        %v2478 = vld [vmem:[#allocation17 + $0xf8] sm:$0xff]
        %v2479 = vld [vmem:[#allocation17 + $0x100] sm:$0xff]
        %v2480 = vld [vmem:[#allocation17 + $0x108] sm:$0xff]
        %v2481 = vld [vmem:[#allocation17 + $0x110] sm:$0xff]
        %v2482 = vld [vmem:[#allocation17 + $0x118] sm:$0xff]
        %v2483 = vld [vmem:[#allocation17 + $0x120] sm:$0xff]
        %v2484 = vld [vmem:[#allocation17 + $0x128] sm:$0xff]
        %v2485 = vld [vmem:[#allocation17 + $0x130] sm:$0xff]
        %v2486 = vld [vmem:[#allocation17 + $0x138] sm:$0xff]
        %v2487 = vld [vmem:[#allocation17 + $0x140] sm:$0xff]
        %v2488 = vld [vmem:[#allocation17 + $0x148] sm:$0xff]
        %v2489 = vld [vmem:[#allocation17 + $0x150] sm:$0xff]
        %v2490 = vld [vmem:[#allocation17 + $0x158] sm:$0xff]
        %v2491 = vld [vmem:[#allocation17 + $0x160] sm:$0xff]
        %v2492 = vld [vmem:[#allocation17 + $0x168] sm:$0xff]
        %v2493 = vld [vmem:[#allocation17 + $0x170] sm:$0xff]
        %v2494 = vld [vmem:[#allocation17 + $0x178] sm:$0xff]
        %v2495 = vld [vmem:[#allocation17 + $0x180] sm:$0xff]
        %v2496 = vld [vmem:[#allocation17 + $0x188] sm:$0xff]
        %v2497 = vld [vmem:[#allocation17 + $0x190] sm:$0xff]
        %v2498 = vld [vmem:[#allocation17 + $0x198] sm:$0xff]
        %v2499 = vld [vmem:[#allocation17 + $0x1a0] sm:$0xff]
        %v2500 = vld [vmem:[#allocation17 + $0x1a8] sm:$0xff]
        %v2501 = vld [vmem:[#allocation17 + $0x1b0] sm:$0xff]
        %v2502 = vld [vmem:[#allocation17 + $0x1b8] sm:$0xff]
        %v2503 = vld [vmem:[#allocation17 + $0x1c0] sm:$0xff]
        %v2504 = vld [vmem:[#allocation17 + $0x1c8] sm:$0xff]
        %v2505 = vld [vmem:[#allocation17 + $0x1d0] sm:$0xff]
        %v2506 = vld [vmem:[#allocation17 + $0x1d8] sm:$0xff]
        %v2507 = vld [vmem:[#allocation17 + $0x1e0] sm:$0xff]
        %v2508 = vld [vmem:[#allocation17 + $0x1e8] sm:$0xff]
        %v2509 = vld [vmem:[#allocation17 + $0x1f0] sm:$0xff]
        %v2510 = vld [vmem:[#allocation17 + $0x1f8] sm:$0xff]
        %v2511 = vld [vmem:[%s12] sm:$0xf]
        %v2513 = vlaneseq
        %v2514 = vshrl.u32 %v2513, 7
        %v2515 = vsub.s32 0, %v2514
        %v2516 = vrot.slane %v2511, %v2515
        %v2517 = vlaneseq
        %v2518 = vshrl.u32 %v2517, 7
        %v2519 = vsub.s32 1, %v2518
        %v2520 = vrot.slane %v2511, %v2519
        %v2521 = vlaneseq
        %v2522 = vshrl.u32 %v2521, 7
        %v2523 = vsub.s32 2, %v2522
        %v2524 = vrot.slane %v2511, %v2523
        %v2525 = vlaneseq
        %v2526 = vshrl.u32 %v2525, 7
        %v2527 = vsub.s32 3, %v2526
        %v2528 = vrot.slane %v2511, %v2527
        %v2597 = vunpack.c.l.b16 %v2447
        %v2598 = vunpack.c.h.b16 %v2447
        %v2599 = vunpack.c.l.b16 %v2448
        %v2600 = vunpack.c.h.b16 %v2448
        %v2601 = vunpack.c.l.b16 %v2449
        %v2602 = vunpack.c.h.b16 %v2449
        %v2603 = vunpack.c.l.b16 %v2450
        %v2604 = vunpack.c.h.b16 %v2450
        %v2605 = vunpack.c.l.b16 %v2451
        %v2606 = vunpack.c.h.b16 %v2451
        %v2607 = vunpack.c.l.b16 %v2452
        %v2608 = vunpack.c.h.b16 %v2452
        %v2609 = vunpack.c.l.b16 %v2453
        %v2610 = vunpack.c.h.b16 %v2453
        %v2611 = vunpack.c.l.b16 %v2454
        %v2612 = vunpack.c.h.b16 %v2454
        %v2613 = vunpack.c.l.b16 %v2455
        %v2614 = vunpack.c.h.b16 %v2455
        %v2615 = vunpack.c.l.b16 %v2456
        %v2616 = vunpack.c.h.b16 %v2456
        %v2617 = vunpack.c.l.b16 %v2457
        %v2618 = vunpack.c.h.b16 %v2457
        %v2619 = vunpack.c.l.b16 %v2458
        %v2620 = vunpack.c.h.b16 %v2458
        %v2621 = vunpack.c.l.b16 %v2459
        %v2622 = vunpack.c.h.b16 %v2459
        %v2623 = vunpack.c.l.b16 %v2460
        %v2624 = vunpack.c.h.b16 %v2460
        %v2625 = vunpack.c.l.b16 %v2461
        %v2626 = vunpack.c.h.b16 %v2461
        %v2627 = vunpack.c.l.b16 %v2462
        %v2628 = vunpack.c.h.b16 %v2462
        %v2629 = vunpack.c.l.b16 %v2463
        %v2630 = vunpack.c.h.b16 %v2463
        %v2631 = vunpack.c.l.b16 %v2464
        %v2632 = vunpack.c.h.b16 %v2464
        %v2633 = vunpack.c.l.b16 %v2465
        %v2634 = vunpack.c.h.b16 %v2465
        %v2635 = vunpack.c.l.b16 %v2466
        %v2636 = vunpack.c.h.b16 %v2466
        %v2637 = vunpack.c.l.b16 %v2467
        %v2638 = vunpack.c.h.b16 %v2467
        %v2639 = vunpack.c.l.b16 %v2468
        %v2640 = vunpack.c.h.b16 %v2468
        %v2641 = vunpack.c.l.b16 %v2469
        %v2642 = vunpack.c.h.b16 %v2469
        %v2643 = vunpack.c.l.b16 %v2470
        %v2644 = vunpack.c.h.b16 %v2470
        %v2645 = vunpack.c.l.b16 %v2471
        %v2646 = vunpack.c.h.b16 %v2471
        %v2647 = vunpack.c.l.b16 %v2472
        %v2648 = vunpack.c.h.b16 %v2472
        %v2649 = vunpack.c.l.b16 %v2473
        %v2650 = vunpack.c.h.b16 %v2473
        %v2651 = vunpack.c.l.b16 %v2474
        %v2652 = vunpack.c.h.b16 %v2474
        %v2653 = vunpack.c.l.b16 %v2475
        %v2654 = vunpack.c.h.b16 %v2475
        %v2655 = vunpack.c.l.b16 %v2476
        %v2656 = vunpack.c.h.b16 %v2476
        %v2657 = vunpack.c.l.b16 %v2477
        %v2658 = vunpack.c.h.b16 %v2477
        %v2659 = vunpack.c.l.b16 %v2478
        %v2660 = vunpack.c.h.b16 %v2478
        %v2661 = vunpack.c.l.b16 %v2479
        %v2662 = vunpack.c.h.b16 %v2479
        %v2663 = vunpack.c.l.b16 %v2480
        %v2664 = vunpack.c.h.b16 %v2480
        %v2665 = vunpack.c.l.b16 %v2481
        %v2666 = vunpack.c.h.b16 %v2481
        %v2667 = vunpack.c.l.b16 %v2482
        %v2668 = vunpack.c.h.b16 %v2482
        %v2669 = vunpack.c.l.b16 %v2483
        %v2670 = vunpack.c.h.b16 %v2483
        %v2671 = vunpack.c.l.b16 %v2484
        %v2672 = vunpack.c.h.b16 %v2484
        %v2673 = vunpack.c.l.b16 %v2485
        %v2674 = vunpack.c.h.b16 %v2485
        %v2675 = vunpack.c.l.b16 %v2486
        %v2676 = vunpack.c.h.b16 %v2486
        %v2677 = vunpack.c.l.b16 %v2487
        %v2678 = vunpack.c.h.b16 %v2487
        %v2679 = vunpack.c.l.b16 %v2488
        %v2680 = vunpack.c.h.b16 %v2488
        %v2681 = vunpack.c.l.b16 %v2489
        %v2682 = vunpack.c.h.b16 %v2489
        %v2683 = vunpack.c.l.b16 %v2490
        %v2684 = vunpack.c.h.b16 %v2490
        %v2685 = vunpack.c.l.b16 %v2491
        %v2686 = vunpack.c.h.b16 %v2491
        %v2687 = vunpack.c.l.b16 %v2492
        %v2688 = vunpack.c.h.b16 %v2492
        %v2689 = vunpack.c.l.b16 %v2493
        %v2690 = vunpack.c.h.b16 %v2493
        %v2691 = vunpack.c.l.b16 %v2494
        %v2692 = vunpack.c.h.b16 %v2494
        %v2693 = vunpack.c.l.b16 %v2495
        %v2694 = vunpack.c.h.b16 %v2495
        %v2695 = vunpack.c.l.b16 %v2496
        %v2696 = vunpack.c.h.b16 %v2496
        %v2697 = vunpack.c.l.b16 %v2497
        %v2698 = vunpack.c.h.b16 %v2497
        %v2699 = vunpack.c.l.b16 %v2498
        %v2700 = vunpack.c.h.b16 %v2498
        %v2701 = vunpack.c.l.b16 %v2499
        %v2702 = vunpack.c.h.b16 %v2499
        %v2703 = vunpack.c.l.b16 %v2500
        %v2704 = vunpack.c.h.b16 %v2500
        %v2705 = vunpack.c.l.b16 %v2501
        %v2706 = vunpack.c.h.b16 %v2501
        %v2707 = vunpack.c.l.b16 %v2502
        %v2708 = vunpack.c.h.b16 %v2502
        %v2709 = vunpack.c.l.b16 %v2503
        %v2710 = vunpack.c.h.b16 %v2503
        %v2711 = vunpack.c.l.b16 %v2504
        %v2712 = vunpack.c.h.b16 %v2504
        %v2713 = vunpack.c.l.b16 %v2505
        %v2714 = vunpack.c.h.b16 %v2505
        %v2715 = vunpack.c.l.b16 %v2506
        %v2716 = vunpack.c.h.b16 %v2506
        %v2717 = vunpack.c.l.b16 %v2507
        %v2718 = vunpack.c.h.b16 %v2507
        %v2719 = vunpack.c.l.b16 %v2508
        %v2720 = vunpack.c.h.b16 %v2508
        %v2721 = vunpack.c.l.b16 %v2509
        %v2722 = vunpack.c.h.b16 %v2509
        %v2723 = vunpack.c.l.b16 %v2510
        %v2724 = vunpack.c.h.b16 %v2510
        %v2725 = vpack.c.b16 %v2601, %v2597
        %v2726 = vpack.c.b16 %v2602, %v2598
        %v2727 = vpack.c.b16 %v2603, %v2599
        %v2728 = vpack.c.b16 %v2604, %v2600
        %v2729 = vpack.c.b16 %v2609, %v2605
        %v2730 = vpack.c.b16 %v2610, %v2606
        %v2731 = vpack.c.b16 %v2611, %v2607
        %v2732 = vpack.c.b16 %v2612, %v2608
        %v2733 = vpack.c.b16 %v2617, %v2613
        %v2734 = vpack.c.b16 %v2618, %v2614
        %v2735 = vpack.c.b16 %v2619, %v2615
        %v2736 = vpack.c.b16 %v2620, %v2616
        %v2737 = vpack.c.b16 %v2625, %v2621
        %v2738 = vpack.c.b16 %v2626, %v2622
        %v2739 = vpack.c.b16 %v2627, %v2623
        %v2740 = vpack.c.b16 %v2628, %v2624
        %v2741 = vpack.c.b16 %v2633, %v2629
        %v2742 = vpack.c.b16 %v2634, %v2630
        %v2743 = vpack.c.b16 %v2635, %v2631
        %v2744 = vpack.c.b16 %v2636, %v2632
        %v2745 = vpack.c.b16 %v2641, %v2637
        %v2746 = vpack.c.b16 %v2642, %v2638
        %v2747 = vpack.c.b16 %v2643, %v2639
        %v2748 = vpack.c.b16 %v2644, %v2640
        %v2749 = vpack.c.b16 %v2649, %v2645
        %v2750 = vpack.c.b16 %v2650, %v2646
        %v2751 = vpack.c.b16 %v2651, %v2647
        %v2752 = vpack.c.b16 %v2652, %v2648
        %v2753 = vpack.c.b16 %v2657, %v2653
        %v2754 = vpack.c.b16 %v2658, %v2654
        %v2755 = vpack.c.b16 %v2659, %v2655
        %v2756 = vpack.c.b16 %v2660, %v2656
        %v2757 = vpack.c.b16 %v2665, %v2661
        %v2758 = vpack.c.b16 %v2666, %v2662
        %v2759 = vpack.c.b16 %v2667, %v2663
        %v2760 = vpack.c.b16 %v2668, %v2664
        %v2761 = vpack.c.b16 %v2673, %v2669
        %v2762 = vpack.c.b16 %v2674, %v2670
        %v2763 = vpack.c.b16 %v2675, %v2671
        %v2764 = vpack.c.b16 %v2676, %v2672
        %v2765 = vpack.c.b16 %v2681, %v2677
        %v2766 = vpack.c.b16 %v2682, %v2678
        %v2767 = vpack.c.b16 %v2683, %v2679
        %v2768 = vpack.c.b16 %v2684, %v2680
        %v2769 = vpack.c.b16 %v2689, %v2685
        %v2770 = vpack.c.b16 %v2690, %v2686
        %v2771 = vpack.c.b16 %v2691, %v2687
        %v2772 = vpack.c.b16 %v2692, %v2688
        %v2773 = vpack.c.b16 %v2697, %v2693
        %v2774 = vpack.c.b16 %v2698, %v2694
        %v2775 = vpack.c.b16 %v2699, %v2695
        %v2776 = vpack.c.b16 %v2700, %v2696
        %v2777 = vpack.c.b16 %v2705, %v2701
        %v2778 = vpack.c.b16 %v2706, %v2702
        %v2779 = vpack.c.b16 %v2707, %v2703
        %v2780 = vpack.c.b16 %v2708, %v2704
        %v2781 = vpack.c.b16 %v2713, %v2709
        %v2782 = vpack.c.b16 %v2714, %v2710
        %v2783 = vpack.c.b16 %v2715, %v2711
        %v2784 = vpack.c.b16 %v2716, %v2712
        %v2785 = vpack.c.b16 %v2721, %v2717
        %v2786 = vpack.c.b16 %v2722, %v2718
        %v2787 = vpack.c.b16 %v2723, %v2719
        %v2788 = vpack.c.b16 %v2724, %v2720
        %2853 = vmatprep.subr.bf16.mxu0 %v2754
        %2854 = vmatpush1.bf16.msra.mxu0 %v2753
        %2855 = vmatprep.subr.bf16.mxu0 %v2750
        %2856 = vmatpush1.bf16.msra.mxu0 %v2749
        %2857 = vmatprep.subr.bf16.mxu0 %v2746
        %2858 = vmatpush1.bf16.msra.mxu0 %v2745
        %2859 = vmatprep.subr.bf16.mxu0 %v2742
        %2860 = vmatpush1.bf16.msra.mxu0 %v2741
        %2861 = vmatprep.subr.bf16.mxu0 %v2738
        %2862 = vmatpush1.bf16.msra.mxu0 %v2737
        %2863 = vmatprep.subr.bf16.mxu0 %v2734
        %2864 = vmatpush1.bf16.msra.mxu0 %v2733
        %2865 = vmatprep.subr.bf16.mxu0 %v2730
        %2866 = vmatpush1.bf16.msra.mxu0 %v2729
        %2867 = vmatprep.subr.bf16.mxu0 %v2726
        %2868 = vmatpush1.bf16.msra.mxu0 %v2725
        %2869 = vmatprep.subr.bf16.mxu0 %v2786
        %2870 = vmatpush2.bf16.msra.mxu0 %v2785
        %2871 = vmatprep.subr.bf16.mxu0 %v2782
        %2872 = vmatpush2.bf16.msra.mxu0 %v2781
        %2873 = vmatprep.subr.bf16.mxu0 %v2778
        %2874 = vmatpush2.bf16.msra.mxu0 %v2777
        %2875 = vmatprep.subr.bf16.mxu0 %v2774
        %2876 = vmatpush2.bf16.msra.mxu0 %v2773
        %2877 = vmatprep.subr.bf16.mxu0 %v2770
        %2878 = vmatpush2.bf16.msra.mxu0 %v2769
        %2879 = vmatprep.subr.bf16.mxu0 %v2766
        %2880 = vmatpush2.bf16.msra.mxu0 %v2765
        %2881 = vmatprep.subr.bf16.mxu0 %v2762
        %2882 = vmatpush2.bf16.msra.mxu0 %v2761
        %2883 = vmatprep.subr.bf16.mxu0 %v2758
        %2884 = vmatpush2.bf16.msra.mxu0 %v2757
        %2885 = vmatprep.mubr.bf16.mxu0 %v2446
        %2886 = vmatmul.mubr.bf16.gmra.mxu0 %v2445
        %v2887 = vpop.f32.mrf.mxu0
        %v2888 = vadd.f32 %v2516, %v2887
        %v2889 = vpop.f32.mrf.mxu0
        %v2890 = vadd.f32 %v2520, %v2889
        %v2891 = vpop.f32.mrf.mxu0
        %v2892 = vpop.f32.mrf.mxu0
        %2893 = vdwg.mxu0
        %2894 = vmatprep.subr.bf16.mxu0 %v2756
        %2895 = vmatpush1.bf16.msra.mxu0 %v2755
        %2896 = vmatprep.subr.bf16.mxu0 %v2752
        %2897 = vmatpush1.bf16.msra.mxu0 %v2751
        %2898 = vmatprep.subr.bf16.mxu0 %v2748
        %2899 = vmatpush1.bf16.msra.mxu0 %v2747
        %2900 = vmatprep.subr.bf16.mxu0 %v2744
        %2901 = vmatpush1.bf16.msra.mxu0 %v2743
        %2902 = vmatprep.subr.bf16.mxu0 %v2740
        %2903 = vmatpush1.bf16.msra.mxu0 %v2739
        %2904 = vmatprep.subr.bf16.mxu0 %v2736
        %2905 = vmatpush1.bf16.msra.mxu0 %v2735
        %2906 = vmatprep.subr.bf16.mxu0 %v2732
        %2907 = vmatpush1.bf16.msra.mxu0 %v2731
        %2908 = vmatprep.subr.bf16.mxu0 %v2728
        %2909 = vmatpush1.bf16.msra.mxu0 %v2727
        %2910 = vmatprep.subr.bf16.mxu0 %v2788
        %2911 = vmatpush2.bf16.msra.mxu0 %v2787
        %2912 = vmatprep.subr.bf16.mxu0 %v2784
        %2913 = vmatpush2.bf16.msra.mxu0 %v2783
        %2914 = vmatprep.subr.bf16.mxu0 %v2780
        %2915 = vmatpush2.bf16.msra.mxu0 %v2779
        %2916 = vmatprep.subr.bf16.mxu0 %v2776
        %2917 = vmatpush2.bf16.msra.mxu0 %v2775
        %2918 = vmatprep.subr.bf16.mxu0 %v2772
        %2919 = vmatpush2.bf16.msra.mxu0 %v2771
        %2920 = vmatprep.subr.bf16.mxu0 %v2768
        %2921 = vmatpush2.bf16.msra.mxu0 %v2767
        %2922 = vmatprep.subr.bf16.mxu0 %v2764
        %2923 = vmatpush2.bf16.msra.mxu0 %v2763
        %2924 = vmatprep.subr.bf16.mxu0 %v2760
        %2925 = vmatpush2.bf16.msra.mxu0 %v2759
        %2926 = vmatprep.mubr.bf16.mxu0 %v2446
        %2927 = vmatmul.mubr.bf16.gmra.mxu0 %v2445
        %v2928 = vpop.f32.mrf.mxu0
        %v2929 = vadd.f32 %v2524, %v2928
        %v2930 = vpop.f32.mrf.mxu0
        %v2931 = vadd.f32 %v2528, %v2930
        %v2932 = vpop.f32.mrf.mxu0
        %v2933 = vpop.f32.mrf.mxu0
        %2934 = vdwg.mxu0
        %v2935 = vpack.c.bf16 %v2888, %v2888
        %v2936 = vpack.c.bf16 %v2890, %v2890
        %v2937 = vpack.c.bf16 %v2929, %v2929
        %v2938 = vpack.c.bf16 %v2931, %v2931
        %v2939 = vmul.f32 %v2437, 0.088388346
        %v2940 = vmul.f32 %v2439, 0.088388346
        %v2941 = vpack.c.bf16 %v2939, %v2939
        %v2942 = vpack.c.bf16 %v2940, %v2940
        %2943 = vmatprep.subr.bf16.mxu0 0
        %2944 = vmatpush1.bf16.xpose.msra.mxu0 0
        %2945 = vmatprep.subr.bf16.mxu0 0
        %2946 = vmatpush1.bf16.xpose.msra.mxu0 0
        %2947 = vmatprep.subr.bf16.mxu0 0
        %2948 = vmatpush1.bf16.xpose.msra.mxu0 0
        %2949 = vmatprep.subr.bf16.mxu0 0
        %2950 = vmatpush1.bf16.xpose.msra.mxu0 0
        %2951 = vmatprep.subr.bf16.mxu0 0
        %2952 = vmatpush1.bf16.xpose.msra.mxu0 0
        %2953 = vmatprep.subr.bf16.mxu0 0
        %2954 = vmatpush1.bf16.xpose.msra.mxu0 0
        %2955 = vmatprep.subr.bf16.mxu0 0
        %2956 = vmatpush1.bf16.xpose.msra.mxu0 0
        %2957 = vmatprep.subr.bf16.mxu0 0
        %2958 = vmatpush1.bf16.xpose.msra.mxu0 %v2935
        %2959 = vmatprep.subr.bf16.mxu0 0
        %2960 = vmatpush2.bf16.xpose.msra.mxu0 0
        %2961 = vmatprep.subr.bf16.mxu0 0
        %2962 = vmatpush2.bf16.xpose.msra.mxu0 0
        %2963 = vmatprep.subr.bf16.mxu0 0
        %2964 = vmatpush2.bf16.xpose.msra.mxu0 0
        %2965 = vmatprep.subr.bf16.mxu0 0
        %2966 = vmatpush2.bf16.xpose.msra.mxu0 0
        %2967 = vmatprep.subr.bf16.mxu0 0
        %2968 = vmatpush2.bf16.xpose.msra.mxu0 0
        %2969 = vmatprep.subr.bf16.mxu0 0
        %2970 = vmatpush2.bf16.xpose.msra.mxu0 0
        %2971 = vmatprep.subr.bf16.mxu0 0
        %2972 = vmatpush2.bf16.xpose.msra.mxu0 0
        %2973 = vmatprep.subr.bf16.mxu0 0
        %2974 = vmatpush2.bf16.xpose.msra.mxu0 0
        %2975 = vmatprep.mubr.bf16.mxu0 0
        %2976 = vmatmul.mubr.bf16.gmra.mxu0 %v2941
        %v2977 = vpop.f32.mrf.mxu0
        %v2978 = vadd.f32 0.0, %v2977
        %v2979 = vpop.f32.mrf.mxu0
        %v2980 = vpop.f32.mrf.mxu0
        %v2981 = vpop.f32.mrf.mxu0
        %2982 = vdwg.mxu0
        %v2983 = vsel %vm1744, %v2978, -inf
        %2984 = vmax.xlane.f32.xlu0 %v2983
        %v2985 = vpop.xlane.xlu0 %2984
        %v2986 = vsub.f32 %v2978, %v2985
        %v2987 = vmul.f32 %v2986, 1.442695
        %v2988 = vpow.pop %v2987
        %v2989 = vsel %vm1744, %v2988, 0.0
        %2990 = vadd.xlane.f32.xlu0 %v2989
        %v2991 = vpop.xlane.xlu0 %2990
        %v2992 = vrcp.pop %v2991
        %v2993 = vmul.f32 %v2988, %v2992
        %v2994 = vpack.c.bf16 %v2993, %v2993
        %v2996 = vsel %vm1744, %v2994, 0
        %v2999 = vsel %vm1760, %v2937, 0
        %3001 = vmatprep.subr.bf16.mxu0 0
        %3002 = vmatpush1.bf16.msra.mxu0 0
        %3003 = vmatprep.subr.bf16.mxu0 0
        %3004 = vmatpush1.bf16.msra.mxu0 0
        %3005 = vmatprep.subr.bf16.mxu0 0
        %3006 = vmatpush1.bf16.msra.mxu0 0
        %3007 = vmatprep.subr.bf16.mxu0 0
        %3008 = vmatpush1.bf16.msra.mxu0 0
        %3009 = vmatprep.subr.bf16.mxu0 0
        %3010 = vmatpush1.bf16.msra.mxu0 0
        %3011 = vmatprep.subr.bf16.mxu0 0
        %3012 = vmatpush1.bf16.msra.mxu0 0
        %3013 = vmatprep.subr.bf16.mxu0 0
        %3014 = vmatpush1.bf16.msra.mxu0 0
        %3015 = vmatprep.subr.bf16.mxu0 0
        %3016 = vmatpush1.bf16.msra.mxu0 %v2999
        %3017 = vmatprep.subr.bf16.mxu0 0
        %3018 = vmatpush2.bf16.msra.mxu0 0
        %3019 = vmatprep.subr.bf16.mxu0 0
        %3020 = vmatpush2.bf16.msra.mxu0 0
        %3021 = vmatprep.subr.bf16.mxu0 0
        %3022 = vmatpush2.bf16.msra.mxu0 0
        %3023 = vmatprep.subr.bf16.mxu0 0
        %3024 = vmatpush2.bf16.msra.mxu0 0
        %3025 = vmatprep.subr.bf16.mxu0 0
        %3026 = vmatpush2.bf16.msra.mxu0 0
        %3027 = vmatprep.subr.bf16.mxu0 0
        %3028 = vmatpush2.bf16.msra.mxu0 0
        %3029 = vmatprep.subr.bf16.mxu0 0
        %3030 = vmatpush2.bf16.msra.mxu0 0
        %3031 = vmatprep.subr.bf16.mxu0 0
        %3032 = vmatpush2.bf16.msra.mxu0 0
        %3033 = vmatprep.mubr.bf16.mxu0 0
        %3034 = vmatmul.mubr.bf16.gmra.mxu0 %v2996
        %v3035 = vpop.f32.mrf.mxu0
        %v3036 = vadd.f32 0.0, %v3035
        %v3037 = vpop.f32.mrf.mxu0
        %v3038 = vpop.f32.mrf.mxu0
        %v3039 = vpop.f32.mrf.mxu0
        %3040 = vdwg.mxu0
        %3041 = vmatprep.subr.bf16.mxu0 0
        %3042 = vmatpush1.bf16.xpose.msra.mxu0 0
        %3043 = vmatprep.subr.bf16.mxu0 0
        %3044 = vmatpush1.bf16.xpose.msra.mxu0 0
        %3045 = vmatprep.subr.bf16.mxu0 0
        %3046 = vmatpush1.bf16.xpose.msra.mxu0 0
        %3047 = vmatprep.subr.bf16.mxu0 0
        %3048 = vmatpush1.bf16.xpose.msra.mxu0 0
        %3049 = vmatprep.subr.bf16.mxu0 0
        %3050 = vmatpush1.bf16.xpose.msra.mxu0 0
        %3051 = vmatprep.subr.bf16.mxu0 0
        %3052 = vmatpush1.bf16.xpose.msra.mxu0 0
        %3053 = vmatprep.subr.bf16.mxu0 0
        %3054 = vmatpush1.bf16.xpose.msra.mxu0 0
        %3055 = vmatprep.subr.bf16.mxu0 0
        %3056 = vmatpush1.bf16.xpose.msra.mxu0 %v2936
        %3057 = vmatprep.subr.bf16.mxu0 0
        %3058 = vmatpush2.bf16.xpose.msra.mxu0 0
        %3059 = vmatprep.subr.bf16.mxu0 0
        %3060 = vmatpush2.bf16.xpose.msra.mxu0 0
        %3061 = vmatprep.subr.bf16.mxu0 0
        %3062 = vmatpush2.bf16.xpose.msra.mxu0 0
        %3063 = vmatprep.subr.bf16.mxu0 0
        %3064 = vmatpush2.bf16.xpose.msra.mxu0 0
        %3065 = vmatprep.subr.bf16.mxu0 0
        %3066 = vmatpush2.bf16.xpose.msra.mxu0 0
        %3067 = vmatprep.subr.bf16.mxu0 0
        %3068 = vmatpush2.bf16.xpose.msra.mxu0 0
        %3069 = vmatprep.subr.bf16.mxu0 0
        %3070 = vmatpush2.bf16.xpose.msra.mxu0 0
        %3071 = vmatprep.subr.bf16.mxu0 0
        %3072 = vmatpush2.bf16.xpose.msra.mxu0 0
        %3073 = vmatprep.mubr.bf16.mxu0 0
        %3074 = vmatmul.mubr.bf16.gmra.mxu0 %v2942
        %v3075 = vpop.f32.mrf.mxu0
        %v3076 = vadd.f32 0.0, %v3075
        %v3077 = vpop.f32.mrf.mxu0
        %v3078 = vpop.f32.mrf.mxu0
        %v3079 = vpop.f32.mrf.mxu0
        %3080 = vdwg.mxu0
        %v3081 = vsel %vm1744, %v3076, -inf
        %3082 = vmax.xlane.f32.xlu0 %v3081
        %v3083 = vpop.xlane.xlu0 %3082
        %v3084 = vsub.f32 %v3076, %v3083
        %v3085 = vmul.f32 %v3084, 1.442695
        %v3086 = vpow.pop %v3085
        %v3087 = vsel %vm1744, %v3086, 0.0
        %3088 = vadd.xlane.f32.xlu0 %v3087
        %v3089 = vpop.xlane.xlu0 %3088
        %v3090 = vrcp.pop %v3089
        %v3091 = vmul.f32 %v3086, %v3090
        %v3092 = vpack.c.bf16 %v3091, %v3091
        %v3094 = vsel %vm1744, %v3092, 0
        %v3097 = vsel %vm1760, %v2938, 0
        %3099 = vmatprep.subr.bf16.mxu0 0
        %3100 = vmatpush1.bf16.msra.mxu0 0
        %3101 = vmatprep.subr.bf16.mxu0 0
        %3102 = vmatpush1.bf16.msra.mxu0 0
        %3103 = vmatprep.subr.bf16.mxu0 0
        %3104 = vmatpush1.bf16.msra.mxu0 0
        %3105 = vmatprep.subr.bf16.mxu0 0
        %3106 = vmatpush1.bf16.msra.mxu0 0
        %3107 = vmatprep.subr.bf16.mxu0 0
        %3108 = vmatpush1.bf16.msra.mxu0 0
        %3109 = vmatprep.subr.bf16.mxu0 0
        %3110 = vmatpush1.bf16.msra.mxu0 0
        %3111 = vmatprep.subr.bf16.mxu0 0
        %3112 = vmatpush1.bf16.msra.mxu0 0
        %3113 = vmatprep.subr.bf16.mxu0 0
        %3114 = vmatpush1.bf16.msra.mxu0 %v3097
        %3115 = vmatprep.subr.bf16.mxu0 0
        %3116 = vmatpush2.bf16.msra.mxu0 0
        %3117 = vmatprep.subr.bf16.mxu0 0
        %3118 = vmatpush2.bf16.msra.mxu0 0
        %3119 = vmatprep.subr.bf16.mxu0 0
        %3120 = vmatpush2.bf16.msra.mxu0 0
        %3121 = vmatprep.subr.bf16.mxu0 0
        %3122 = vmatpush2.bf16.msra.mxu0 0
        %3123 = vmatprep.subr.bf16.mxu0 0
        %3124 = vmatpush2.bf16.msra.mxu0 0
        %3125 = vmatprep.subr.bf16.mxu0 0
        %3126 = vmatpush2.bf16.msra.mxu0 0
        %3127 = vmatprep.subr.bf16.mxu0 0
        %3128 = vmatpush2.bf16.msra.mxu0 0
        %3129 = vmatprep.subr.bf16.mxu0 0
        %3130 = vmatpush2.bf16.msra.mxu0 0
        %3131 = vmatprep.mubr.bf16.mxu0 0
        %3132 = vmatmul.mubr.bf16.gmra.mxu0 %v3094
        %v3133 = vpop.f32.mrf.mxu0
        %v3134 = vadd.f32 0.0, %v3133
        %v3135 = vpop.f32.mrf.mxu0
        %v3136 = vpop.f32.mrf.mxu0
        %v3137 = vpop.f32.mrf.mxu0
        %3138 = vdwg.mxu0
        %v3139 = vpack.c.bf16 %v3036, %v3036
        %v3140 = vpack.c.bf16 %v3134, %v3134
        %v3141 = vld [vmem:[#allocation18] sm:$0xff]
        %v3142 = vld [vmem:[#allocation18 + $0x8] sm:$0xff]
        %v3143 = vld [vmem:[#allocation18 + $0x10] sm:$0xff]
        %v3144 = vld [vmem:[#allocation18 + $0x18] sm:$0xff]
        %v3145 = vld [vmem:[#allocation18 + $0x20] sm:$0xff]
        %v3146 = vld [vmem:[#allocation18 + $0x28] sm:$0xff]
        %v3147 = vld [vmem:[#allocation18 + $0x30] sm:$0xff]
        %v3148 = vld [vmem:[#allocation18 + $0x38] sm:$0xff]
        %v3149 = vld [vmem:[#allocation18 + $0x40] sm:$0xff]
        %v3150 = vld [vmem:[#allocation18 + $0x48] sm:$0xff]
        %v3151 = vld [vmem:[#allocation18 + $0x50] sm:$0xff]
        %v3152 = vld [vmem:[#allocation18 + $0x58] sm:$0xff]
        %v3153 = vld [vmem:[#allocation18 + $0x60] sm:$0xff]
        %v3154 = vld [vmem:[#allocation18 + $0x68] sm:$0xff]
        %v3155 = vld [vmem:[#allocation18 + $0x70] sm:$0xff]
        %v3156 = vld [vmem:[#allocation18 + $0x78] sm:$0xff]
        %v3157 = vld [vmem:[#allocation18 + $0x80] sm:$0xff]
        %v3158 = vld [vmem:[#allocation18 + $0x88] sm:$0xff]
        %v3159 = vld [vmem:[#allocation18 + $0x90] sm:$0xff]
        %v3160 = vld [vmem:[#allocation18 + $0x98] sm:$0xff]
        %v3161 = vld [vmem:[#allocation18 + $0xa0] sm:$0xff]
        %v3162 = vld [vmem:[#allocation18 + $0xa8] sm:$0xff]
        %v3163 = vld [vmem:[#allocation18 + $0xb0] sm:$0xff]
        %v3164 = vld [vmem:[#allocation18 + $0xb8] sm:$0xff]
        %v3165 = vld [vmem:[#allocation18 + $0xc0] sm:$0xff]
        %v3166 = vld [vmem:[#allocation18 + $0xc8] sm:$0xff]
        %v3167 = vld [vmem:[#allocation18 + $0xd0] sm:$0xff]
        %v3168 = vld [vmem:[#allocation18 + $0xd8] sm:$0xff]
        %v3169 = vld [vmem:[#allocation18 + $0xe0] sm:$0xff]
        %v3170 = vld [vmem:[#allocation18 + $0xe8] sm:$0xff]
        %v3171 = vld [vmem:[#allocation18 + $0xf0] sm:$0xff]
        %v3172 = vld [vmem:[#allocation18 + $0xf8] sm:$0xff]
        %v3173 = vld [vmem:[%s14] sm:$0x3]
        %v3175 = vlaneseq
        %v3176 = vshrl.u32 %v3175, 7
        %v3177 = vsub.s32 0, %v3176
        %v3178 = vrot.slane %v3173, %v3177
        %v3179 = vlaneseq
        %v3180 = vshrl.u32 %v3179, 7
        %v3181 = vsub.s32 1, %v3180
        %v3182 = vrot.slane %v3173, %v3181
        %v3217 = vunpack.c.l.b16 %v3141
        %v3218 = vunpack.c.h.b16 %v3141
        %v3219 = vunpack.c.l.b16 %v3142
        %v3220 = vunpack.c.h.b16 %v3142
        %v3221 = vunpack.c.l.b16 %v3143
        %v3222 = vunpack.c.h.b16 %v3143
        %v3223 = vunpack.c.l.b16 %v3144
        %v3224 = vunpack.c.h.b16 %v3144
        %v3225 = vunpack.c.l.b16 %v3145
        %v3226 = vunpack.c.h.b16 %v3145
        %v3227 = vunpack.c.l.b16 %v3146
        %v3228 = vunpack.c.h.b16 %v3146
        %v3229 = vunpack.c.l.b16 %v3147
        %v3230 = vunpack.c.h.b16 %v3147
        %v3231 = vunpack.c.l.b16 %v3148
        %v3232 = vunpack.c.h.b16 %v3148
        %v3233 = vunpack.c.l.b16 %v3149
        %v3234 = vunpack.c.h.b16 %v3149
        %v3235 = vunpack.c.l.b16 %v3150
        %v3236 = vunpack.c.h.b16 %v3150
        %v3237 = vunpack.c.l.b16 %v3151
        %v3238 = vunpack.c.h.b16 %v3151
        %v3239 = vunpack.c.l.b16 %v3152
        %v3240 = vunpack.c.h.b16 %v3152
        %v3241 = vunpack.c.l.b16 %v3153
        %v3242 = vunpack.c.h.b16 %v3153
        %v3243 = vunpack.c.l.b16 %v3154
        %v3244 = vunpack.c.h.b16 %v3154
        %v3245 = vunpack.c.l.b16 %v3155
        %v3246 = vunpack.c.h.b16 %v3155
        %v3247 = vunpack.c.l.b16 %v3156
        %v3248 = vunpack.c.h.b16 %v3156
        %v3249 = vunpack.c.l.b16 %v3157
        %v3250 = vunpack.c.h.b16 %v3157
        %v3251 = vunpack.c.l.b16 %v3158
        %v3252 = vunpack.c.h.b16 %v3158
        %v3253 = vunpack.c.l.b16 %v3159
        %v3254 = vunpack.c.h.b16 %v3159
        %v3255 = vunpack.c.l.b16 %v3160
        %v3256 = vunpack.c.h.b16 %v3160
        %v3257 = vunpack.c.l.b16 %v3161
        %v3258 = vunpack.c.h.b16 %v3161
        %v3259 = vunpack.c.l.b16 %v3162
        %v3260 = vunpack.c.h.b16 %v3162
        %v3261 = vunpack.c.l.b16 %v3163
        %v3262 = vunpack.c.h.b16 %v3163
        %v3263 = vunpack.c.l.b16 %v3164
        %v3264 = vunpack.c.h.b16 %v3164
        %v3265 = vunpack.c.l.b16 %v3165
        %v3266 = vunpack.c.h.b16 %v3165
        %v3267 = vunpack.c.l.b16 %v3166
        %v3268 = vunpack.c.h.b16 %v3166
        %v3269 = vunpack.c.l.b16 %v3167
        %v3270 = vunpack.c.h.b16 %v3167
        %v3271 = vunpack.c.l.b16 %v3168
        %v3272 = vunpack.c.h.b16 %v3168
        %v3273 = vunpack.c.l.b16 %v3169
        %v3274 = vunpack.c.h.b16 %v3169
        %v3275 = vunpack.c.l.b16 %v3170
        %v3276 = vunpack.c.h.b16 %v3170
        %v3277 = vunpack.c.l.b16 %v3171
        %v3278 = vunpack.c.h.b16 %v3171
        %v3279 = vunpack.c.l.b16 %v3172
        %v3280 = vunpack.c.h.b16 %v3172
        %v3281 = vpack.c.b16 %v3219, %v3217
        %v3282 = vpack.c.b16 %v3220, %v3218
        %v3283 = vpack.c.b16 %v3223, %v3221
        %v3284 = vpack.c.b16 %v3224, %v3222
        %v3285 = vpack.c.b16 %v3227, %v3225
        %v3286 = vpack.c.b16 %v3228, %v3226
        %v3287 = vpack.c.b16 %v3231, %v3229
        %v3288 = vpack.c.b16 %v3232, %v3230
        %v3289 = vpack.c.b16 %v3235, %v3233
        %v3290 = vpack.c.b16 %v3236, %v3234
        %v3291 = vpack.c.b16 %v3239, %v3237
        %v3292 = vpack.c.b16 %v3240, %v3238
        %v3293 = vpack.c.b16 %v3243, %v3241
        %v3294 = vpack.c.b16 %v3244, %v3242
        %v3295 = vpack.c.b16 %v3247, %v3245
        %v3296 = vpack.c.b16 %v3248, %v3246
        %v3297 = vpack.c.b16 %v3251, %v3249
        %v3298 = vpack.c.b16 %v3252, %v3250
        %v3299 = vpack.c.b16 %v3255, %v3253
        %v3300 = vpack.c.b16 %v3256, %v3254
        %v3301 = vpack.c.b16 %v3259, %v3257
        %v3302 = vpack.c.b16 %v3260, %v3258
        %v3303 = vpack.c.b16 %v3263, %v3261
        %v3304 = vpack.c.b16 %v3264, %v3262
        %v3305 = vpack.c.b16 %v3267, %v3265
        %v3306 = vpack.c.b16 %v3268, %v3266
        %v3307 = vpack.c.b16 %v3271, %v3269
        %v3308 = vpack.c.b16 %v3272, %v3270
        %v3309 = vpack.c.b16 %v3275, %v3273
        %v3310 = vpack.c.b16 %v3276, %v3274
        %v3311 = vpack.c.b16 %v3279, %v3277
        %v3312 = vpack.c.b16 %v3280, %v3278
        %3345 = vmatprep.subr.bf16.mxu0 %v3296
        %3346 = vmatpush1.bf16.msra.mxu0 %v3295
        %3347 = vmatprep.subr.bf16.mxu0 %v3294
        %3348 = vmatpush1.bf16.msra.mxu0 %v3293
        %3349 = vmatprep.subr.bf16.mxu0 %v3292
        %3350 = vmatpush1.bf16.msra.mxu0 %v3291
        %3351 = vmatprep.subr.bf16.mxu0 %v3290
        %3352 = vmatpush1.bf16.msra.mxu0 %v3289
        %3353 = vmatprep.subr.bf16.mxu0 %v3288
        %3354 = vmatpush1.bf16.msra.mxu0 %v3287
        %3355 = vmatprep.subr.bf16.mxu0 %v3286
        %3356 = vmatpush1.bf16.msra.mxu0 %v3285
        %3357 = vmatprep.subr.bf16.mxu0 %v3284
        %3358 = vmatpush1.bf16.msra.mxu0 %v3283
        %3359 = vmatprep.subr.bf16.mxu0 %v3282
        %3360 = vmatpush1.bf16.msra.mxu0 %v3281
        %3361 = vmatprep.subr.bf16.mxu0 %v3312
        %3362 = vmatpush2.bf16.msra.mxu0 %v3311
        %3363 = vmatprep.subr.bf16.mxu0 %v3310
        %3364 = vmatpush2.bf16.msra.mxu0 %v3309
        %3365 = vmatprep.subr.bf16.mxu0 %v3308
        %3366 = vmatpush2.bf16.msra.mxu0 %v3307
        %3367 = vmatprep.subr.bf16.mxu0 %v3306
        %3368 = vmatpush2.bf16.msra.mxu0 %v3305
        %3369 = vmatprep.subr.bf16.mxu0 %v3304
        %3370 = vmatpush2.bf16.msra.mxu0 %v3303
        %3371 = vmatprep.subr.bf16.mxu0 %v3302
        %3372 = vmatpush2.bf16.msra.mxu0 %v3301
        %3373 = vmatprep.subr.bf16.mxu0 %v3300
        %3374 = vmatpush2.bf16.msra.mxu0 %v3299
        %3375 = vmatprep.subr.bf16.mxu0 %v3298
        %3376 = vmatpush2.bf16.msra.mxu0 %v3297
        %3377 = vmatprep.mubr.bf16.mxu0 %v3140
        %3378 = vmatmul.mubr.bf16.gmra.mxu0 %v3139
        %v3379 = vpop.f32.mrf.mxu0
        %v3380 = vadd.f32 %v3178, %v3379
        %v3381 = vpop.f32.mrf.mxu0
        %v3382 = vadd.f32 %v3182, %v3381
        %v3383 = vpop.f32.mrf.mxu0
        %v3384 = vpop.f32.mrf.mxu0
        %3385 = vdwg.mxu0
        %v3386 = vadd.f32 %v2194, %v3380
        %v3387 = vadd.f32 %v2195, %v3382
        %v3388 = vld [vmem:[%s15] sm:$0x3]
        %v3389 = vld [vmem:[%s16] sm:$0x3]
        %v3390 = vadd.f32 %v3386, %v3387
        %3391 = vadd.xlane.f32.xlu0 %v3390
        %v3392 = vpop.xlane.xlu0 %3391
        %v3393 = vmul.f32 %v3392, %v2156
        %v3394 = vsub.f32 %v3386, %v3393
        %v3395 = vsub.f32 %v3387, %v3393
        %v3396 = vmul.f32 %v3394, %v3394
        %v3397 = vmul.f32 %v3395, %v3395
        %v3398 = vadd.f32 %v3396, %v3397
        %3399 = vadd.xlane.f32.xlu0 %v3398
        %v3400 = vpop.xlane.xlu0 %3399
        %v3401 = vmul.f32 %v3400, %v2156
        %v3402 = vadd.f32 %v3401, 1e-05
        %v3403 = vrsqrt.pop %v3402
        %v3404 = vmul.f32 %v3394, %v3403
        %v3405 = vmul.f32 %v3395, %v3403
        %v3407 = vlaneseq
        %v3408 = vshrl.u32 %v3407, 7
        %v3409 = vsub.s32 0, %v3408
        %v3410 = vrot.slane %v3388, %v3409
        %v3411 = vlaneseq
        %v3412 = vshrl.u32 %v3411, 7
        %v3413 = vsub.s32 1, %v3412
        %v3414 = vrot.slane %v3388, %v3413
        %v3417 = vmul.f32 %v3404, %v3410
        %v3418 = vmul.f32 %v3405, %v3414
        %v3420 = vlaneseq
        %v3421 = vshrl.u32 %v3420, 7
        %v3422 = vsub.s32 0, %v3421
        %v3423 = vrot.slane %v3389, %v3422
        %v3424 = vlaneseq
        %v3425 = vshrl.u32 %v3424, 7
        %v3426 = vsub.s32 1, %v3425
        %v3427 = vrot.slane %v3389, %v3426
        %v3430 = vadd.f32 %v3417, %v3423
        %v3431 = vadd.f32 %v3418, %v3427
        %v3432 = vpack.c.bf16 %v3430, %v3430
        %v3433 = vpack.c.bf16 %v3431, %v3431
        %v3434 = vld [vmem:[#allocation20] sm:$0xff]
        %v3435 = vld [vmem:[#allocation20 + $0x8] sm:$0xff]
        %v3436 = vld [vmem:[#allocation20 + $0x10] sm:$0xff]
        %v3437 = vld [vmem:[#allocation20 + $0x18] sm:$0xff]
        %v3438 = vld [vmem:[#allocation20 + $0x20] sm:$0xff]
        %v3439 = vld [vmem:[#allocation20 + $0x28] sm:$0xff]
        %v3440 = vld [vmem:[#allocation20 + $0x30] sm:$0xff]
        %v3441 = vld [vmem:[#allocation20 + $0x38] sm:$0xff]
        %v3442 = vld [vmem:[#allocation20 + $0x40] sm:$0xff]
        %v3443 = vld [vmem:[#allocation20 + $0x48] sm:$0xff]
        %v3444 = vld [vmem:[#allocation20 + $0x50] sm:$0xff]
        %v3445 = vld [vmem:[#allocation20 + $0x58] sm:$0xff]
        %v3446 = vld [vmem:[#allocation20 + $0x60] sm:$0xff]
        %v3447 = vld [vmem:[#allocation20 + $0x68] sm:$0xff]
        %v3448 = vld [vmem:[#allocation20 + $0x70] sm:$0xff]
        %v3449 = vld [vmem:[#allocation20 + $0x78] sm:$0xff]
        %v3450 = vld [vmem:[#allocation20 + $0x80] sm:$0xff]
        %v3451 = vld [vmem:[#allocation20 + $0x88] sm:$0xff]
        %v3452 = vld [vmem:[#allocation20 + $0x90] sm:$0xff]
        %v3453 = vld [vmem:[#allocation20 + $0x98] sm:$0xff]
        %v3454 = vld [vmem:[#allocation20 + $0xa0] sm:$0xff]
        %v3455 = vld [vmem:[#allocation20 + $0xa8] sm:$0xff]
        %v3456 = vld [vmem:[#allocation20 + $0xb0] sm:$0xff]
        %v3457 = vld [vmem:[#allocation20 + $0xb8] sm:$0xff]
        %v3458 = vld [vmem:[#allocation20 + $0xc0] sm:$0xff]
        %v3459 = vld [vmem:[#allocation20 + $0xc8] sm:$0xff]
        %v3460 = vld [vmem:[#allocation20 + $0xd0] sm:$0xff]
        %v3461 = vld [vmem:[#allocation20 + $0xd8] sm:$0xff]
        %v3462 = vld [vmem:[#allocation20 + $0xe0] sm:$0xff]
        %v3463 = vld [vmem:[#allocation20 + $0xe8] sm:$0xff]
        %v3464 = vld [vmem:[#allocation20 + $0xf0] sm:$0xff]
        %v3465 = vld [vmem:[#allocation20 + $0xf8] sm:$0xff]
        %v3466 = vld [vmem:[#allocation20 + $0x100] sm:$0xff]
        %v3467 = vld [vmem:[#allocation20 + $0x108] sm:$0xff]
        %v3468 = vld [vmem:[#allocation20 + $0x110] sm:$0xff]
        %v3469 = vld [vmem:[#allocation20 + $0x118] sm:$0xff]
        %v3470 = vld [vmem:[#allocation20 + $0x120] sm:$0xff]
        %v3471 = vld [vmem:[#allocation20 + $0x128] sm:$0xff]
        %v3472 = vld [vmem:[#allocation20 + $0x130] sm:$0xff]
        %v3473 = vld [vmem:[#allocation20 + $0x138] sm:$0xff]
        %v3474 = vld [vmem:[#allocation20 + $0x140] sm:$0xff]
        %v3475 = vld [vmem:[#allocation20 + $0x148] sm:$0xff]
        %v3476 = vld [vmem:[#allocation20 + $0x150] sm:$0xff]
        %v3477 = vld [vmem:[#allocation20 + $0x158] sm:$0xff]
        %v3478 = vld [vmem:[#allocation20 + $0x160] sm:$0xff]
        %v3479 = vld [vmem:[#allocation20 + $0x168] sm:$0xff]
        %v3480 = vld [vmem:[#allocation20 + $0x170] sm:$0xff]
        %v3481 = vld [vmem:[#allocation20 + $0x178] sm:$0xff]
        %v3482 = vld [vmem:[#allocation20 + $0x180] sm:$0xff]
        %v3483 = vld [vmem:[#allocation20 + $0x188] sm:$0xff]
        %v3484 = vld [vmem:[#allocation20 + $0x190] sm:$0xff]
        %v3485 = vld [vmem:[#allocation20 + $0x198] sm:$0xff]
        %v3486 = vld [vmem:[#allocation20 + $0x1a0] sm:$0xff]
        %v3487 = vld [vmem:[#allocation20 + $0x1a8] sm:$0xff]
        %v3488 = vld [vmem:[#allocation20 + $0x1b0] sm:$0xff]
        %v3489 = vld [vmem:[#allocation20 + $0x1b8] sm:$0xff]
        %v3490 = vld [vmem:[#allocation20 + $0x1c0] sm:$0xff]
        %v3491 = vld [vmem:[#allocation20 + $0x1c8] sm:$0xff]
        %v3492 = vld [vmem:[#allocation20 + $0x1d0] sm:$0xff]
        %v3493 = vld [vmem:[#allocation20 + $0x1d8] sm:$0xff]
        %v3494 = vld [vmem:[#allocation20 + $0x1e0] sm:$0xff]
        %v3495 = vld [vmem:[#allocation20 + $0x1e8] sm:$0xff]
        %v3496 = vld [vmem:[#allocation20 + $0x1f0] sm:$0xff]
        %v3497 = vld [vmem:[#allocation20 + $0x1f8] sm:$0xff]
        %v3498 = vld [vmem:[%s18] sm:$0xf]
        %v3500 = vlaneseq
        %v3501 = vshrl.u32 %v3500, 7
        %v3502 = vsub.s32 0, %v3501
        %v3503 = vrot.slane %v3498, %v3502
        %v3504 = vlaneseq
        %v3505 = vshrl.u32 %v3504, 7
        %v3506 = vsub.s32 1, %v3505
        %v3507 = vrot.slane %v3498, %v3506
        %v3508 = vlaneseq
        %v3509 = vshrl.u32 %v3508, 7
        %v3510 = vsub.s32 2, %v3509
        %v3511 = vrot.slane %v3498, %v3510
        %v3512 = vlaneseq
        %v3513 = vshrl.u32 %v3512, 7
        %v3514 = vsub.s32 3, %v3513
        %v3515 = vrot.slane %v3498, %v3514
        %v3584 = vunpack.c.l.b16 %v3434
        %v3585 = vunpack.c.h.b16 %v3434
        %v3586 = vunpack.c.l.b16 %v3435
        %v3587 = vunpack.c.h.b16 %v3435
        %v3588 = vunpack.c.l.b16 %v3436
        %v3589 = vunpack.c.h.b16 %v3436
        %v3590 = vunpack.c.l.b16 %v3437
        %v3591 = vunpack.c.h.b16 %v3437
        %v3592 = vunpack.c.l.b16 %v3438
        %v3593 = vunpack.c.h.b16 %v3438
        %v3594 = vunpack.c.l.b16 %v3439
        %v3595 = vunpack.c.h.b16 %v3439
        %v3596 = vunpack.c.l.b16 %v3440
        %v3597 = vunpack.c.h.b16 %v3440
        %v3598 = vunpack.c.l.b16 %v3441
        %v3599 = vunpack.c.h.b16 %v3441
        %v3600 = vunpack.c.l.b16 %v3442
        %v3601 = vunpack.c.h.b16 %v3442
        %v3602 = vunpack.c.l.b16 %v3443
        %v3603 = vunpack.c.h.b16 %v3443
        %v3604 = vunpack.c.l.b16 %v3444
        %v3605 = vunpack.c.h.b16 %v3444
        %v3606 = vunpack.c.l.b16 %v3445
        %v3607 = vunpack.c.h.b16 %v3445
        %v3608 = vunpack.c.l.b16 %v3446
        %v3609 = vunpack.c.h.b16 %v3446
        %v3610 = vunpack.c.l.b16 %v3447
        %v3611 = vunpack.c.h.b16 %v3447
        %v3612 = vunpack.c.l.b16 %v3448
        %v3613 = vunpack.c.h.b16 %v3448
        %v3614 = vunpack.c.l.b16 %v3449
        %v3615 = vunpack.c.h.b16 %v3449
        %v3616 = vunpack.c.l.b16 %v3450
        %v3617 = vunpack.c.h.b16 %v3450
        %v3618 = vunpack.c.l.b16 %v3451
        %v3619 = vunpack.c.h.b16 %v3451
        %v3620 = vunpack.c.l.b16 %v3452
        %v3621 = vunpack.c.h.b16 %v3452
        %v3622 = vunpack.c.l.b16 %v3453
        %v3623 = vunpack.c.h.b16 %v3453
        %v3624 = vunpack.c.l.b16 %v3454
        %v3625 = vunpack.c.h.b16 %v3454
        %v3626 = vunpack.c.l.b16 %v3455
        %v3627 = vunpack.c.h.b16 %v3455
        %v3628 = vunpack.c.l.b16 %v3456
        %v3629 = vunpack.c.h.b16 %v3456
        %v3630 = vunpack.c.l.b16 %v3457
        %v3631 = vunpack.c.h.b16 %v3457
        %v3632 = vunpack.c.l.b16 %v3458
        %v3633 = vunpack.c.h.b16 %v3458
        %v3634 = vunpack.c.l.b16 %v3459
        %v3635 = vunpack.c.h.b16 %v3459
        %v3636 = vunpack.c.l.b16 %v3460
        %v3637 = vunpack.c.h.b16 %v3460
        %v3638 = vunpack.c.l.b16 %v3461
        %v3639 = vunpack.c.h.b16 %v3461
        %v3640 = vunpack.c.l.b16 %v3462
        %v3641 = vunpack.c.h.b16 %v3462
        %v3642 = vunpack.c.l.b16 %v3463
        %v3643 = vunpack.c.h.b16 %v3463
        %v3644 = vunpack.c.l.b16 %v3464
        %v3645 = vunpack.c.h.b16 %v3464
        %v3646 = vunpack.c.l.b16 %v3465
        %v3647 = vunpack.c.h.b16 %v3465
        %v3648 = vunpack.c.l.b16 %v3466
        %v3649 = vunpack.c.h.b16 %v3466
        %v3650 = vunpack.c.l.b16 %v3467
        %v3651 = vunpack.c.h.b16 %v3467
        %v3652 = vunpack.c.l.b16 %v3468
        %v3653 = vunpack.c.h.b16 %v3468
        %v3654 = vunpack.c.l.b16 %v3469
        %v3655 = vunpack.c.h.b16 %v3469
        %v3656 = vunpack.c.l.b16 %v3470
        %v3657 = vunpack.c.h.b16 %v3470
        %v3658 = vunpack.c.l.b16 %v3471
        %v3659 = vunpack.c.h.b16 %v3471
        %v3660 = vunpack.c.l.b16 %v3472
        %v3661 = vunpack.c.h.b16 %v3472
        %v3662 = vunpack.c.l.b16 %v3473
        %v3663 = vunpack.c.h.b16 %v3473
        %v3664 = vunpack.c.l.b16 %v3474
        %v3665 = vunpack.c.h.b16 %v3474
        %v3666 = vunpack.c.l.b16 %v3475
        %v3667 = vunpack.c.h.b16 %v3475
        %v3668 = vunpack.c.l.b16 %v3476
        %v3669 = vunpack.c.h.b16 %v3476
        %v3670 = vunpack.c.l.b16 %v3477
        %v3671 = vunpack.c.h.b16 %v3477
        %v3672 = vunpack.c.l.b16 %v3478
        %v3673 = vunpack.c.h.b16 %v3478
        %v3674 = vunpack.c.l.b16 %v3479
        %v3675 = vunpack.c.h.b16 %v3479
        %v3676 = vunpack.c.l.b16 %v3480
        %v3677 = vunpack.c.h.b16 %v3480
        %v3678 = vunpack.c.l.b16 %v3481
        %v3679 = vunpack.c.h.b16 %v3481
        %v3680 = vunpack.c.l.b16 %v3482
        %v3681 = vunpack.c.h.b16 %v3482
        %v3682 = vunpack.c.l.b16 %v3483
        %v3683 = vunpack.c.h.b16 %v3483
        %v3684 = vunpack.c.l.b16 %v3484
        %v3685 = vunpack.c.h.b16 %v3484
        %v3686 = vunpack.c.l.b16 %v3485
        %v3687 = vunpack.c.h.b16 %v3485
        %v3688 = vunpack.c.l.b16 %v3486
        %v3689 = vunpack.c.h.b16 %v3486
        %v3690 = vunpack.c.l.b16 %v3487
        %v3691 = vunpack.c.h.b16 %v3487
        %v3692 = vunpack.c.l.b16 %v3488
        %v3693 = vunpack.c.h.b16 %v3488
        %v3694 = vunpack.c.l.b16 %v3489
        %v3695 = vunpack.c.h.b16 %v3489
        %v3696 = vunpack.c.l.b16 %v3490
        %v3697 = vunpack.c.h.b16 %v3490
        %v3698 = vunpack.c.l.b16 %v3491
        %v3699 = vunpack.c.h.b16 %v3491
        %v3700 = vunpack.c.l.b16 %v3492
        %v3701 = vunpack.c.h.b16 %v3492
        %v3702 = vunpack.c.l.b16 %v3493
        %v3703 = vunpack.c.h.b16 %v3493
        %v3704 = vunpack.c.l.b16 %v3494
        %v3705 = vunpack.c.h.b16 %v3494
        %v3706 = vunpack.c.l.b16 %v3495
        %v3707 = vunpack.c.h.b16 %v3495
        %v3708 = vunpack.c.l.b16 %v3496
        %v3709 = vunpack.c.h.b16 %v3496
        %v3710 = vunpack.c.l.b16 %v3497
        %v3711 = vunpack.c.h.b16 %v3497
        %v3712 = vpack.c.b16 %v3588, %v3584
        %v3713 = vpack.c.b16 %v3589, %v3585
        %v3714 = vpack.c.b16 %v3590, %v3586
        %v3715 = vpack.c.b16 %v3591, %v3587
        %v3716 = vpack.c.b16 %v3596, %v3592
        %v3717 = vpack.c.b16 %v3597, %v3593
        %v3718 = vpack.c.b16 %v3598, %v3594
        %v3719 = vpack.c.b16 %v3599, %v3595
        %v3720 = vpack.c.b16 %v3604, %v3600
        %v3721 = vpack.c.b16 %v3605, %v3601
        %v3722 = vpack.c.b16 %v3606, %v3602
        %v3723 = vpack.c.b16 %v3607, %v3603
        %v3724 = vpack.c.b16 %v3612, %v3608
        %v3725 = vpack.c.b16 %v3613, %v3609
        %v3726 = vpack.c.b16 %v3614, %v3610
        %v3727 = vpack.c.b16 %v3615, %v3611
        %v3728 = vpack.c.b16 %v3620, %v3616
        %v3729 = vpack.c.b16 %v3621, %v3617
        %v3730 = vpack.c.b16 %v3622, %v3618
        %v3731 = vpack.c.b16 %v3623, %v3619
        %v3732 = vpack.c.b16 %v3628, %v3624
        %v3733 = vpack.c.b16 %v3629, %v3625
        %v3734 = vpack.c.b16 %v3630, %v3626
        %v3735 = vpack.c.b16 %v3631, %v3627
        %v3736 = vpack.c.b16 %v3636, %v3632
        %v3737 = vpack.c.b16 %v3637, %v3633
        %v3738 = vpack.c.b16 %v3638, %v3634
        %v3739 = vpack.c.b16 %v3639, %v3635
        %v3740 = vpack.c.b16 %v3644, %v3640
        %v3741 = vpack.c.b16 %v3645, %v3641
        %v3742 = vpack.c.b16 %v3646, %v3642
        %v3743 = vpack.c.b16 %v3647, %v3643
        %v3744 = vpack.c.b16 %v3652, %v3648
        %v3745 = vpack.c.b16 %v3653, %v3649
        %v3746 = vpack.c.b16 %v3654, %v3650
        %v3747 = vpack.c.b16 %v3655, %v3651
        %v3748 = vpack.c.b16 %v3660, %v3656
        %v3749 = vpack.c.b16 %v3661, %v3657
        %v3750 = vpack.c.b16 %v3662, %v3658
        %v3751 = vpack.c.b16 %v3663, %v3659
        %v3752 = vpack.c.b16 %v3668, %v3664
        %v3753 = vpack.c.b16 %v3669, %v3665
        %v3754 = vpack.c.b16 %v3670, %v3666
        %v3755 = vpack.c.b16 %v3671, %v3667
        %v3756 = vpack.c.b16 %v3676, %v3672
        %v3757 = vpack.c.b16 %v3677, %v3673
        %v3758 = vpack.c.b16 %v3678, %v3674
        %v3759 = vpack.c.b16 %v3679, %v3675
        %v3760 = vpack.c.b16 %v3684, %v3680
        %v3761 = vpack.c.b16 %v3685, %v3681
        %v3762 = vpack.c.b16 %v3686, %v3682
        %v3763 = vpack.c.b16 %v3687, %v3683
        %v3764 = vpack.c.b16 %v3692, %v3688
        %v3765 = vpack.c.b16 %v3693, %v3689
        %v3766 = vpack.c.b16 %v3694, %v3690
        %v3767 = vpack.c.b16 %v3695, %v3691
        %v3768 = vpack.c.b16 %v3700, %v3696
        %v3769 = vpack.c.b16 %v3701, %v3697
        %v3770 = vpack.c.b16 %v3702, %v3698
        %v3771 = vpack.c.b16 %v3703, %v3699
        %v3772 = vpack.c.b16 %v3708, %v3704
        %v3773 = vpack.c.b16 %v3709, %v3705
        %v3774 = vpack.c.b16 %v3710, %v3706
        %v3775 = vpack.c.b16 %v3711, %v3707
        %3840 = vmatprep.subr.bf16.mxu0 %v3741
        %3841 = vmatpush1.bf16.msra.mxu0 %v3740
        %3842 = vmatprep.subr.bf16.mxu0 %v3737
        %3843 = vmatpush1.bf16.msra.mxu0 %v3736
        %3844 = vmatprep.subr.bf16.mxu0 %v3733
        %3845 = vmatpush1.bf16.msra.mxu0 %v3732
        %3846 = vmatprep.subr.bf16.mxu0 %v3729
        %3847 = vmatpush1.bf16.msra.mxu0 %v3728
        %3848 = vmatprep.subr.bf16.mxu0 %v3725
        %3849 = vmatpush1.bf16.msra.mxu0 %v3724
        %3850 = vmatprep.subr.bf16.mxu0 %v3721
        %3851 = vmatpush1.bf16.msra.mxu0 %v3720
        %3852 = vmatprep.subr.bf16.mxu0 %v3717
        %3853 = vmatpush1.bf16.msra.mxu0 %v3716
        %3854 = vmatprep.subr.bf16.mxu0 %v3713
        %3855 = vmatpush1.bf16.msra.mxu0 %v3712
        %3856 = vmatprep.subr.bf16.mxu0 %v3773
        %3857 = vmatpush2.bf16.msra.mxu0 %v3772
        %3858 = vmatprep.subr.bf16.mxu0 %v3769
        %3859 = vmatpush2.bf16.msra.mxu0 %v3768
        %3860 = vmatprep.subr.bf16.mxu0 %v3765
        %3861 = vmatpush2.bf16.msra.mxu0 %v3764
        %3862 = vmatprep.subr.bf16.mxu0 %v3761
        %3863 = vmatpush2.bf16.msra.mxu0 %v3760
        %3864 = vmatprep.subr.bf16.mxu0 %v3757
        %3865 = vmatpush2.bf16.msra.mxu0 %v3756
        %3866 = vmatprep.subr.bf16.mxu0 %v3753
        %3867 = vmatpush2.bf16.msra.mxu0 %v3752
        %3868 = vmatprep.subr.bf16.mxu0 %v3749
        %3869 = vmatpush2.bf16.msra.mxu0 %v3748
        %3870 = vmatprep.subr.bf16.mxu0 %v3745
        %3871 = vmatpush2.bf16.msra.mxu0 %v3744
        %3872 = vmatprep.mubr.bf16.mxu0 %v3433
        %3873 = vmatmul.mubr.bf16.gmra.mxu0 %v3432
        %v3874 = vpop.f32.mrf.mxu0
        %v3875 = vadd.f32 %v3503, %v3874
        %v3876 = vpop.f32.mrf.mxu0
        %v3877 = vadd.f32 %v3507, %v3876
        %v3878 = vpop.f32.mrf.mxu0
        %v3879 = vpop.f32.mrf.mxu0
        %3880 = vdwg.mxu0
        %3881 = vmatprep.subr.bf16.mxu0 %v3743
        %3882 = vmatpush1.bf16.msra.mxu0 %v3742
        %3883 = vmatprep.subr.bf16.mxu0 %v3739
        %3884 = vmatpush1.bf16.msra.mxu0 %v3738
        %3885 = vmatprep.subr.bf16.mxu0 %v3735
        %3886 = vmatpush1.bf16.msra.mxu0 %v3734
        %3887 = vmatprep.subr.bf16.mxu0 %v3731
        %3888 = vmatpush1.bf16.msra.mxu0 %v3730
        %3889 = vmatprep.subr.bf16.mxu0 %v3727
        %3890 = vmatpush1.bf16.msra.mxu0 %v3726
        %3891 = vmatprep.subr.bf16.mxu0 %v3723
        %3892 = vmatpush1.bf16.msra.mxu0 %v3722
        %3893 = vmatprep.subr.bf16.mxu0 %v3719
        %3894 = vmatpush1.bf16.msra.mxu0 %v3718
        %3895 = vmatprep.subr.bf16.mxu0 %v3715
        %3896 = vmatpush1.bf16.msra.mxu0 %v3714
        %3897 = vmatprep.subr.bf16.mxu0 %v3775
        %3898 = vmatpush2.bf16.msra.mxu0 %v3774
        %3899 = vmatprep.subr.bf16.mxu0 %v3771
        %3900 = vmatpush2.bf16.msra.mxu0 %v3770
        %3901 = vmatprep.subr.bf16.mxu0 %v3767
        %3902 = vmatpush2.bf16.msra.mxu0 %v3766
        %3903 = vmatprep.subr.bf16.mxu0 %v3763
        %3904 = vmatpush2.bf16.msra.mxu0 %v3762
        %3905 = vmatprep.subr.bf16.mxu0 %v3759
        %3906 = vmatpush2.bf16.msra.mxu0 %v3758
        %3907 = vmatprep.subr.bf16.mxu0 %v3755
        %3908 = vmatpush2.bf16.msra.mxu0 %v3754
        %3909 = vmatprep.subr.bf16.mxu0 %v3751
        %3910 = vmatpush2.bf16.msra.mxu0 %v3750
        %3911 = vmatprep.subr.bf16.mxu0 %v3747
        %3912 = vmatpush2.bf16.msra.mxu0 %v3746
        %3913 = vmatprep.mubr.bf16.mxu0 %v3433
        %3914 = vmatmul.mubr.bf16.gmra.mxu0 %v3432
        %v3915 = vpop.f32.mrf.mxu0
        %v3916 = vadd.f32 %v3511, %v3915
        %v3917 = vpop.f32.mrf.mxu0
        %v3918 = vadd.f32 %v3515, %v3917
        %v3919 = vpop.f32.mrf.mxu0
        %v3920 = vpop.f32.mrf.mxu0
        %3921 = vdwg.mxu0
        %v3922 = vmax.f32 %v3875, 0.0
        %v3923 = vmax.f32 %v3877, 0.0
        %v3924 = vmax.f32 %v3916, 0.0
        %v3925 = vmax.f32 %v3918, 0.0
        %v3926 = vpack.c.bf16 %v3922, %v3922
        %v3927 = vpack.c.bf16 %v3923, %v3923
        %v3928 = vpack.c.bf16 %v3924, %v3924
        %v3929 = vpack.c.bf16 %v3925, %v3925
        %v3930 = vld [vmem:[#allocation21] sm:$0xff]
        %v3931 = vld [vmem:[#allocation21 + $0x8] sm:$0xff]
        %v3932 = vld [vmem:[#allocation21 + $0x10] sm:$0xff]
        %v3933 = vld [vmem:[#allocation21 + $0x18] sm:$0xff]
        %v3934 = vld [vmem:[#allocation21 + $0x20] sm:$0xff]
        %v3935 = vld [vmem:[#allocation21 + $0x28] sm:$0xff]
        %v3936 = vld [vmem:[#allocation21 + $0x30] sm:$0xff]
        %v3937 = vld [vmem:[#allocation21 + $0x38] sm:$0xff]
        %v3938 = vld [vmem:[#allocation21 + $0x40] sm:$0xff]
        %v3939 = vld [vmem:[#allocation21 + $0x48] sm:$0xff]
        %v3940 = vld [vmem:[#allocation21 + $0x50] sm:$0xff]
        %v3941 = vld [vmem:[#allocation21 + $0x58] sm:$0xff]
        %v3942 = vld [vmem:[#allocation21 + $0x60] sm:$0xff]
        %v3943 = vld [vmem:[#allocation21 + $0x68] sm:$0xff]
        %v3944 = vld [vmem:[#allocation21 + $0x70] sm:$0xff]
        %v3945 = vld [vmem:[#allocation21 + $0x78] sm:$0xff]
        %v3946 = vld [vmem:[#allocation21 + $0x80] sm:$0xff]
        %v3947 = vld [vmem:[#allocation21 + $0x88] sm:$0xff]
        %v3948 = vld [vmem:[#allocation21 + $0x90] sm:$0xff]
        %v3949 = vld [vmem:[#allocation21 + $0x98] sm:$0xff]
        %v3950 = vld [vmem:[#allocation21 + $0xa0] sm:$0xff]
        %v3951 = vld [vmem:[#allocation21 + $0xa8] sm:$0xff]
        %v3952 = vld [vmem:[#allocation21 + $0xb0] sm:$0xff]
        %v3953 = vld [vmem:[#allocation21 + $0xb8] sm:$0xff]
        %v3954 = vld [vmem:[#allocation21 + $0xc0] sm:$0xff]
        %v3955 = vld [vmem:[#allocation21 + $0xc8] sm:$0xff]
        %v3956 = vld [vmem:[#allocation21 + $0xd0] sm:$0xff]
        %v3957 = vld [vmem:[#allocation21 + $0xd8] sm:$0xff]
        %v3958 = vld [vmem:[#allocation21 + $0xe0] sm:$0xff]
        %v3959 = vld [vmem:[#allocation21 + $0xe8] sm:$0xff]
        %v3960 = vld [vmem:[#allocation21 + $0xf0] sm:$0xff]
        %v3961 = vld [vmem:[#allocation21 + $0xf8] sm:$0xff]
        %v3962 = vld [vmem:[#allocation21 + $0x100] sm:$0xff]
        %v3963 = vld [vmem:[#allocation21 + $0x108] sm:$0xff]
        %v3964 = vld [vmem:[#allocation21 + $0x110] sm:$0xff]
        %v3965 = vld [vmem:[#allocation21 + $0x118] sm:$0xff]
        %v3966 = vld [vmem:[#allocation21 + $0x120] sm:$0xff]
        %v3967 = vld [vmem:[#allocation21 + $0x128] sm:$0xff]
        %v3968 = vld [vmem:[#allocation21 + $0x130] sm:$0xff]
        %v3969 = vld [vmem:[#allocation21 + $0x138] sm:$0xff]
        %v3970 = vld [vmem:[#allocation21 + $0x140] sm:$0xff]
        %v3971 = vld [vmem:[#allocation21 + $0x148] sm:$0xff]
        %v3972 = vld [vmem:[#allocation21 + $0x150] sm:$0xff]
        %v3973 = vld [vmem:[#allocation21 + $0x158] sm:$0xff]
        %v3974 = vld [vmem:[#allocation21 + $0x160] sm:$0xff]
        %v3975 = vld [vmem:[#allocation21 + $0x168] sm:$0xff]
        %v3976 = vld [vmem:[#allocation21 + $0x170] sm:$0xff]
        %v3977 = vld [vmem:[#allocation21 + $0x178] sm:$0xff]
        %v3978 = vld [vmem:[#allocation21 + $0x180] sm:$0xff]
        %v3979 = vld [vmem:[#allocation21 + $0x188] sm:$0xff]
        %v3980 = vld [vmem:[#allocation21 + $0x190] sm:$0xff]
        %v3981 = vld [vmem:[#allocation21 + $0x198] sm:$0xff]
        %v3982 = vld [vmem:[#allocation21 + $0x1a0] sm:$0xff]
        %v3983 = vld [vmem:[#allocation21 + $0x1a8] sm:$0xff]
        %v3984 = vld [vmem:[#allocation21 + $0x1b0] sm:$0xff]
        %v3985 = vld [vmem:[#allocation21 + $0x1b8] sm:$0xff]
        %v3986 = vld [vmem:[#allocation21 + $0x1c0] sm:$0xff]
        %v3987 = vld [vmem:[#allocation21 + $0x1c8] sm:$0xff]
        %v3988 = vld [vmem:[#allocation21 + $0x1d0] sm:$0xff]
        %v3989 = vld [vmem:[#allocation21 + $0x1d8] sm:$0xff]
        %v3990 = vld [vmem:[#allocation21 + $0x1e0] sm:$0xff]
        %v3991 = vld [vmem:[#allocation21 + $0x1e8] sm:$0xff]
        %v3992 = vld [vmem:[#allocation21 + $0x1f0] sm:$0xff]
        %v3993 = vld [vmem:[#allocation21 + $0x1f8] sm:$0xff]
        %v3994 = vld [vmem:[%s20] sm:$0x3]
        %v3996 = vlaneseq
        %v3997 = vshrl.u32 %v3996, 7
        %v3998 = vsub.s32 0, %v3997
        %v3999 = vrot.slane %v3994, %v3998
        %v4000 = vlaneseq
        %v4001 = vshrl.u32 %v4000, 7
        %v4002 = vsub.s32 1, %v4001
        %v4003 = vrot.slane %v3994, %v4002
        %v4070 = vunpack.c.l.b16 %v3930
        %v4071 = vunpack.c.h.b16 %v3930
        %v4072 = vunpack.c.l.b16 %v3931
        %v4073 = vunpack.c.h.b16 %v3931
        %v4074 = vunpack.c.l.b16 %v3932
        %v4075 = vunpack.c.h.b16 %v3932
        %v4076 = vunpack.c.l.b16 %v3933
        %v4077 = vunpack.c.h.b16 %v3933
        %v4078 = vunpack.c.l.b16 %v3934
        %v4079 = vunpack.c.h.b16 %v3934
        %v4080 = vunpack.c.l.b16 %v3935
        %v4081 = vunpack.c.h.b16 %v3935
        %v4082 = vunpack.c.l.b16 %v3936
        %v4083 = vunpack.c.h.b16 %v3936
        %v4084 = vunpack.c.l.b16 %v3937
        %v4085 = vunpack.c.h.b16 %v3937
        %v4086 = vunpack.c.l.b16 %v3938
        %v4087 = vunpack.c.h.b16 %v3938
        %v4088 = vunpack.c.l.b16 %v3939
        %v4089 = vunpack.c.h.b16 %v3939
        %v4090 = vunpack.c.l.b16 %v3940
        %v4091 = vunpack.c.h.b16 %v3940
        %v4092 = vunpack.c.l.b16 %v3941
        %v4093 = vunpack.c.h.b16 %v3941
        %v4094 = vunpack.c.l.b16 %v3942
        %v4095 = vunpack.c.h.b16 %v3942
        %v4096 = vunpack.c.l.b16 %v3943
        %v4097 = vunpack.c.h.b16 %v3943
        %v4098 = vunpack.c.l.b16 %v3944
        %v4099 = vunpack.c.h.b16 %v3944
        %v4100 = vunpack.c.l.b16 %v3945
        %v4101 = vunpack.c.h.b16 %v3945
        %v4102 = vunpack.c.l.b16 %v3946
        %v4103 = vunpack.c.h.b16 %v3946
        %v4104 = vunpack.c.l.b16 %v3947
        %v4105 = vunpack.c.h.b16 %v3947
        %v4106 = vunpack.c.l.b16 %v3948
        %v4107 = vunpack.c.h.b16 %v3948
        %v4108 = vunpack.c.l.b16 %v3949
        %v4109 = vunpack.c.h.b16 %v3949
        %v4110 = vunpack.c.l.b16 %v3950
        %v4111 = vunpack.c.h.b16 %v3950
        %v4112 = vunpack.c.l.b16 %v3951
        %v4113 = vunpack.c.h.b16 %v3951
        %v4114 = vunpack.c.l.b16 %v3952
        %v4115 = vunpack.c.h.b16 %v3952
        %v4116 = vunpack.c.l.b16 %v3953
        %v4117 = vunpack.c.h.b16 %v3953
        %v4118 = vunpack.c.l.b16 %v3954
        %v4119 = vunpack.c.h.b16 %v3954
        %v4120 = vunpack.c.l.b16 %v3955
        %v4121 = vunpack.c.h.b16 %v3955
        %v4122 = vunpack.c.l.b16 %v3956
        %v4123 = vunpack.c.h.b16 %v3956
        %v4124 = vunpack.c.l.b16 %v3957
        %v4125 = vunpack.c.h.b16 %v3957
        %v4126 = vunpack.c.l.b16 %v3958
        %v4127 = vunpack.c.h.b16 %v3958
        %v4128 = vunpack.c.l.b16 %v3959
        %v4129 = vunpack.c.h.b16 %v3959
        %v4130 = vunpack.c.l.b16 %v3960
        %v4131 = vunpack.c.h.b16 %v3960
        %v4132 = vunpack.c.l.b16 %v3961
        %v4133 = vunpack.c.h.b16 %v3961
        %v4134 = vunpack.c.l.b16 %v3962
        %v4135 = vunpack.c.h.b16 %v3962
        %v4136 = vunpack.c.l.b16 %v3963
        %v4137 = vunpack.c.h.b16 %v3963
        %v4138 = vunpack.c.l.b16 %v3964
        %v4139 = vunpack.c.h.b16 %v3964
        %v4140 = vunpack.c.l.b16 %v3965
        %v4141 = vunpack.c.h.b16 %v3965
        %v4142 = vunpack.c.l.b16 %v3966
        %v4143 = vunpack.c.h.b16 %v3966
        %v4144 = vunpack.c.l.b16 %v3967
        %v4145 = vunpack.c.h.b16 %v3967
        %v4146 = vunpack.c.l.b16 %v3968
        %v4147 = vunpack.c.h.b16 %v3968
        %v4148 = vunpack.c.l.b16 %v3969
        %v4149 = vunpack.c.h.b16 %v3969
        %v4150 = vunpack.c.l.b16 %v3970
        %v4151 = vunpack.c.h.b16 %v3970
        %v4152 = vunpack.c.l.b16 %v3971
        %v4153 = vunpack.c.h.b16 %v3971
        %v4154 = vunpack.c.l.b16 %v3972
        %v4155 = vunpack.c.h.b16 %v3972
        %v4156 = vunpack.c.l.b16 %v3973
        %v4157 = vunpack.c.h.b16 %v3973
        %v4158 = vunpack.c.l.b16 %v3974
        %v4159 = vunpack.c.h.b16 %v3974
        %v4160 = vunpack.c.l.b16 %v3975
        %v4161 = vunpack.c.h.b16 %v3975
        %v4162 = vunpack.c.l.b16 %v3976
        %v4163 = vunpack.c.h.b16 %v3976
        %v4164 = vunpack.c.l.b16 %v3977
        %v4165 = vunpack.c.h.b16 %v3977
        %v4166 = vunpack.c.l.b16 %v3978
        %v4167 = vunpack.c.h.b16 %v3978
        %v4168 = vunpack.c.l.b16 %v3979
        %v4169 = vunpack.c.h.b16 %v3979
        %v4170 = vunpack.c.l.b16 %v3980
        %v4171 = vunpack.c.h.b16 %v3980
        %v4172 = vunpack.c.l.b16 %v3981
        %v4173 = vunpack.c.h.b16 %v3981
        %v4174 = vunpack.c.l.b16 %v3982
        %v4175 = vunpack.c.h.b16 %v3982
        %v4176 = vunpack.c.l.b16 %v3983
        %v4177 = vunpack.c.h.b16 %v3983
        %v4178 = vunpack.c.l.b16 %v3984
        %v4179 = vunpack.c.h.b16 %v3984
        %v4180 = vunpack.c.l.b16 %v3985
        %v4181 = vunpack.c.h.b16 %v3985
        %v4182 = vunpack.c.l.b16 %v3986
        %v4183 = vunpack.c.h.b16 %v3986
        %v4184 = vunpack.c.l.b16 %v3987
        %v4185 = vunpack.c.h.b16 %v3987
        %v4186 = vunpack.c.l.b16 %v3988
        %v4187 = vunpack.c.h.b16 %v3988
        %v4188 = vunpack.c.l.b16 %v3989
        %v4189 = vunpack.c.h.b16 %v3989
        %v4190 = vunpack.c.l.b16 %v3990
        %v4191 = vunpack.c.h.b16 %v3990
        %v4192 = vunpack.c.l.b16 %v3991
        %v4193 = vunpack.c.h.b16 %v3991
        %v4194 = vunpack.c.l.b16 %v3992
        %v4195 = vunpack.c.h.b16 %v3992
        %v4196 = vunpack.c.l.b16 %v3993
        %v4197 = vunpack.c.h.b16 %v3993
        %v4198 = vpack.c.b16 %v4072, %v4070
        %v4199 = vpack.c.b16 %v4073, %v4071
        %v4200 = vpack.c.b16 %v4076, %v4074
        %v4201 = vpack.c.b16 %v4077, %v4075
        %v4202 = vpack.c.b16 %v4080, %v4078
        %v4203 = vpack.c.b16 %v4081, %v4079
        %v4204 = vpack.c.b16 %v4084, %v4082
        %v4205 = vpack.c.b16 %v4085, %v4083
        %v4206 = vpack.c.b16 %v4088, %v4086
        %v4207 = vpack.c.b16 %v4089, %v4087
        %v4208 = vpack.c.b16 %v4092, %v4090
        %v4209 = vpack.c.b16 %v4093, %v4091
        %v4210 = vpack.c.b16 %v4096, %v4094
        %v4211 = vpack.c.b16 %v4097, %v4095
        %v4212 = vpack.c.b16 %v4100, %v4098
        %v4213 = vpack.c.b16 %v4101, %v4099
        %v4214 = vpack.c.b16 %v4104, %v4102
        %v4215 = vpack.c.b16 %v4105, %v4103
        %v4216 = vpack.c.b16 %v4108, %v4106
        %v4217 = vpack.c.b16 %v4109, %v4107
        %v4218 = vpack.c.b16 %v4112, %v4110
        %v4219 = vpack.c.b16 %v4113, %v4111
        %v4220 = vpack.c.b16 %v4116, %v4114
        %v4221 = vpack.c.b16 %v4117, %v4115
        %v4222 = vpack.c.b16 %v4120, %v4118
        %v4223 = vpack.c.b16 %v4121, %v4119
        %v4224 = vpack.c.b16 %v4124, %v4122
        %v4225 = vpack.c.b16 %v4125, %v4123
        %v4226 = vpack.c.b16 %v4128, %v4126
        %v4227 = vpack.c.b16 %v4129, %v4127
        %v4228 = vpack.c.b16 %v4132, %v4130
        %v4229 = vpack.c.b16 %v4133, %v4131
        %v4230 = vpack.c.b16 %v4136, %v4134
        %v4231 = vpack.c.b16 %v4137, %v4135
        %v4232 = vpack.c.b16 %v4140, %v4138
        %v4233 = vpack.c.b16 %v4141, %v4139
        %v4234 = vpack.c.b16 %v4144, %v4142
        %v4235 = vpack.c.b16 %v4145, %v4143
        %v4236 = vpack.c.b16 %v4148, %v4146
        %v4237 = vpack.c.b16 %v4149, %v4147
        %v4238 = vpack.c.b16 %v4152, %v4150
        %v4239 = vpack.c.b16 %v4153, %v4151
        %v4240 = vpack.c.b16 %v4156, %v4154
        %v4241 = vpack.c.b16 %v4157, %v4155
        %v4242 = vpack.c.b16 %v4160, %v4158
        %v4243 = vpack.c.b16 %v4161, %v4159
        %v4244 = vpack.c.b16 %v4164, %v4162
        %v4245 = vpack.c.b16 %v4165, %v4163
        %v4246 = vpack.c.b16 %v4168, %v4166
        %v4247 = vpack.c.b16 %v4169, %v4167
        %v4248 = vpack.c.b16 %v4172, %v4170
        %v4249 = vpack.c.b16 %v4173, %v4171
        %v4250 = vpack.c.b16 %v4176, %v4174
        %v4251 = vpack.c.b16 %v4177, %v4175
        %v4252 = vpack.c.b16 %v4180, %v4178
        %v4253 = vpack.c.b16 %v4181, %v4179
        %v4254 = vpack.c.b16 %v4184, %v4182
        %v4255 = vpack.c.b16 %v4185, %v4183
        %v4256 = vpack.c.b16 %v4188, %v4186
        %v4257 = vpack.c.b16 %v4189, %v4187
        %v4258 = vpack.c.b16 %v4192, %v4190
        %v4259 = vpack.c.b16 %v4193, %v4191
        %v4260 = vpack.c.b16 %v4196, %v4194
        %v4261 = vpack.c.b16 %v4197, %v4195
        %4326 = vmatprep.subr.bf16.mxu0 %v4213
        %4327 = vmatpush1.bf16.msra.mxu0 %v4212
        %4328 = vmatprep.subr.bf16.mxu0 %v4211
        %4329 = vmatpush1.bf16.msra.mxu0 %v4210
        %4330 = vmatprep.subr.bf16.mxu0 %v4209
        %4331 = vmatpush1.bf16.msra.mxu0 %v4208
        %4332 = vmatprep.subr.bf16.mxu0 %v4207
        %4333 = vmatpush1.bf16.msra.mxu0 %v4206
        %4334 = vmatprep.subr.bf16.mxu0 %v4205
        %4335 = vmatpush1.bf16.msra.mxu0 %v4204
        %4336 = vmatprep.subr.bf16.mxu0 %v4203
        %4337 = vmatpush1.bf16.msra.mxu0 %v4202
        %4338 = vmatprep.subr.bf16.mxu0 %v4201
        %4339 = vmatpush1.bf16.msra.mxu0 %v4200
        %4340 = vmatprep.subr.bf16.mxu0 %v4199
        %4341 = vmatpush1.bf16.msra.mxu0 %v4198
        %4342 = vmatprep.subr.bf16.mxu0 %v4229
        %4343 = vmatpush2.bf16.msra.mxu0 %v4228
        %4344 = vmatprep.subr.bf16.mxu0 %v4227
        %4345 = vmatpush2.bf16.msra.mxu0 %v4226
        %4346 = vmatprep.subr.bf16.mxu0 %v4225
        %4347 = vmatpush2.bf16.msra.mxu0 %v4224
        %4348 = vmatprep.subr.bf16.mxu0 %v4223
        %4349 = vmatpush2.bf16.msra.mxu0 %v4222
        %4350 = vmatprep.subr.bf16.mxu0 %v4221
        %4351 = vmatpush2.bf16.msra.mxu0 %v4220
        %4352 = vmatprep.subr.bf16.mxu0 %v4219
        %4353 = vmatpush2.bf16.msra.mxu0 %v4218
        %4354 = vmatprep.subr.bf16.mxu0 %v4217
        %4355 = vmatpush2.bf16.msra.mxu0 %v4216
        %4356 = vmatprep.subr.bf16.mxu0 %v4215
        %4357 = vmatpush2.bf16.msra.mxu0 %v4214
        %4358 = vmatprep.mubr.bf16.mxu0 %v3927
        %4359 = vmatmul.mubr.bf16.gmra.mxu0 %v3926
        %v4360 = vpop.f32.mrf.mxu0
        %v4361 = vadd.f32 %v3999, %v4360
        %v4362 = vpop.f32.mrf.mxu0
        %v4363 = vadd.f32 %v4003, %v4362
        %v4364 = vpop.f32.mrf.mxu0
        %v4365 = vpop.f32.mrf.mxu0
        %4366 = vdwg.mxu0
        %4367 = vmatprep.subr.bf16.mxu0 %v4245
        %4368 = vmatpush1.bf16.msra.mxu0 %v4244
        %4369 = vmatprep.subr.bf16.mxu0 %v4243
        %4370 = vmatpush1.bf16.msra.mxu0 %v4242
        %4371 = vmatprep.subr.bf16.mxu0 %v4241
        %4372 = vmatpush1.bf16.msra.mxu0 %v4240
        %4373 = vmatprep.subr.bf16.mxu0 %v4239
        %4374 = vmatpush1.bf16.msra.mxu0 %v4238
        %4375 = vmatprep.subr.bf16.mxu0 %v4237
        %4376 = vmatpush1.bf16.msra.mxu0 %v4236
        %4377 = vmatprep.subr.bf16.mxu0 %v4235
        %4378 = vmatpush1.bf16.msra.mxu0 %v4234
        %4379 = vmatprep.subr.bf16.mxu0 %v4233
        %4380 = vmatpush1.bf16.msra.mxu0 %v4232
        %4381 = vmatprep.subr.bf16.mxu0 %v4231
        %4382 = vmatpush1.bf16.msra.mxu0 %v4230
        %4383 = vmatprep.subr.bf16.mxu0 %v4261
        %4384 = vmatpush2.bf16.msra.mxu0 %v4260
        %4385 = vmatprep.subr.bf16.mxu0 %v4259
        %4386 = vmatpush2.bf16.msra.mxu0 %v4258
        %4387 = vmatprep.subr.bf16.mxu0 %v4257
        %4388 = vmatpush2.bf16.msra.mxu0 %v4256
        %4389 = vmatprep.subr.bf16.mxu0 %v4255
        %4390 = vmatpush2.bf16.msra.mxu0 %v4254
        %4391 = vmatprep.subr.bf16.mxu0 %v4253
        %4392 = vmatpush2.bf16.msra.mxu0 %v4252
        %4393 = vmatprep.subr.bf16.mxu0 %v4251
        %4394 = vmatpush2.bf16.msra.mxu0 %v4250
        %4395 = vmatprep.subr.bf16.mxu0 %v4249
        %4396 = vmatpush2.bf16.msra.mxu0 %v4248
        %4397 = vmatprep.subr.bf16.mxu0 %v4247
        %4398 = vmatpush2.bf16.msra.mxu0 %v4246
        %4399 = vmatprep.mubr.bf16.mxu0 %v3929
        %4400 = vmatmul.mubr.bf16.gmra.mxu0 %v3928
        %v4401 = vpop.f32.mrf.mxu0
        %v4402 = vadd.f32 %v4361, %v4401
        %v4403 = vpop.f32.mrf.mxu0
        %v4404 = vadd.f32 %v4363, %v4403
        %v4405 = vpop.f32.mrf.mxu0
        %v4406 = vpop.f32.mrf.mxu0
        %4407 = vdwg.mxu0
        %v4408 = vadd.f32 %v3430, %v4402
        %v4409 = vadd.f32 %v3431, %v4404
        %v4410 = vld [vmem:[%s21] sm:$0x3]
        %v4411 = vld [vmem:[%s22] sm:$0x3]
        %v4412 = vadd.f32 %v4408, %v4409
        %4413 = vadd.xlane.f32.xlu0 %v4412
        %v4414 = vpop.xlane.xlu0 %4413
        %v4415 = vmul.f32 %v4414, %v2156
        %v4416 = vsub.f32 %v4408, %v4415
        %v4417 = vsub.f32 %v4409, %v4415
        %v4418 = vmul.f32 %v4416, %v4416
        %v4419 = vmul.f32 %v4417, %v4417
        %v4420 = vadd.f32 %v4418, %v4419
        %4421 = vadd.xlane.f32.xlu0 %v4420
        %v4422 = vpop.xlane.xlu0 %4421
        %v4423 = vmul.f32 %v4422, %v2156
        %v4424 = vadd.f32 %v4423, 1e-05
        %v4425 = vrsqrt.pop %v4424
        %v4426 = vmul.f32 %v4416, %v4425
        %v4427 = vmul.f32 %v4417, %v4425
        %v4429 = vlaneseq
        %v4430 = vshrl.u32 %v4429, 7
        %v4431 = vsub.s32 0, %v4430
        %v4432 = vrot.slane %v4410, %v4431
        %v4433 = vlaneseq
        %v4434 = vshrl.u32 %v4433, 7
        %v4435 = vsub.s32 1, %v4434
        %v4436 = vrot.slane %v4410, %v4435
        %v4439 = vmul.f32 %v4426, %v4432
        %v4440 = vmul.f32 %v4427, %v4436
        %v4442 = vlaneseq
        %v4443 = vshrl.u32 %v4442, 7
        %v4444 = vsub.s32 0, %v4443
        %v4445 = vrot.slane %v4411, %v4444
        %v4446 = vlaneseq
        %v4447 = vshrl.u32 %v4446, 7
        %v4448 = vsub.s32 1, %v4447
        %v4449 = vrot.slane %v4411, %v4448
        %v4452 = vadd.f32 %v4439, %v4445
        %v4453 = vadd.f32 %v4440, %v4449
        %4454 = vst [vmem:[%s944] sm:$0xff] %v4452
        %4455 = vst [vmem:[%s944 + $0x8] sm:$0xff] %v4453
        %s4456 = sand.u32 %s552, 1
        %s4457 = scalar_lea.sflag [#allocation4], %s4456
        %s4458 = sand.u32 %s552, 1
        %s4459 = smul.addr %s4458, 16
        %s4460 = scalar_lea.vmem [#allocation23], %s4459
        %s4461 = sand.u32 %s578, 1
        %s4462 = scalar_lea.sflag [#allocation25], %s4461
        %s4463 = sand.u32 %s578, 1
        %s4464 = smul.addr %s4463, 16
        %s4465 = scalar_lea.vmem [#allocation24], %s4464
        // Predicated region
        $region165: #{tpu_custom_call.1} parent=111 // pred_check
          %p4466 = pneg %p562
        $region166: #{tpu_custom_call.1} parent=111 // pred_check_branch
          %4468 = sbr.rel (%p4466) target = $region168
        $region167: #{tpu_custom_call.1} parent=111 // pred_region
          %s4470 = ssub.s32 256, 256
          %4471 = vsyncadd %s4457, %s4470
          %s4472 = smul.addr %s51, 2
          %s4473 = smul.addr %s4472, 128
          %s4474 = scalar_lea.hbm %s23, %s4473
          %s4476 = sshll.u32 %s4460, 4
          %s4477 = int_to_ptr.vmem [resolvable:$true] %s4476
          %4479 = dma.vmem_to_hbm [thread:$0]  %s4477, 256, %s4474, %s4457
        $region168: #{tpu_custom_call.1} parent=111 // pred_fallthru
          _
        // Predicated region
        $region169: #{tpu_custom_call.1} parent=111 // pred_check
          %p4480 = pneg %p588
        $region170: #{tpu_custom_call.1} parent=111 // pred_check_branch
          %4482 = sbr.rel (%p4480) target = $region172
        $region171: #{tpu_custom_call.1} parent=111 // pred_region
          %s4484 = ssub.s32 256, 256
          %4485 = vsyncadd %s4462, %s4484
          %s4486 = smul.addr %s51, 2
          %s4487 = smul.addr %s4486, 128
          %s4488 = scalar_lea.hbm %s24, %s4487
          %s4490 = sshll.u32 %s4465, 4
          %s4491 = int_to_ptr.vmem [resolvable:$true] %s4490
          %4493 = dma.vmem_to_hbm [thread:$0]  %s4491, 256, %s4488, %s4462
        $region172: #{tpu_custom_call.1} parent=111 // pred_fallthru
          _
      $region112: #{tpu_custom_call.1} parent=5 // pred_fallthru
        _
      %p4494 = scmp.le.s32.totalorder 2, %s46
      // Predicated region
      $region173: #{tpu_custom_call.1} parent=5 // pred_check
        %p4495 = pneg %p4494
      $region174: #{tpu_custom_call.1} parent=5 // pred_check_branch
        %4497 = sbr.rel (%p4495) target = $region176
      $region175: #{tpu_custom_call.1} parent=5 // pred_region
        %s4498 = ssub.s32 %s46, 2
        // Predicated region
        $region177: #{tpu_custom_call.1} parent=175 // pred_check
          %p4499 = pneg %p568
        $region178: #{tpu_custom_call.1} parent=175 // pred_check_branch
          %4501 = sbr.rel (%p4499) target = $region180
        $region179: #{tpu_custom_call.1} parent=175 // pred_region
          %s4502 = sand.u32 %s553, 1
          %s4503 = scalar_lea.sflag [#allocation4], %s4502
          %s4504 = sand.u32 %s553, 1
          %s4505 = smul.addr %s4504, 16
          %s4506 = scalar_lea.vmem [#allocation23], %s4505
          %4507 = dma.done %s4503, 256
        $region180: #{tpu_custom_call.1} parent=175 // pred_fallthru
          _
        // Predicated region
        $region181: #{tpu_custom_call.1} parent=175 // pred_check
          %p4508 = pneg %p594
        $region182: #{tpu_custom_call.1} parent=175 // pred_check_branch
          %4510 = sbr.rel (%p4508) target = $region184
        $region183: #{tpu_custom_call.1} parent=175 // pred_region
          %s4511 = sand.u32 %s579, 1
          %s4512 = scalar_lea.sflag [#allocation25], %s4511
          %s4513 = sand.u32 %s579, 1
          %s4514 = smul.addr %s4513, 16
          %s4515 = scalar_lea.vmem [#allocation24], %s4514
          %4516 = dma.done %s4512, 256
        $region184: #{tpu_custom_call.1} parent=175 // pred_fallthru
          _
      $region176: #{tpu_custom_call.1} parent=5 // pred_fallthru
        _
    $region6: #{tpu_custom_call.1} parent=1 // loop_footer
      %s50 = sadd.s32 1, %s46
    $region7: #{tpu_custom_call.1} parent=1 // loop_footer_branch
      %45 = sbr.rel target = $region3
    $region8: #{tpu_custom_call.1} parent=1 // loop_exit
      _
    %4517 = vsyncpa [#allocation3], 1
    %s4518 = scalar_lea.sflag [#allocation3], 1
    %4519 = vsyncpa %s4518, 1
    %4520 = vsyncpa [#allocation6], 1
    %4521 = vsyncpa [#allocation10], 1
    %4522 = vsyncpa [#allocation13], 1
    %4523 = vsyncpa [#allocation16], 1
    %4524 = vsyncpa [#allocation19], 1
    %4525 = vsyncpa [#allocation22], 1
    %4526 = vsyncpa [#allocation4], 1
    %s4527 = scalar_lea.sflag [#allocation4], 1
    %4528 = vsyncpa %s4527, 1
    %4529 = vsyncpa [#allocation25], 1
    %s4530 = scalar_lea.sflag [#allocation25], 1
    %4531 = vsyncpa %s4530, 1

</llo_original>
